<compile_context>
chip_gen: v7x
topology: tpu7x:2x2x1
jax: 0.10.0
libtpu: 0.0.40
codegen_flags: <defaults>
</compile_context>

<pallas_src>
import numpy as np
import jax
import jax.numpy as jnp
from jax.experimental import pallas as pl
from jax.experimental.pallas import tpu as pltpu

# ---------------- configuration (small, consistent with the module) ----------------
B = 2            # batch
H = W = 8        # spatial resolution (divisible by WS -> no padding branch)
DIM = 32         # channels C
DEPTH = 2        # block 0: shift=0, block 1: shift=WS//2
NUM_HEADS = 4
WS = 4           # window_size
MLP_RATIO = 4.0

N = WS * WS                       # tokens per window
HEAD_DIM = DIM // NUM_HEADS
SCALE = HEAD_DIM ** -0.5
HIDDEN = int(DIM * MLP_RATIO)
NW = (H // WS) * (W // WS)        # windows per image
LW = H * W                        # tokens per image (== NW * N)
EPS = 1e-5                        # LayerNorm eps (PyTorch default)
NEG_INF = -1e9                    # cross-window blocking: exp underflows to exactly 0 in f32

assert H % WS == 0 and W % WS == 0
assert LW == NW * N


# ---------------- exact-GELU helper (erf via f32-accurate polynomial) ----------------
def _erf_poly(x):
    # Abramowitz & Stegun 7.1.26, |err| <= 1.5e-7 (float32-accurate), VPU/EUP-only ops.
    a1, a2, a3, a4, a5 = 0.254829592, -0.284496736, 1.421413741, -1.453152027, 1.061405429
    p = 0.3275911
    sgn = jnp.where(x >= 0.0, 1.0, -1.0)
    ax = jnp.abs(x)
    t = 1.0 / (1.0 + p * ax)
    poly = ((((a5 * t + a4) * t + a3) * t + a2) * t + a1) * t
    return sgn * (1.0 - poly * jnp.exp(-ax * ax))


def _gelu_exact(x):
    # matches torch.nn.GELU() (approximate='none') to float32 precision
    return 0.5 * x * (1.0 + _erf_poly(x * np.float32(1.0 / np.sqrt(2.0))))


def _layernorm(x, g, b):
    mu = jnp.mean(x, axis=-1, keepdims=True)
    var = jnp.mean(jnp.square(x - mu), axis=-1, keepdims=True)
    return (x - mu) * jax.lax.rsqrt(var + EPS) * g + b


# ---------------- fused Pallas kernel: one full SwinTransformerBlock per image ----------------
def swin_block_kernel(x_ref, bias_ref, g1_ref, b1_ref, qkvw_ref, qkvb_ref,
                      projw_ref, projb_ref, g2_ref, b2_ref,
                      w1_ref, fb1_ref, w2_ref, fb2_ref, o_ref):
    # x_ref block: (1, LW, C) tokens of ONE image, in window-major order.
    x = x_ref[0]                                              # (64, 32)

    # ---- norm1 + windowed MHSA over all windows of the image ----
    xn = _layernorm(x, g1_ref[...], b1_ref[...])
    qkv = jnp.dot(xn, qkvw_ref[...], preferred_element_type=jnp.float32) + qkvb_ref[...]
    projw = projw_ref[...]                                    # (C, C), (in, out) layout

    attn_out = jnp.zeros((LW, DIM), jnp.float32)
    for h in range(NUM_HEADS):                                # static unroll over 4 heads
        lo = h * HEAD_DIM
        qh = qkv[:, lo:lo + HEAD_DIM] * SCALE                 # (64, 8)
        kh = qkv[:, DIM + lo:DIM + lo + HEAD_DIM]             # (64, 8)
        vh = qkv[:, 2 * DIM + lo:2 * DIM + lo + HEAD_DIM]     # (64, 8)
        # Full 64x64 scores; bias carries rel-pos bias + (-1e9) cross-window blocking
        # (+ shift mask for the SW-MSA block), so this is exactly per-window attention.
        s = jnp.dot(qh, kh.T, preferred_element_type=jnp.float32) + bias_ref[h]
        m = jnp.max(s, axis=-1, keepdims=True)
        p = jnp.exp(s - m)
        p = p * (1.0 / jnp.sum(p, axis=-1, keepdims=True))
        oh = jnp.dot(p, vh, preferred_element_type=jnp.float32)          # (64, 8)
        # fold the per-head rows of the output projection in -> no lane-axis concat needed
        attn_out = attn_out + jnp.dot(oh, projw[lo:lo + HEAD_DIM, :],
                                      preferred_element_type=jnp.float32)

    x1 = x + attn_out + projb_ref[...]                        # residual 1 (drop_path = identity)

    # ---- norm2 + MLP + residual ----
    x2n = _layernorm(x1, g2_ref[...], b2_ref[...])
    hid = jnp.dot(x2n, w1_ref[...], preferred_element_type=jnp.float32) + fb1_ref[...]
    hid = _gelu_exact(hid)                                    # (64, 128) lane-dense
    y = jnp.dot(hid, w2_ref[...], preferred_element_type=jnp.float32) + fb2_ref[...]
    o_ref[0] = x1 + y


def swin_block_apply(xw, attn_bias, p):
    return pl.pallas_call(
        swin_block_kernel,
        out_shape=jax.ShapeDtypeStruct((B, LW, DIM), jnp.float32),
        grid=(B,),
        in_specs=[
            pl.BlockSpec((1, LW, DIM), lambda b: (b, 0, 0)),            # tokens (window-major)
            pl.BlockSpec((NUM_HEADS, LW, LW), lambda b: (0, 0, 0)),     # fused attn bias (shared)
            pl.BlockSpec((1, DIM), lambda b: (0, 0)),                   # norm1 gamma
            pl.BlockSpec((1, DIM), lambda b: (0, 0)),                   # norm1 beta
            pl.BlockSpec((DIM, 3 * DIM), lambda b: (0, 0)),             # qkv weight (in, out)
            pl.BlockSpec((1, 3 * DIM), lambda b: (0, 0)),               # qkv bias
            pl.BlockSpec((DIM, DIM), lambda b: (0, 0)),                 # proj weight (in, out)
            pl.BlockSpec((1, DIM), lambda b: (0, 0)),                   # proj bias
            pl.BlockSpec((1, DIM), lambda b: (0, 0)),                   # norm2 gamma
            pl.BlockSpec((1, DIM), lambda b: (0, 0)),                   # norm2 beta
            pl.BlockSpec((DIM, HIDDEN), lambda b: (0, 0)),              # fc1 weight
            pl.BlockSpec((1, HIDDEN), lambda b: (0, 0)),                # fc1 bias
            pl.BlockSpec((HIDDEN, DIM), lambda b: (0, 0)),              # fc2 weight
            pl.BlockSpec((1, DIM), lambda b: (0, 0)),                   # fc2 bias
        ],
        out_specs=pl.BlockSpec((1, LW, DIM), lambda b: (b, 0, 0)),
        compiler_params=pltpu.CompilerParams(dimension_semantics=("parallel",)),
    )(xw, attn_bias, p["g1"], p["b1"], p["qkv_w"], p["qkv_b"], p["proj_w"], p["proj_b"],
      p["g2"], p["b2"], p["fc1_w"], p["fc1_b"], p["fc2_w"], p["fc2_b"])


# ---------------- numpy constants: relative position index, shift mask, window pattern ----------------
def _rel_pos_index_np(ws):
    coords = np.stack(np.meshgrid(np.arange(ws), np.arange(ws), indexing="ij"))
    cf = coords.reshape(2, -1)
    rel = (cf[:, :, None] - cf[:, None, :]).transpose(1, 2, 0).astype(np.int64)
    rel[:, :, 0] += ws - 1
    rel[:, :, 1] += ws - 1
    rel[:, :, 0] *= 2 * ws - 1
    return rel.sum(-1)                                         # (N, N)


def _shift_mask_np(Hh, Ww, ws, ss):
    img_mask = np.zeros((1, Hh, Ww, 1), np.float32)
    slices = (slice(0, -ws), slice(-ws, -ss), slice(-ss, None))
    cnt = 0
    for hs in slices:
        for wsl in slices:
            img_mask[:, hs, wsl, :] = cnt
            cnt += 1
    mw = img_mask.reshape(1, Hh // ws, ws, Ww // ws, ws, 1)
    mw = mw.transpose(0, 1, 3, 2, 4, 5).reshape(-1, ws * ws)
    am = mw[:, None, :] - mw[:, :, None]
    return np.where(am != 0, np.float32(-100.0), np.float32(0.0))   # (NW, N, N)


REL_INDEX_FLAT = _rel_pos_index_np(WS).reshape(-1)              # (N*N,)
SHIFT_MASK = _shift_mask_np(H, W, WS, WS // 2)                  # (NW, N, N)
SAME_WINDOW = (np.arange(NW)[:, None] == np.arange(NW)[None, :])  # (NW, NW) bool


# ---------------- one-time parameter preparation (hoisted out of the per-forward path) ----------------
def make_attn_bias(rel_table, shifted):
    """Combined (nH, LW, LW) bias: rel-pos bias + cross-window blocking (+ shift mask)."""
    rel = rel_table[REL_INDEX_FLAT].reshape(N, N, NUM_HEADS)
    rel = jnp.transpose(rel, (2, 0, 1))                                      # (nH, N, N)
    blocks = jnp.broadcast_to(rel[:, None], (NUM_HEADS, NW, N, N))
    if shifted:
        blocks = blocks + jnp.asarray(SHIFT_MASK)[None]                      # (nH, NW, N, N)
    bias5 = jnp.where(jnp.asarray(SAME_WINDOW)[None, :, None, :, None],
                      blocks[:, :, :, None, :],
                      jnp.float32(NEG_INF))                                  # (nH, NW, N, NW, N)
    return bias5.reshape(NUM_HEADS, LW, LW)


def init_block_params(key):
    ks = jax.random.split(key, 5)
    std = 0.02
    f32 = jnp.float32
    return dict(
        g1=jnp.ones((1, DIM), f32), b1=jnp.zeros((1, DIM), f32),
        qkv_w=(jax.random.normal(ks[0], (DIM, 3 * DIM), f32) * std),   # (in, out) layout
        qkv_b=jnp.zeros((1, 3 * DIM), f32),
        rel_table=(jax.random.normal(ks[1], ((2 * WS - 1) ** 2, NUM_HEADS), f32) * std),
        proj_w=(jax.random.normal(ks[2], (DIM, DIM), f32) * std),
        proj_b=jnp.zeros((1, DIM), f32),
        g2=jnp.ones((1, DIM), f32), b2=jnp.zeros((1, DIM), f32),
        fc1_w=(jax.random.normal(ks[3], (DIM, HIDDEN), f32) * std),
        fc1_b=jnp.zeros((1, HIDDEN), f32),
        fc2_w=(jax.random.normal(ks[4], (HIDDEN, DIM), f32) * std),
        fc2_b=jnp.zeros((1, DIM), f32),
    )


def prepare_layer(params_list):
    prepared = []
    for i, p in enumerate(params_list):
        q = {k: v for k, v in p.items() if k != "rel_table"}
        q["attn_bias"] = make_attn_bias(p["rel_table"], shifted=(i % 2 == 1))
        prepared.append(q)
    return prepared


# ---------------- tiny layout glue (roll + window partition/reverse), jitted together ----------------
def _tokens_to_windows(x, shift):
    # (B, L, C) row-major -> (B, NW*N, C) window-major of the (optionally rolled) image.
    xs = x.reshape(B, H, W, DIM)
    if shift > 0:
        xs = jnp.roll(xs, shift=(-shift, -shift), axis=(1, 2))
    xw = xs.reshape(B, H // WS, WS, W // WS, WS, DIM).transpose(0, 1, 3, 2, 4, 5)
    return xw.reshape(B, LW, DIM)


def _windows_to_tokens(xw, shift):
    xs = xw.reshape(B, H // WS, W // WS, WS, WS, DIM).transpose(0, 1, 3, 2, 4, 5)
    xs = xs.reshape(B, H, W, DIM)
    if shift > 0:
        xs = jnp.roll(xs, shift=(shift, shift), axis=(1, 2))
    return xs.reshape(B, LW, DIM)


def _forward_impl(x, prepared):
    # Because every non-attention op (LayerNorm, residual, MLP) is per-token, each whole block
    # can be evaluated in window-major (and, for the shifted block, rolled) token order inside
    # one fused kernel; only the permutation between orders stays outside.
    for i, p in enumerate(prepared):
        shift = 0 if i % 2 == 0 else WS // 2
        xw = _tokens_to_windows(x, shift)
        yw = swin_block_apply(xw, p["attn_bias"], p)
        x = _windows_to_tokens(yw, shift)
    return x


_forward_jit = jax.jit(_forward_impl)


def basic_layer_forward(x, prepared):
    # TODO(synk): downsample (PatchMerging) is None in this config, so it is not implemented.
    return _forward_jit(x, prepared), H, W


# ---------------- main ----------------
if __name__ == "__main__":
    root = jax.random.PRNGKey(0)
    kx, *kblocks = jax.random.split(root, DEPTH + 1)
    params_list = [init_block_params(k) for k in kblocks]
    prepared = prepare_layer(params_list)          # one-time prep: rel-bias gather + masks
    x = jax.random.normal(kx, (B, H * W, DIM), jnp.float32)

    out, out_h, out_w = basic_layer_forward(x, prepared)
    out = jax.block_until_ready(out)
    assert out.shape == (B, H * W, DIM) and (out_h, out_w) == (H, W)
    assert bool(jnp.all(jnp.isfinite(out)))
    print("KERNEL_OK")
</pallas_src>

<mosaic_0001>
module attributes {stable_mosaic.version = 11 : i64} {
  func.func @swin_block_kernel(%arg0: i32, %arg1: memref<1x64x32xf32, #tpu.memory_space<vmem>>, %arg2: memref<4x64x64xf32, #tpu.memory_space<vmem>>, %arg3: memref<1x32xf32, #tpu.memory_space<vmem>>, %arg4: memref<1x32xf32, #tpu.memory_space<vmem>>, %arg5: memref<32x96xf32, #tpu.memory_space<vmem>>, %arg6: memref<1x96xf32, #tpu.memory_space<vmem>>, %arg7: memref<32x32xf32, #tpu.memory_space<vmem>>, %arg8: memref<1x32xf32, #tpu.memory_space<vmem>>, %arg9: memref<1x32xf32, #tpu.memory_space<vmem>>, %arg10: memref<1x32xf32, #tpu.memory_space<vmem>>, %arg11: memref<32x128xf32, #tpu.memory_space<vmem>>, %arg12: memref<1x128xf32, #tpu.memory_space<vmem>>, %arg13: memref<128x32xf32, #tpu.memory_space<vmem>>, %arg14: memref<1x32xf32, #tpu.memory_space<vmem>>, %arg15: memref<1x64x32xf32, #tpu.memory_space<vmem>>) attributes {dimension_semantics = [#tpu.dimension_semantics<parallel>], iteration_bounds = array<i64: 2>, scalar_prefetch = 0 : i64, scratch_operands = 0 : i64, tpu.core_type = #tpu.core_type<tc>, window_params = [{transform_indices = @transform_0, window_bounds = array<i64: 1, 64, 32>}, {pipeline_mode = #tpu.pipeline_mode<synchronous>, transform_indices = @transform_1, window_bounds = array<i64: 4, 64, 64>}, {pipeline_mode = #tpu.pipeline_mode<synchronous>, transform_indices = @transform_2, window_bounds = array<i64: 1, 32>}, {pipeline_mode = #tpu.pipeline_mode<synchronous>, transform_indices = @transform_3, window_bounds = array<i64: 1, 32>}, {pipeline_mode = #tpu.pipeline_mode<synchronous>, transform_indices = @transform_4, window_bounds = array<i64: 32, 96>}, {pipeline_mode = #tpu.pipeline_mode<synchronous>, transform_indices = @transform_5, window_bounds = array<i64: 1, 96>}, {pipeline_mode = #tpu.pipeline_mode<synchronous>, transform_indices = @transform_6, window_bounds = array<i64: 32, 32>}, {pipeline_mode = #tpu.pipeline_mode<synchronous>, transform_indices = @transform_7, window_bounds = array<i64: 1, 32>}, {pipeline_mode = #tpu.pipeline_mode<synchronous>, transform_indices = @transform_8, window_bounds = array<i64: 1, 32>}, {pipeline_mode = #tpu.pipeline_mode<synchronous>, transform_indices = @transform_9, window_bounds = array<i64: 1, 32>}, {pipeline_mode = #tpu.pipeline_mode<synchronous>, transform_indices = @transform_10, window_bounds = array<i64: 32, 128>}, {pipeline_mode = #tpu.pipeline_mode<synchronous>, transform_indices = @transform_11, window_bounds = array<i64: 1, 128>}, {pipeline_mode = #tpu.pipeline_mode<synchronous>, transform_indices = @transform_12, window_bounds = array<i64: 128, 32>}, {pipeline_mode = #tpu.pipeline_mode<synchronous>, transform_indices = @transform_13, window_bounds = array<i64: 1, 32>}, {transform_indices = @transform_14, window_bounds = array<i64: 1, 64, 32>}]} {
    %c0 = arith.constant 0 : index
    %c0_0 = arith.constant 0 : index
    %c0_1 = arith.constant 0 : index
    %0 = vector.load %arg1[%c0, %c0_0, %c0_1] : memref<1x64x32xf32, #tpu.memory_space<vmem>>, vector<1x64x32xf32>
    %1 = vector.shape_cast %0 : vector<1x64x32xf32> to vector<64x32xf32>
    %c0_2 = arith.constant 0 : index
    %c0_3 = arith.constant 0 : index
    %2 = vector.load %arg3[%c0_2, %c0_3] : memref<1x32xf32, #tpu.memory_space<vmem>>, vector<1x32xf32>
    %c0_4 = arith.constant 0 : index
    %c0_5 = arith.constant 0 : index
    %3 = vector.load %arg4[%c0_4, %c0_5] : memref<1x32xf32, #tpu.memory_space<vmem>>, vector<1x32xf32>
    %cst = arith.constant dense<0.000000e+00> : vector<64xf32>
    %4 = vector.multi_reduction <add>, %1, %cst [1] : vector<64x32xf32> to vector<64xf32>
    %5 = vector.shape_cast %4 : vector<64xf32> to vector<64x1xf32>
    %cst_6 = arith.constant 3.200000e+01 : f32
    %6 = vector.broadcast %cst_6 : f32 to vector<64x1xf32>
    %7 = arith.divf %5, %6 : vector<64x1xf32>
    %8 = vector.broadcast %7 : vector<64x1xf32> to vector<64x32xf32>
    %9 = arith.subf %1, %8 : vector<64x32xf32>
    %10 = arith.mulf %9, %9 : vector<64x32xf32>
    %cst_7 = arith.constant dense<0.000000e+00> : vector<64xf32>
    %11 = vector.multi_reduction <add>, %10, %cst_7 [1] : vector<64x32xf32> to vector<64xf32>
    %12 = vector.shape_cast %11 : vector<64xf32> to vector<64x1xf32>
    %cst_8 = arith.constant 3.200000e+01 : f32
    %13 = vector.broadcast %cst_8 : f32 to vector<64x1xf32>
    %14 = arith.divf %12, %13 : vector<64x1xf32>
    %15 = vector.broadcast %7 : vector<64x1xf32> to vector<64x32xf32>
    %16 = arith.subf %1, %15 : vector<64x32xf32>
    %cst_9 = arith.constant 9.99999974E-6 : f32
    %17 = vector.broadcast %cst_9 : f32 to vector<64x1xf32>
    %18 = arith.addf %14, %17 : vector<64x1xf32>
    %19 = math.rsqrt %18 : vector<64x1xf32>
    %20 = vector.broadcast %19 : vector<64x1xf32> to vector<64x32xf32>
    %21 = arith.mulf %16, %20 : vector<64x32xf32>
    %22 = vector.broadcast %2 : vector<1x32xf32> to vector<64x32xf32>
    %23 = arith.mulf %21, %22 : vector<64x32xf32>
    %24 = vector.broadcast %3 : vector<1x32xf32> to vector<64x32xf32>
    %25 = arith.addf %23, %24 : vector<64x32xf32>
    %c0_10 = arith.constant 0 : index
    %c0_11 = arith.constant 0 : index
    %26 = vector.load %arg5[%c0_10, %c0_11] : memref<32x96xf32, #tpu.memory_space<vmem>>, vector<32x96xf32>
    %cst_12 = arith.constant dense<0.000000e+00> : vector<64x96xf32>
    %27 = tpu.matmul %25, %26, %cst_12 {dimension_numbers = #tpu.dot_dimension_numbers<[1], [0], [0], [1], [0, 0, 1, 1], [], []>} : vector<64x32xf32>, vector<32x96xf32>, vector<64x96xf32> -> vector<64x96xf32>
    %c0_13 = arith.constant 0 : index
    %c0_14 = arith.constant 0 : index
    %28 = vector.load %arg6[%c0_13, %c0_14] : memref<1x96xf32, #tpu.memory_space<vmem>>, vector<1x96xf32>
    %29 = vector.broadcast %28 : vector<1x96xf32> to vector<64x96xf32>
    %30 = arith.addf %27, %29 : vector<64x96xf32>
    %c0_15 = arith.constant 0 : index
    %c0_16 = arith.constant 0 : index
    %31 = vector.load %arg7[%c0_15, %c0_16] : memref<32x32xf32, #tpu.memory_space<vmem>>, vector<32x32xf32>
    %cst_17 = arith.constant 0.000000e+00 : f32
    %32 = vector.broadcast %cst_17 : f32 to vector<64x32xf32>
    %33 = vector.extract_strided_slice %30 {offsets = [0, 0], sizes = [64, 8], strides = [1, 1]} : vector<64x96xf32> to vector<64x8xf32>
    %cst_18 = arith.constant 0.353553385 : f32
    %34 = vector.broadcast %cst_18 : f32 to vector<64x8xf32>
    %35 = arith.mulf %33, %34 : vector<64x8xf32>
    %36 = vector.extract_strided_slice %30 {offsets = [0, 32], sizes = [64, 8], strides = [1, 1]} : vector<64x96xf32> to vector<64x8xf32>
    %37 = vector.extract_strided_slice %30 {offsets = [0, 64], sizes = [64, 8], strides = [1, 1]} : vector<64x96xf32> to vector<64x8xf32>
    %38 = tpu.transpose %36, [1, 0] : vector<64x8xf32> -> vector<8x64xf32>
    %cst_19 = arith.constant dense<0.000000e+00> : vector<64x64xf32>
    %39 = tpu.matmul %35, %38, %cst_19 {dimension_numbers = #tpu.dot_dimension_numbers<[1], [0], [0], [1], [0, 0, 1, 1], [], []>} : vector<64x8xf32>, vector<8x64xf32>, vector<64x64xf32> -> vector<64x64xf32>
    %c0_20 = arith.constant 0 : index
    %c0_21 = arith.constant 0 : index
    %c0_22 = arith.constant 0 : index
    %40 = vector.load %arg2[%c0_20, %c0_21, %c0_22] : memref<4x64x64xf32, #tpu.memory_space<vmem>>, vector<1x64x64xf32>
    %41 = vector.shape_cast %40 : vector<1x64x64xf32> to vector<64x64xf32>
    %42 = arith.addf %39, %41 : vector<64x64xf32>
    %cst_23 = arith.constant dense<0xFF800000> : vector<64xf32>
    %43 = vector.multi_reduction <maximumf>, %42, %cst_23 [1] : vector<64x64xf32> to vector<64xf32>
    %44 = vector.shape_cast %43 : vector<64xf32> to vector<64x1xf32>
    %45 = vector.broadcast %44 : vector<64x1xf32> to vector<64x64xf32>
    %46 = arith.subf %42, %45 : vector<64x64xf32>
    %47 = math.exp %46 : vector<64x64xf32>
    %cst_24 = arith.constant dense<0.000000e+00> : vector<64xf32>
    %48 = vector.multi_reduction <add>, %47, %cst_24 [1] : vector<64x64xf32> to vector<64xf32>
    %49 = vector.shape_cast %48 : vector<64xf32> to vector<64x1xf32>
    %cst_25 = arith.constant 1.000000e+00 : f32
    %50 = vector.broadcast %cst_25 : f32 to vector<64x1xf32>
    %51 = arith.divf %50, %49 : vector<64x1xf32>
    %52 = vector.broadcast %51 : vector<64x1xf32> to vector<64x64xf32>
    %53 = arith.mulf %47, %52 : vector<64x64xf32>
    %cst_26 = arith.constant dense<0.000000e+00> : vector<64x8xf32>
    %54 = tpu.matmul %53, %37, %cst_26 {dimension_numbers = #tpu.dot_dimension_numbers<[1], [0], [0], [1], [0, 0, 1, 1], [], []>} : vector<64x64xf32>, vector<64x8xf32>, vector<64x8xf32> -> vector<64x8xf32>
    %55 = vector.extract_strided_slice %31 {offsets = [0, 0], sizes = [8, 32], strides = [1, 1]} : vector<32x32xf32> to vector<8x32xf32>
    %cst_27 = arith.constant dense<0.000000e+00> : vector<64x32xf32>
    %56 = tpu.matmul %54, %55, %cst_27 {dimension_numbers = #tpu.dot_dimension_numbers<[1], [0], [0], [1], [0, 0, 1, 1], [], []>} : vector<64x8xf32>, vector<8x32xf32>, vector<64x32xf32> -> vector<64x32xf32>
    %57 = arith.addf %32, %56 : vector<64x32xf32>
    %58 = vector.extract_strided_slice %30 {offsets = [0, 8], sizes = [64, 8], strides = [1, 1]} : vector<64x96xf32> to vector<64x8xf32>
    %cst_28 = arith.constant 0.353553385 : f32
    %59 = vector.broadcast %cst_28 : f32 to vector<64x8xf32>
    %60 = arith.mulf %58, %59 : vector<64x8xf32>
    %61 = vector.extract_strided_slice %30 {offsets = [0, 40], sizes = [64, 8], strides = [1, 1]} : vector<64x96xf32> to vector<64x8xf32>
    %62 = vector.extract_strided_slice %30 {offsets = [0, 72], sizes = [64, 8], strides = [1, 1]} : vector<64x96xf32> to vector<64x8xf32>
    %63 = tpu.transpose %61, [1, 0] : vector<64x8xf32> -> vector<8x64xf32>
    %cst_29 = arith.constant dense<0.000000e+00> : vector<64x64xf32>
    %64 = tpu.matmul %60, %63, %cst_29 {dimension_numbers = #tpu.dot_dimension_numbers<[1], [0], [0], [1], [0, 0, 1, 1], [], []>} : vector<64x8xf32>, vector<8x64xf32>, vector<64x64xf32> -> vector<64x64xf32>
    %c1 = arith.constant 1 : index
    %c0_30 = arith.constant 0 : index
    %c0_31 = arith.constant 0 : index
    %65 = vector.load %arg2[%c1, %c0_30, %c0_31] : memref<4x64x64xf32, #tpu.memory_space<vmem>>, vector<1x64x64xf32>
    %66 = vector.shape_cast %65 : vector<1x64x64xf32> to vector<64x64xf32>
    %67 = arith.addf %64, %66 : vector<64x64xf32>
    %cst_32 = arith.constant dense<0xFF800000> : vector<64xf32>
    %68 = vector.multi_reduction <maximumf>, %67, %cst_32 [1] : vector<64x64xf32> to vector<64xf32>
    %69 = vector.shape_cast %68 : vector<64xf32> to vector<64x1xf32>
    %70 = vector.broadcast %69 : vector<64x1xf32> to vector<64x64xf32>
    %71 = arith.subf %67, %70 : vector<64x64xf32>
    %72 = math.exp %71 : vector<64x64xf32>
    %cst_33 = arith.constant dense<0.000000e+00> : vector<64xf32>
    %73 = vector.multi_reduction <add>, %72, %cst_33 [1] : vector<64x64xf32> to vector<64xf32>
    %74 = vector.shape_cast %73 : vector<64xf32> to vector<64x1xf32>
    %cst_34 = arith.constant 1.000000e+00 : f32
    %75 = vector.broadcast %cst_34 : f32 to vector<64x1xf32>
    %76 = arith.divf %75, %74 : vector<64x1xf32>
    %77 = vector.broadcast %76 : vector<64x1xf32> to vector<64x64xf32>
    %78 = arith.mulf %72, %77 : vector<64x64xf32>
    %cst_35 = arith.constant dense<0.000000e+00> : vector<64x8xf32>
    %79 = tpu.matmul %78, %62, %cst_35 {dimension_numbers = #tpu.dot_dimension_numbers<[1], [0], [0], [1], [0, 0, 1, 1], [], []>} : vector<64x64xf32>, vector<64x8xf32>, vector<64x8xf32> -> vector<64x8xf32>
    %80 = vector.extract_strided_slice %31 {offsets = [8, 0], sizes = [8, 32], strides = [1, 1]} : vector<32x32xf32> to vector<8x32xf32>
    %cst_36 = arith.constant dense<0.000000e+00> : vector<64x32xf32>
    %81 = tpu.matmul %79, %80, %cst_36 {dimension_numbers = #tpu.dot_dimension_numbers<[1], [0], [0], [1], [0, 0, 1, 1], [], []>} : vector<64x8xf32>, vector<8x32xf32>, vector<64x32xf32> -> vector<64x32xf32>
    %82 = arith.addf %57, %81 : vector<64x32xf32>
    %83 = vector.extract_strided_slice %30 {offsets = [0, 16], sizes = [64, 8], strides = [1, 1]} : vector<64x96xf32> to vector<64x8xf32>
    %cst_37 = arith.constant 0.353553385 : f32
    %84 = vector.broadcast %cst_37 : f32 to vector<64x8xf32>
    %85 = arith.mulf %83, %84 : vector<64x8xf32>
    %86 = vector.extract_strided_slice %30 {offsets = [0, 48], sizes = [64, 8], strides = [1, 1]} : vector<64x96xf32> to vector<64x8xf32>
    %87 = vector.extract_strided_slice %30 {offsets = [0, 80], sizes = [64, 8], strides = [1, 1]} : vector<64x96xf32> to vector<64x8xf32>
    %88 = tpu.transpose %86, [1, 0] : vector<64x8xf32> -> vector<8x64xf32>
    %cst_38 = arith.constant dense<0.000000e+00> : vector<64x64xf32>
    %89 = tpu.matmul %85, %88, %cst_38 {dimension_numbers = #tpu.dot_dimension_numbers<[1], [0], [0], [1], [0, 0, 1, 1], [], []>} : vector<64x8xf32>, vector<8x64xf32>, vector<64x64xf32> -> vector<64x64xf32>
    %c2 = arith.constant 2 : index
    %c0_39 = arith.constant 0 : index
    %c0_40 = arith.constant 0 : index
    %90 = vector.load %arg2[%c2, %c0_39, %c0_40] : memref<4x64x64xf32, #tpu.memory_space<vmem>>, vector<1x64x64xf32>
    %91 = vector.shape_cast %90 : vector<1x64x64xf32> to vector<64x64xf32>
    %92 = arith.addf %89, %91 : vector<64x64xf32>
    %cst_41 = arith.constant dense<0xFF800000> : vector<64xf32>
    %93 = vector.multi_reduction <maximumf>, %92, %cst_41 [1] : vector<64x64xf32> to vector<64xf32>
    %94 = vector.shape_cast %93 : vector<64xf32> to vector<64x1xf32>
    %95 = vector.broadcast %94 : vector<64x1xf32> to vector<64x64xf32>
    %96 = arith.subf %92, %95 : vector<64x64xf32>
    %97 = math.exp %96 : vector<64x64xf32>
    %cst_42 = arith.constant dense<0.000000e+00> : vector<64xf32>
    %98 = vector.multi_reduction <add>, %97, %cst_42 [1] : vector<64x64xf32> to vector<64xf32>
    %99 = vector.shape_cast %98 : vector<64xf32> to vector<64x1xf32>
    %cst_43 = arith.constant 1.000000e+00 : f32
    %100 = vector.broadcast %cst_43 : f32 to vector<64x1xf32>
    %101 = arith.divf %100, %99 : vector<64x1xf32>
    %102 = vector.broadcast %101 : vector<64x1xf32> to vector<64x64xf32>
    %103 = arith.mulf %97, %102 : vector<64x64xf32>
    %cst_44 = arith.constant dense<0.000000e+00> : vector<64x8xf32>
    %104 = tpu.matmul %103, %87, %cst_44 {dimension_numbers = #tpu.dot_dimension_numbers<[1], [0], [0], [1], [0, 0, 1, 1], [], []>} : vector<64x64xf32>, vector<64x8xf32>, vector<64x8xf32> -> vector<64x8xf32>
    %105 = vector.extract_strided_slice %31 {offsets = [16, 0], sizes = [8, 32], strides = [1, 1]} : vector<32x32xf32> to vector<8x32xf32>
    %cst_45 = arith.constant dense<0.000000e+00> : vector<64x32xf32>
    %106 = tpu.matmul %104, %105, %cst_45 {dimension_numbers = #tpu.dot_dimension_numbers<[1], [0], [0], [1], [0, 0, 1, 1], [], []>} : vector<64x8xf32>, vector<8x32xf32>, vector<64x32xf32> -> vector<64x32xf32>
    %107 = arith.addf %82, %106 : vector<64x32xf32>
    %108 = vector.extract_strided_slice %30 {offsets = [0, 24], sizes = [64, 8], strides = [1, 1]} : vector<64x96xf32> to vector<64x8xf32>
    %cst_46 = arith.constant 0.353553385 : f32
    %109 = vector.broadcast %cst_46 : f32 to vector<64x8xf32>
    %110 = arith.mulf %108, %109 : vector<64x8xf32>
    %111 = vector.extract_strided_slice %30 {offsets = [0, 56], sizes = [64, 8], strides = [1, 1]} : vector<64x96xf32> to vector<64x8xf32>
    %112 = vector.extract_strided_slice %30 {offsets = [0, 88], sizes = [64, 8], strides = [1, 1]} : vector<64x96xf32> to vector<64x8xf32>
    %113 = tpu.transpose %111, [1, 0] : vector<64x8xf32> -> vector<8x64xf32>
    %cst_47 = arith.constant dense<0.000000e+00> : vector<64x64xf32>
    %114 = tpu.matmul %110, %113, %cst_47 {dimension_numbers = #tpu.dot_dimension_numbers<[1], [0], [0], [1], [0, 0, 1, 1], [], []>} : vector<64x8xf32>, vector<8x64xf32>, vector<64x64xf32> -> vector<64x64xf32>
    %c3 = arith.constant 3 : index
    %c0_48 = arith.constant 0 : index
    %c0_49 = arith.constant 0 : index
    %115 = vector.load %arg2[%c3, %c0_48, %c0_49] : memref<4x64x64xf32, #tpu.memory_space<vmem>>, vector<1x64x64xf32>
    %116 = vector.shape_cast %115 : vector<1x64x64xf32> to vector<64x64xf32>
    %117 = arith.addf %114, %116 : vector<64x64xf32>
    %cst_50 = arith.constant dense<0xFF800000> : vector<64xf32>
    %118 = vector.multi_reduction <maximumf>, %117, %cst_50 [1] : vector<64x64xf32> to vector<64xf32>
    %119 = vector.shape_cast %118 : vector<64xf32> to vector<64x1xf32>
    %120 = vector.broadcast %119 : vector<64x1xf32> to vector<64x64xf32>
    %121 = arith.subf %117, %120 : vector<64x64xf32>
    %122 = math.exp %121 : vector<64x64xf32>
    %cst_51 = arith.constant dense<0.000000e+00> : vector<64xf32>
    %123 = vector.multi_reduction <add>, %122, %cst_51 [1] : vector<64x64xf32> to vector<64xf32>
    %124 = vector.shape_cast %123 : vector<64xf32> to vector<64x1xf32>
    %cst_52 = arith.constant 1.000000e+00 : f32
    %125 = vector.broadcast %cst_52 : f32 to vector<64x1xf32>
    %126 = arith.divf %125, %124 : vector<64x1xf32>
    %127 = vector.broadcast %126 : vector<64x1xf32> to vector<64x64xf32>
    %128 = arith.mulf %122, %127 : vector<64x64xf32>
    %cst_53 = arith.constant dense<0.000000e+00> : vector<64x8xf32>
    %129 = tpu.matmul %128, %112, %cst_53 {dimension_numbers = #tpu.dot_dimension_numbers<[1], [0], [0], [1], [0, 0, 1, 1], [], []>} : vector<64x64xf32>, vector<64x8xf32>, vector<64x8xf32> -> vector<64x8xf32>
    %130 = vector.extract_strided_slice %31 {offsets = [24, 0], sizes = [8, 32], strides = [1, 1]} : vector<32x32xf32> to vector<8x32xf32>
    %cst_54 = arith.constant dense<0.000000e+00> : vector<64x32xf32>
    %131 = tpu.matmul %129, %130, %cst_54 {dimension_numbers = #tpu.dot_dimension_numbers<[1], [0], [0], [1], [0, 0, 1, 1], [], []>} : vector<64x8xf32>, vector<8x32xf32>, vector<64x32xf32> -> vector<64x32xf32>
    %132 = arith.addf %107, %131 : vector<64x32xf32>
    %133 = arith.addf %1, %132 : vector<64x32xf32>
    %c0_55 = arith.constant 0 : index
    %c0_56 = arith.constant 0 : index
    %134 = vector.load %arg8[%c0_55, %c0_56] : memref<1x32xf32, #tpu.memory_space<vmem>>, vector<1x32xf32>
    %135 = vector.broadcast %134 : vector<1x32xf32> to vector<64x32xf32>
    %136 = arith.addf %133, %135 : vector<64x32xf32>
    %c0_57 = arith.constant 0 : index
    %c0_58 = arith.constant 0 : index
    %137 = vector.load %arg9[%c0_57, %c0_58] : memref<1x32xf32, #tpu.memory_space<vmem>>, vector<1x32xf32>
    %c0_59 = arith.constant 0 : index
    %c0_60 = arith.constant 0 : index
    %138 = vector.load %arg10[%c0_59, %c0_60] : memref<1x32xf32, #tpu.memory_space<vmem>>, vector<1x32xf32>
    %cst_61 = arith.constant dense<0.000000e+00> : vector<64xf32>
    %139 = vector.multi_reduction <add>, %136, %cst_61 [1] : vector<64x32xf32> to vector<64xf32>
    %140 = vector.shape_cast %139 : vector<64xf32> to vector<64x1xf32>
    %cst_62 = arith.constant 3.200000e+01 : f32
    %141 = vector.broadcast %cst_62 : f32 to vector<64x1xf32>
    %142 = arith.divf %140, %141 : vector<64x1xf32>
    %143 = vector.broadcast %142 : vector<64x1xf32> to vector<64x32xf32>
    %144 = arith.subf %136, %143 : vector<64x32xf32>
    %145 = arith.mulf %144, %144 : vector<64x32xf32>
    %cst_63 = arith.constant dense<0.000000e+00> : vector<64xf32>
    %146 = vector.multi_reduction <add>, %145, %cst_63 [1] : vector<64x32xf32> to vector<64xf32>
    %147 = vector.shape_cast %146 : vector<64xf32> to vector<64x1xf32>
    %cst_64 = arith.constant 3.200000e+01 : f32
    %148 = vector.broadcast %cst_64 : f32 to vector<64x1xf32>
    %149 = arith.divf %147, %148 : vector<64x1xf32>
    %150 = vector.broadcast %142 : vector<64x1xf32> to vector<64x32xf32>
    %151 = arith.subf %136, %150 : vector<64x32xf32>
    %cst_65 = arith.constant 9.99999974E-6 : f32
    %152 = vector.broadcast %cst_65 : f32 to vector<64x1xf32>
    %153 = arith.addf %149, %152 : vector<64x1xf32>
    %154 = math.rsqrt %153 : vector<64x1xf32>
    %155 = vector.broadcast %154 : vector<64x1xf32> to vector<64x32xf32>
    %156 = arith.mulf %151, %155 : vector<64x32xf32>
    %157 = vector.broadcast %137 : vector<1x32xf32> to vector<64x32xf32>
    %158 = arith.mulf %156, %157 : vector<64x32xf32>
    %159 = vector.broadcast %138 : vector<1x32xf32> to vector<64x32xf32>
    %160 = arith.addf %158, %159 : vector<64x32xf32>
    %c0_66 = arith.constant 0 : index
    %c0_67 = arith.constant 0 : index
    %161 = vector.load %arg11[%c0_66, %c0_67] : memref<32x128xf32, #tpu.memory_space<vmem>>, vector<32x128xf32>
    %cst_68 = arith.constant dense<0.000000e+00> : vector<64x128xf32>
    %162 = tpu.matmul %160, %161, %cst_68 {dimension_numbers = #tpu.dot_dimension_numbers<[1], [0], [0], [1], [0, 0, 1, 1], [], []>} : vector<64x32xf32>, vector<32x128xf32>, vector<64x128xf32> -> vector<64x128xf32>
    %c0_69 = arith.constant 0 : index
    %c0_70 = arith.constant 0 : index
    %163 = vector.load %arg12[%c0_69, %c0_70] : memref<1x128xf32, #tpu.memory_space<vmem>>, vector<1x128xf32>
    %164 = vector.broadcast %163 : vector<1x128xf32> to vector<64x128xf32>
    %165 = arith.addf %162, %164 : vector<64x128xf32>
    %cst_71 = arith.constant 5.000000e-01 : f32
    %166 = vector.broadcast %cst_71 : f32 to vector<64x128xf32>
    %167 = arith.mulf %166, %165 : vector<64x128xf32>
    %cst_72 = arith.constant 0.707106769 : f32
    %168 = vector.broadcast %cst_72 : f32 to vector<64x128xf32>
    %169 = arith.mulf %165, %168 : vector<64x128xf32>
    %cst_73 = arith.constant 0.000000e+00 : f32
    %170 = vector.broadcast %cst_73 : f32 to vector<64x128xf32>
    %171 = arith.cmpf oge, %169, %170 : vector<64x128xf32>
    %cst_74 = arith.constant 1.000000e+00 : f32
    %cst_75 = arith.constant -1.000000e+00 : f32
    %172 = vector.broadcast %cst_74 : f32 to vector<64x128xf32>
    %173 = vector.broadcast %cst_75 : f32 to vector<64x128xf32>
    %174 = arith.select %171, %172, %173 : vector<64x128xi1>, vector<64x128xf32>
    %175 = math.absf %169 : vector<64x128xf32>
    %cst_76 = arith.constant 0.327591091 : f32
    %176 = vector.broadcast %cst_76 : f32 to vector<64x128xf32>
    %177 = arith.mulf %176, %175 : vector<64x128xf32>
    %cst_77 = arith.constant 1.000000e+00 : f32
    %178 = vector.broadcast %cst_77 : f32 to vector<64x128xf32>
    %179 = arith.addf %178, %177 : vector<64x128xf32>
    %cst_78 = arith.constant 1.000000e+00 : f32
    %180 = vector.broadcast %cst_78 : f32 to vector<64x128xf32>
    %181 = arith.divf %180, %179 : vector<64x128xf32>
    %cst_79 = arith.constant 1.06140542 : f32
    %182 = vector.broadcast %cst_79 : f32 to vector<64x128xf32>
    %183 = arith.mulf %182, %181 : vector<64x128xf32>
    %cst_80 = arith.constant -1.45315206 : f32
    %184 = vector.broadcast %cst_80 : f32 to vector<64x128xf32>
    %185 = arith.addf %183, %184 : vector<64x128xf32>
    %186 = arith.mulf %185, %181 : vector<64x128xf32>
    %cst_81 = arith.constant 1.42141378 : f32
    %187 = vector.broadcast %cst_81 : f32 to vector<64x128xf32>
    %188 = arith.addf %186, %187 : vector<64x128xf32>
    %189 = arith.mulf %188, %181 : vector<64x128xf32>
    %cst_82 = arith.constant -0.284496725 : f32
    %190 = vector.broadcast %cst_82 : f32 to vector<64x128xf32>
    %191 = arith.addf %189, %190 : vector<64x128xf32>
    %192 = arith.mulf %191, %181 : vector<64x128xf32>
    %cst_83 = arith.constant 0.254829586 : f32
    %193 = vector.broadcast %cst_83 : f32 to vector<64x128xf32>
    %194 = arith.addf %192, %193 : vector<64x128xf32>
    %195 = arith.mulf %194, %181 : vector<64x128xf32>
    %cst_84 = arith.constant 0.000000e+00 : f32
    %196 = vector.broadcast %cst_84 : f32 to vector<64x128xf32>
    %197 = arith.subf %196, %175 : vector<64x128xf32>
    %198 = arith.mulf %197, %175 : vector<64x128xf32>
    %199 = math.exp %198 : vector<64x128xf32>
    %200 = arith.mulf %195, %199 : vector<64x128xf32>
    %cst_85 = arith.constant 1.000000e+00 : f32
    %201 = vector.broadcast %cst_85 : f32 to vector<64x128xf32>
    %202 = arith.subf %201, %200 : vector<64x128xf32>
    %203 = arith.mulf %174, %202 : vector<64x128xf32>
    %cst_86 = arith.constant 1.000000e+00 : f32
    %204 = vector.broadcast %cst_86 : f32 to vector<64x128xf32>
    %205 = arith.addf %204, %203 : vector<64x128xf32>
    %206 = arith.mulf %167, %205 : vector<64x128xf32>
    %c0_87 = arith.constant 0 : index
    %c0_88 = arith.constant 0 : index
    %207 = vector.load %arg13[%c0_87, %c0_88] : memref<128x32xf32, #tpu.memory_space<vmem>>, vector<128x32xf32>
    %cst_89 = arith.constant dense<0.000000e+00> : vector<64x32xf32>
    %208 = tpu.matmul %206, %207, %cst_89 {dimension_numbers = #tpu.dot_dimension_numbers<[1], [0], [0], [1], [0, 0, 1, 1], [], []>} : vector<64x128xf32>, vector<128x32xf32>, vector<64x32xf32> -> vector<64x32xf32>
    %c0_90 = arith.constant 0 : index
    %c0_91 = arith.constant 0 : index
    %209 = vector.load %arg14[%c0_90, %c0_91] : memref<1x32xf32, #tpu.memory_space<vmem>>, vector<1x32xf32>
    %210 = vector.broadcast %209 : vector<1x32xf32> to vector<64x32xf32>
    %211 = arith.addf %208, %210 : vector<64x32xf32>
    %212 = arith.addf %136, %211 : vector<64x32xf32>
    %c0_92 = arith.constant 0 : index
    %c0_93 = arith.constant 0 : index
    %c0_94 = arith.constant 0 : index
    %213 = vector.load %arg15[%c0_92, %c0_93, %c0_94] : memref<1x64x32xf32, #tpu.memory_space<vmem>>, vector<1x64x32xf32>
    %214 = vector.shape_cast %213 : vector<1x64x32xf32> to vector<64x32xf32>
    %215 = vector.shape_cast %212 : vector<64x32xf32> to vector<1x64x32xf32>
    tpu.vector_store %arg15[%c0_92, %c0_93, %c0_94], %215 {strides = array<i32>} : memref<1x64x32xf32, #tpu.memory_space<vmem>>, vector<1x64x32xf32>,
    return
  }
  func.func @transform_0(%arg0: i32) -> (i32, i32, i32) {
    %c0_i32 = arith.constant 0 : i32
    %c0_i32_0 = arith.constant 0 : i32
    %c0_i32_1 = arith.constant 0 : i32
    return %arg0, %c0_i32, %c0_i32_0 : i32, i32, i32
  }
  func.func @transform_1(%arg0: i32) -> (i32, i32, i32) {
    %c0_i32 = arith.constant 0 : i32
    %c0_i32_0 = arith.constant 0 : i32
    %c0_i32_1 = arith.constant 0 : i32
    %c0_i32_2 = arith.constant 0 : i32
    return %c0_i32, %c0_i32_0, %c0_i32_1 : i32, i32, i32
  }
  func.func @transform_2(%arg0: i32) -> (i32, i32) {
    %c0_i32 = arith.constant 0 : i32
    %c0_i32_0 = arith.constant 0 : i32
    %c0_i32_1 = arith.constant 0 : i32
    return %c0_i32, %c0_i32_0 : i32, i32
  }
  func.func @transform_3(%arg0: i32) -> (i32, i32) {
    %c0_i32 = arith.constant 0 : i32
    %c0_i32_0 = arith.constant 0 : i32
    %c0_i32_1 = arith.constant 0 : i32
    return %c0_i32, %c0_i32_0 : i32, i32
  }
  func.func @transform_4(%arg0: i32) -> (i32, i32) {
    %c0_i32 = arith.constant 0 : i32
    %c0_i32_0 = arith.constant 0 : i32
    %c0_i32_1 = arith.constant 0 : i32
    return %c0_i32, %c0_i32_0 : i32, i32
  }
  func.func @transform_5(%arg0: i32) -> (i32, i32) {
    %c0_i32 = arith.constant 0 : i32
    %c0_i32_0 = arith.constant 0 : i32
    %c0_i32_1 = arith.constant 0 : i32
    return %c0_i32, %c0_i32_0 : i32, i32
  }
  func.func @transform_6(%arg0: i32) -> (i32, i32) {
    %c0_i32 = arith.constant 0 : i32
    %c0_i32_0 = arith.constant 0 : i32
    %c0_i32_1 = arith.constant 0 : i32
    return %c0_i32, %c0_i32_0 : i32, i32
  }
  func.func @transform_7(%arg0: i32) -> (i32, i32) {
    %c0_i32 = arith.constant 0 : i32
    %c0_i32_0 = arith.constant 0 : i32
    %c0_i32_1 = arith.constant 0 : i32
    return %c0_i32, %c0_i32_0 : i32, i32
  }
  func.func @transform_8(%arg0: i32) -> (i32, i32) {
    %c0_i32 = arith.constant 0 : i32
    %c0_i32_0 = arith.constant 0 : i32
    %c0_i32_1 = arith.constant 0 : i32
    return %c0_i32, %c0_i32_0 : i32, i32
  }
  func.func @transform_9(%arg0: i32) -> (i32, i32) {
    %c0_i32 = arith.constant 0 : i32
    %c0_i32_0 = arith.constant 0 : i32
    %c0_i32_1 = arith.constant 0 : i32
    return %c0_i32, %c0_i32_0 : i32, i32
  }
  func.func @transform_10(%arg0: i32) -> (i32, i32) {
    %c0_i32 = arith.constant 0 : i32
    %c0_i32_0 = arith.constant 0 : i32
    %c0_i32_1 = arith.constant 0 : i32
    return %c0_i32, %c0_i32_0 : i32, i32
  }
  func.func @transform_11(%arg0: i32) -> (i32, i32) {
    %c0_i32 = arith.constant 0 : i32
    %c0_i32_0 = arith.constant 0 : i32
    %c0_i32_1 = arith.constant 0 : i32
    return %c0_i32, %c0_i32_0 : i32, i32
  }
  func.func @transform_12(%arg0: i32) -> (i32, i32) {
    %c0_i32 = arith.constant 0 : i32
    %c0_i32_0 = arith.constant 0 : i32
    %c0_i32_1 = arith.constant 0 : i32
    return %c0_i32, %c0_i32_0 : i32, i32
  }
  func.func @transform_13(%arg0: i32) -> (i32, i32) {
    %c0_i32 = arith.constant 0 : i32
    %c0_i32_0 = arith.constant 0 : i32
    %c0_i32_1 = arith.constant 0 : i32
    return %c0_i32, %c0_i32_0 : i32, i32
  }
  func.func @transform_14(%arg0: i32) -> (i32, i32, i32) {
    %c0_i32 = arith.constant 0 : i32
    %c0_i32_0 = arith.constant 0 : i32
    %c0_i32_1 = arith.constant 0 : i32
    return %arg0, %c0_i32, %c0_i32_0 : i32, i32, i32
  }
}

</mosaic_0001>

<llo_original>
// kernel: _forward_impl.2
$region0: #{_forward_impl.2}
  #allocation0 [shape = 'u32[]', space=smem, size = 0x4, offset = 0x4, fixed_abs, tag = 'smem constant byte address 0x4 - core index']
  #allocation1 [shape = 'u32[144,128]{1,0:T(1,128)}', space=vmem, size = 0x12000, scoped, tag = 'internal scratch']
  %s0 = inlined_call_operand.vmem [shape: f32[2,64,32], index: 0, kind: input, shape index: {}]
  %s1 = inlined_call_operand.vmem [shape: f32[4,64,64], index: 1, kind: input, shape index: {}]
  %s2 = inlined_call_operand.vmem [shape: f32[1,32], index: 2, kind: input, shape index: {}]
  %s3 = inlined_call_operand.vmem [shape: f32[1,32], index: 3, kind: input, shape index: {}]
  %s4 = inlined_call_operand.vmem [shape: f32[32,96], index: 4, kind: input, shape index: {}]
  %s5 = inlined_call_operand.vmem [shape: f32[1,96], index: 5, kind: input, shape index: {}]
  %s6 = inlined_call_operand.vmem [shape: f32[32,32], index: 6, kind: input, shape index: {}]
  %s7 = inlined_call_operand.vmem [shape: f32[1,32], index: 7, kind: input, shape index: {}]
  %s8 = inlined_call_operand.vmem [shape: f32[1,32], index: 8, kind: input, shape index: {}]
  %s9 = inlined_call_operand.vmem [shape: f32[1,32], index: 9, kind: input, shape index: {}]
  %s10 = inlined_call_operand.vmem [shape: f32[32,128], index: 10, kind: input, shape index: {}]
  %s11 = inlined_call_operand.vmem [shape: f32[1,128], index: 11, kind: input, shape index: {}]
  %s12 = inlined_call_operand.vmem [shape: f32[128,32], index: 12, kind: input, shape index: {}]
  %s13 = inlined_call_operand.vmem [shape: f32[1,32], index: 13, kind: input, shape index: {}]
  %s14 = inlined_call_operand.vmem [shape: f32[2,64,32], index: 14, kind: output, shape index: {}]
  %s15 = sld [smem:[#allocation0]]
  $region89: #{_forward_impl.2} parent=0
    _
  %s17 = ssub.s32 1, %s15
  %s18 = scalar_select 0, %s17, %s15
  loop: start=0, step=1, limit=4
  $region2: #{_forward_impl.2} parent=0 // loop_pre_header
    _
  $region3: #{_forward_impl.2} parent=0 // loop_header
    %s20 = sphi 0, %s24
    %p21 = scmp.ge.s32.totalorder %s20, 4
    %s30 = sphi 0, %s32
    %s33 = sphi 0, %s30
    %s34 = sphi 0, %s33
    %s50 = sphi 0, %s34
    %s54 = sphi 0, %s54
    %s56 = sphi 0, %s54
    %s57 = sphi 0, %s56
    %s71 = sphi 0, %s57
    %s75 = sphi 0, %s75
    %s77 = sphi 0, %s75
    %s78 = sphi 0, %s77
    %s92 = sphi 0, %s78
    %s96 = sphi 0, %s96
    %s98 = sphi 0, %s96
    %s99 = sphi 0, %s98
    %s113 = sphi 0, %s99
    %s117 = sphi 0, %s117
    %s119 = sphi 0, %s117
    %s120 = sphi 0, %s119
    %s134 = sphi 0, %s120
    %s138 = sphi 0, %s138
    %s140 = sphi 0, %s138
    %s141 = sphi 0, %s140
    %s155 = sphi 0, %s141
    %s159 = sphi 0, %s159
    %s161 = sphi 0, %s159
    %s162 = sphi 0, %s161
    %s176 = sphi 0, %s162
    %s180 = sphi 0, %s180
    %s182 = sphi 0, %s180
    %s183 = sphi 0, %s182
    %s197 = sphi 0, %s183
    %s201 = sphi 0, %s201
    %s203 = sphi 0, %s201
    %s204 = sphi 0, %s203
    %s218 = sphi 0, %s204
    %s222 = sphi 0, %s222
    %s224 = sphi 0, %s222
    %s225 = sphi 0, %s224
    %s239 = sphi 0, %s225
    %s243 = sphi 0, %s243
    %s245 = sphi 0, %s243
    %s246 = sphi 0, %s245
    %s260 = sphi 0, %s246
    %s264 = sphi 0, %s264
    %s266 = sphi 0, %s264
    %s267 = sphi 0, %s266
    %s281 = sphi 0, %s267
    %s285 = sphi 0, %s285
    %s287 = sphi 0, %s285
    %s288 = sphi 0, %s287
    %s302 = sphi 0, %s288
    %s306 = sphi 0, %s306
    %s308 = sphi 0, %s306
    %s309 = sphi 0, %s308
    %s323 = sphi 0, %s309
    %s329 = sphi 0, %s331
    %s332 = sphi 0, %s329
    %s333 = sphi 0, %s332
    %s349 = sphi 0, %s333
  $region4: #{_forward_impl.2} parent=0 // loop_header_branch
    %23 = sbr.rel (%p21) target = $region8
  $region5: #{_forward_impl.2} parent=0 // loop_body
    %s25 = ssub.s32 %s20, 1
    %s26 = ssub.s32 %s20, 2
    %s27 = sadd.s32 %s20, 1
    %s28 = ssub.s32 %s20, %s27
    %p29 = scmp.eq.s32.totalorder %s28, 0
    %s31 = sadd.s32 %s30, 1
    %s32 = scalar_select %p29, %s30, %s31
    %p35 = pneg %p29
    %p36 = scmp.eq.s32.totalorder %s20, 1
    %p37 = por %p35, %p36
    %p38 = scmp.ne.s32.totalorder %s30, %s33
    %p39 = scmp.eq.s32.totalorder %s20, 0
    %p40 = por %p38, %p39
    %p41 = scmp.ne.s32.totalorder %s30, %s33
    %p42 = scmp.eq.s32.totalorder %s25, 1
    %p43 = por %p41, %p42
    %p44 = scmp.ne.s32.totalorder %s33, %s34
    %p45 = scmp.eq.s32.totalorder %s25, 0
    %p46 = por %p44, %p45
    %p47 = scmp.ne.s32.totalorder %s33, %s34
    %p48 = scmp.eq.s32.totalorder %s26, 1
    %p49 = por %p47, %p48
    %p51 = scmp.ne.s32.totalorder %s34, %s50
    %p52 = scmp.eq.s32.totalorder %s26, 0
    %p53 = por %p51, %p52
    %s55 = sadd.s32 %s54, 1
    %p58 = scmp.eq.s32.totalorder %s20, 1
    %p59 = scmp.ne.s32.totalorder %s54, %s56
    %p60 = scmp.eq.s32.totalorder %s20, 0
    %p61 = por %p59, %p60
    %p62 = scmp.ne.s32.totalorder %s54, %s56
    %p63 = scmp.eq.s32.totalorder %s25, 1
    %p64 = por %p62, %p63
    %p65 = scmp.ne.s32.totalorder %s56, %s57
    %p66 = scmp.eq.s32.totalorder %s25, 0
    %p67 = por %p65, %p66
    %p68 = scmp.ne.s32.totalorder %s56, %s57
    %p69 = scmp.eq.s32.totalorder %s26, 1
    %p70 = por %p68, %p69
    %p72 = scmp.ne.s32.totalorder %s57, %s71
    %p73 = scmp.eq.s32.totalorder %s26, 0
    %p74 = por %p72, %p73
    %s76 = sadd.s32 %s75, 1
    %p79 = scmp.eq.s32.totalorder %s20, 1
    %p80 = scmp.ne.s32.totalorder %s75, %s77
    %p81 = scmp.eq.s32.totalorder %s20, 0
    %p82 = por %p80, %p81
    %p83 = scmp.ne.s32.totalorder %s75, %s77
    %p84 = scmp.eq.s32.totalorder %s25, 1
    %p85 = por %p83, %p84
    %p86 = scmp.ne.s32.totalorder %s77, %s78
    %p87 = scmp.eq.s32.totalorder %s25, 0
    %p88 = por %p86, %p87
    %p89 = scmp.ne.s32.totalorder %s77, %s78
    %p90 = scmp.eq.s32.totalorder %s26, 1
    %p91 = por %p89, %p90
    %p93 = scmp.ne.s32.totalorder %s78, %s92
    %p94 = scmp.eq.s32.totalorder %s26, 0
    %p95 = por %p93, %p94
    %s97 = sadd.s32 %s96, 1
    %p100 = scmp.eq.s32.totalorder %s20, 1
    %p101 = scmp.ne.s32.totalorder %s96, %s98
    %p102 = scmp.eq.s32.totalorder %s20, 0
    %p103 = por %p101, %p102
    %p104 = scmp.ne.s32.totalorder %s96, %s98
    %p105 = scmp.eq.s32.totalorder %s25, 1
    %p106 = por %p104, %p105
    %p107 = scmp.ne.s32.totalorder %s98, %s99
    %p108 = scmp.eq.s32.totalorder %s25, 0
    %p109 = por %p107, %p108
    %p110 = scmp.ne.s32.totalorder %s98, %s99
    %p111 = scmp.eq.s32.totalorder %s26, 1
    %p112 = por %p110, %p111
    %p114 = scmp.ne.s32.totalorder %s99, %s113
    %p115 = scmp.eq.s32.totalorder %s26, 0
    %p116 = por %p114, %p115
    %s118 = sadd.s32 %s117, 1
    %p121 = scmp.eq.s32.totalorder %s20, 1
    %p122 = scmp.ne.s32.totalorder %s117, %s119
    %p123 = scmp.eq.s32.totalorder %s20, 0
    %p124 = por %p122, %p123
    %p125 = scmp.ne.s32.totalorder %s117, %s119
    %p126 = scmp.eq.s32.totalorder %s25, 1
    %p127 = por %p125, %p126
    %p128 = scmp.ne.s32.totalorder %s119, %s120
    %p129 = scmp.eq.s32.totalorder %s25, 0
    %p130 = por %p128, %p129
    %p131 = scmp.ne.s32.totalorder %s119, %s120
    %p132 = scmp.eq.s32.totalorder %s26, 1
    %p133 = por %p131, %p132
    %p135 = scmp.ne.s32.totalorder %s120, %s134
    %p136 = scmp.eq.s32.totalorder %s26, 0
    %p137 = por %p135, %p136
    %s139 = sadd.s32 %s138, 1
    %p142 = scmp.eq.s32.totalorder %s20, 1
    %p143 = scmp.ne.s32.totalorder %s138, %s140
    %p144 = scmp.eq.s32.totalorder %s20, 0
    %p145 = por %p143, %p144
    %p146 = scmp.ne.s32.totalorder %s138, %s140
    %p147 = scmp.eq.s32.totalorder %s25, 1
    %p148 = por %p146, %p147
    %p149 = scmp.ne.s32.totalorder %s140, %s141
    %p150 = scmp.eq.s32.totalorder %s25, 0
    %p151 = por %p149, %p150
    %p152 = scmp.ne.s32.totalorder %s140, %s141
    %p153 = scmp.eq.s32.totalorder %s26, 1
    %p154 = por %p152, %p153
    %p156 = scmp.ne.s32.totalorder %s141, %s155
    %p157 = scmp.eq.s32.totalorder %s26, 0
    %p158 = por %p156, %p157
    %s160 = sadd.s32 %s159, 1
    %p163 = scmp.eq.s32.totalorder %s20, 1
    %p164 = scmp.ne.s32.totalorder %s159, %s161
    %p165 = scmp.eq.s32.totalorder %s20, 0
    %p166 = por %p164, %p165
    %p167 = scmp.ne.s32.totalorder %s159, %s161
    %p168 = scmp.eq.s32.totalorder %s25, 1
    %p169 = por %p167, %p168
    %p170 = scmp.ne.s32.totalorder %s161, %s162
    %p171 = scmp.eq.s32.totalorder %s25, 0
    %p172 = por %p170, %p171
    %p173 = scmp.ne.s32.totalorder %s161, %s162
    %p174 = scmp.eq.s32.totalorder %s26, 1
    %p175 = por %p173, %p174
    %p177 = scmp.ne.s32.totalorder %s162, %s176
    %p178 = scmp.eq.s32.totalorder %s26, 0
    %p179 = por %p177, %p178
    %s181 = sadd.s32 %s180, 1
    %p184 = scmp.eq.s32.totalorder %s20, 1
    %p185 = scmp.ne.s32.totalorder %s180, %s182
    %p186 = scmp.eq.s32.totalorder %s20, 0
    %p187 = por %p185, %p186
    %p188 = scmp.ne.s32.totalorder %s180, %s182
    %p189 = scmp.eq.s32.totalorder %s25, 1
    %p190 = por %p188, %p189
    %p191 = scmp.ne.s32.totalorder %s182, %s183
    %p192 = scmp.eq.s32.totalorder %s25, 0
    %p193 = por %p191, %p192
    %p194 = scmp.ne.s32.totalorder %s182, %s183
    %p195 = scmp.eq.s32.totalorder %s26, 1
    %p196 = por %p194, %p195
    %p198 = scmp.ne.s32.totalorder %s183, %s197
    %p199 = scmp.eq.s32.totalorder %s26, 0
    %p200 = por %p198, %p199
    %s202 = sadd.s32 %s201, 1
    %p205 = scmp.eq.s32.totalorder %s20, 1
    %p206 = scmp.ne.s32.totalorder %s201, %s203
    %p207 = scmp.eq.s32.totalorder %s20, 0
    %p208 = por %p206, %p207
    %p209 = scmp.ne.s32.totalorder %s201, %s203
    %p210 = scmp.eq.s32.totalorder %s25, 1
    %p211 = por %p209, %p210
    %p212 = scmp.ne.s32.totalorder %s203, %s204
    %p213 = scmp.eq.s32.totalorder %s25, 0
    %p214 = por %p212, %p213
    %p215 = scmp.ne.s32.totalorder %s203, %s204
    %p216 = scmp.eq.s32.totalorder %s26, 1
    %p217 = por %p215, %p216
    %p219 = scmp.ne.s32.totalorder %s204, %s218
    %p220 = scmp.eq.s32.totalorder %s26, 0
    %p221 = por %p219, %p220
    %s223 = sadd.s32 %s222, 1
    %p226 = scmp.eq.s32.totalorder %s20, 1
    %p227 = scmp.ne.s32.totalorder %s222, %s224
    %p228 = scmp.eq.s32.totalorder %s20, 0
    %p229 = por %p227, %p228
    %p230 = scmp.ne.s32.totalorder %s222, %s224
    %p231 = scmp.eq.s32.totalorder %s25, 1
    %p232 = por %p230, %p231
    %p233 = scmp.ne.s32.totalorder %s224, %s225
    %p234 = scmp.eq.s32.totalorder %s25, 0
    %p235 = por %p233, %p234
    %p236 = scmp.ne.s32.totalorder %s224, %s225
    %p237 = scmp.eq.s32.totalorder %s26, 1
    %p238 = por %p236, %p237
    %p240 = scmp.ne.s32.totalorder %s225, %s239
    %p241 = scmp.eq.s32.totalorder %s26, 0
    %p242 = por %p240, %p241
    %s244 = sadd.s32 %s243, 1
    %p247 = scmp.eq.s32.totalorder %s20, 1
    %p248 = scmp.ne.s32.totalorder %s243, %s245
    %p249 = scmp.eq.s32.totalorder %s20, 0
    %p250 = por %p248, %p249
    %p251 = scmp.ne.s32.totalorder %s243, %s245
    %p252 = scmp.eq.s32.totalorder %s25, 1
    %p253 = por %p251, %p252
    %p254 = scmp.ne.s32.totalorder %s245, %s246
    %p255 = scmp.eq.s32.totalorder %s25, 0
    %p256 = por %p254, %p255
    %p257 = scmp.ne.s32.totalorder %s245, %s246
    %p258 = scmp.eq.s32.totalorder %s26, 1
    %p259 = por %p257, %p258
    %p261 = scmp.ne.s32.totalorder %s246, %s260
    %p262 = scmp.eq.s32.totalorder %s26, 0
    %p263 = por %p261, %p262
    %s265 = sadd.s32 %s264, 1
    %p268 = scmp.eq.s32.totalorder %s20, 1
    %p269 = scmp.ne.s32.totalorder %s264, %s266
    %p270 = scmp.eq.s32.totalorder %s20, 0
    %p271 = por %p269, %p270
    %p272 = scmp.ne.s32.totalorder %s264, %s266
    %p273 = scmp.eq.s32.totalorder %s25, 1
    %p274 = por %p272, %p273
    %p275 = scmp.ne.s32.totalorder %s266, %s267
    %p276 = scmp.eq.s32.totalorder %s25, 0
    %p277 = por %p275, %p276
    %p278 = scmp.ne.s32.totalorder %s266, %s267
    %p279 = scmp.eq.s32.totalorder %s26, 1
    %p280 = por %p278, %p279
    %p282 = scmp.ne.s32.totalorder %s267, %s281
    %p283 = scmp.eq.s32.totalorder %s26, 0
    %p284 = por %p282, %p283
    %s286 = sadd.s32 %s285, 1
    %p289 = scmp.eq.s32.totalorder %s20, 1
    %p290 = scmp.ne.s32.totalorder %s285, %s287
    %p291 = scmp.eq.s32.totalorder %s20, 0
    %p292 = por %p290, %p291
    %p293 = scmp.ne.s32.totalorder %s285, %s287
    %p294 = scmp.eq.s32.totalorder %s25, 1
    %p295 = por %p293, %p294
    %p296 = scmp.ne.s32.totalorder %s287, %s288
    %p297 = scmp.eq.s32.totalorder %s25, 0
    %p298 = por %p296, %p297
    %p299 = scmp.ne.s32.totalorder %s287, %s288
    %p300 = scmp.eq.s32.totalorder %s26, 1
    %p301 = por %p299, %p300
    %p303 = scmp.ne.s32.totalorder %s288, %s302
    %p304 = scmp.eq.s32.totalorder %s26, 0
    %p305 = por %p303, %p304
    %s307 = sadd.s32 %s306, 1
    %p310 = scmp.eq.s32.totalorder %s20, 1
    %p311 = scmp.ne.s32.totalorder %s306, %s308
    %p312 = scmp.eq.s32.totalorder %s20, 0
    %p313 = por %p311, %p312
    %p314 = scmp.ne.s32.totalorder %s306, %s308
    %p315 = scmp.eq.s32.totalorder %s25, 1
    %p316 = por %p314, %p315
    %p317 = scmp.ne.s32.totalorder %s308, %s309
    %p318 = scmp.eq.s32.totalorder %s25, 0
    %p319 = por %p317, %p318
    %p320 = scmp.ne.s32.totalorder %s308, %s309
    %p321 = scmp.eq.s32.totalorder %s26, 1
    %p322 = por %p320, %p321
    %p324 = scmp.ne.s32.totalorder %s309, %s323
    %p325 = scmp.eq.s32.totalorder %s26, 0
    %p326 = por %p324, %p325
    %s327 = ssub.s32 %s20, %s27
    %p328 = scmp.eq.s32.totalorder %s327, 0
    %s330 = sadd.s32 %s329, 1
    %s331 = scalar_select %p328, %s329, %s330
    %p334 = pneg %p328
    %p335 = scmp.eq.s32.totalorder %s20, 1
    %p336 = por %p334, %p335
    %p337 = scmp.ne.s32.totalorder %s329, %s332
    %p338 = scmp.eq.s32.totalorder %s20, 0
    %p339 = por %p337, %p338
    %p340 = scmp.ne.s32.totalorder %s329, %s332
    %p341 = scmp.eq.s32.totalorder %s25, 1
    %p342 = por %p340, %p341
    %p343 = scmp.ne.s32.totalorder %s332, %s333
    %p344 = scmp.eq.s32.totalorder %s25, 0
    %p345 = por %p343, %p344
    %p346 = scmp.ne.s32.totalorder %s332, %s333
    %p347 = scmp.eq.s32.totalorder %s26, 1
    %p348 = por %p346, %p347
    %p350 = scmp.ne.s32.totalorder %s333, %s349
    %p351 = scmp.eq.s32.totalorder %s26, 0
    %p352 = por %p350, %p351
    %p353 = scmp.le.s32.totalorder 1, %s20
    %p354 = scmp.lt.s32.totalorder %s20, 3
    %p355 = pnand %p353, %p354
    %p356 = pneg %p355
    // Predicated region
    $region9: #{_forward_impl.2} parent=5 // pred_check
      _
    $region10: #{_forward_impl.2} parent=5 // pred_check_branch
      %358 = sbr.rel (%p355) target = $region12
    $region11: #{_forward_impl.2} parent=5 // pred_region
      %s359 = ssub.s32 %s20, 1
      // Predicated region
      $region13: #{_forward_impl.2} parent=11 // pred_check
        %p360 = pneg %p67
      $region14: #{_forward_impl.2} parent=11 // pred_check_branch
        %362 = sbr.rel (%p360) target = $region16
      $region15: #{_forward_impl.2} parent=11 // pred_region
        _
      $region16: #{_forward_impl.2} parent=11 // pred_fallthru
        _
      // Predicated region
      $region17: #{_forward_impl.2} parent=11 // pred_check
        %p363 = pneg %p88
      $region18: #{_forward_impl.2} parent=11 // pred_check_branch
        %365 = sbr.rel (%p363) target = $region20
      $region19: #{_forward_impl.2} parent=11 // pred_region
        _
      $region20: #{_forward_impl.2} parent=11 // pred_fallthru
        _
      // Predicated region
      $region21: #{_forward_impl.2} parent=11 // pred_check
        %p366 = pneg %p109
      $region22: #{_forward_impl.2} parent=11 // pred_check_branch
        %368 = sbr.rel (%p366) target = $region24
      $region23: #{_forward_impl.2} parent=11 // pred_region
        _
      $region24: #{_forward_impl.2} parent=11 // pred_fallthru
        _
      // Predicated region
      $region25: #{_forward_impl.2} parent=11 // pred_check
        %p369 = pneg %p130
      $region26: #{_forward_impl.2} parent=11 // pred_check_branch
        %371 = sbr.rel (%p369) target = $region28
      $region27: #{_forward_impl.2} parent=11 // pred_region
        _
      $region28: #{_forward_impl.2} parent=11 // pred_fallthru
        _
      // Predicated region
      $region29: #{_forward_impl.2} parent=11 // pred_check
        %p372 = pneg %p151
      $region30: #{_forward_impl.2} parent=11 // pred_check_branch
        %374 = sbr.rel (%p372) target = $region32
      $region31: #{_forward_impl.2} parent=11 // pred_region
        _
      $region32: #{_forward_impl.2} parent=11 // pred_fallthru
        _
      // Predicated region
      $region33: #{_forward_impl.2} parent=11 // pred_check
        %p375 = pneg %p172
      $region34: #{_forward_impl.2} parent=11 // pred_check_branch
        %377 = sbr.rel (%p375) target = $region36
      $region35: #{_forward_impl.2} parent=11 // pred_region
        _
      $region36: #{_forward_impl.2} parent=11 // pred_fallthru
        _
      // Predicated region
      $region37: #{_forward_impl.2} parent=11 // pred_check
        %p378 = pneg %p193
      $region38: #{_forward_impl.2} parent=11 // pred_check_branch
        %380 = sbr.rel (%p378) target = $region40
      $region39: #{_forward_impl.2} parent=11 // pred_region
        _
      $region40: #{_forward_impl.2} parent=11 // pred_fallthru
        _
      // Predicated region
      $region41: #{_forward_impl.2} parent=11 // pred_check
        %p381 = pneg %p214
      $region42: #{_forward_impl.2} parent=11 // pred_check_branch
        %383 = sbr.rel (%p381) target = $region44
      $region43: #{_forward_impl.2} parent=11 // pred_region
        _
      $region44: #{_forward_impl.2} parent=11 // pred_fallthru
        _
      // Predicated region
      $region45: #{_forward_impl.2} parent=11 // pred_check
        %p384 = pneg %p235
      $region46: #{_forward_impl.2} parent=11 // pred_check_branch
        %386 = sbr.rel (%p384) target = $region48
      $region47: #{_forward_impl.2} parent=11 // pred_region
        _
      $region48: #{_forward_impl.2} parent=11 // pred_fallthru
        _
      // Predicated region
      $region49: #{_forward_impl.2} parent=11 // pred_check
        %p387 = pneg %p256
      $region50: #{_forward_impl.2} parent=11 // pred_check_branch
        %389 = sbr.rel (%p387) target = $region52
      $region51: #{_forward_impl.2} parent=11 // pred_region
        _
      $region52: #{_forward_impl.2} parent=11 // pred_fallthru
        _
      // Predicated region
      $region53: #{_forward_impl.2} parent=11 // pred_check
        %p390 = pneg %p277
      $region54: #{_forward_impl.2} parent=11 // pred_check_branch
        %392 = sbr.rel (%p390) target = $region56
      $region55: #{_forward_impl.2} parent=11 // pred_region
        _
      $region56: #{_forward_impl.2} parent=11 // pred_fallthru
        _
      // Predicated region
      $region57: #{_forward_impl.2} parent=11 // pred_check
        %p393 = pneg %p298
      $region58: #{_forward_impl.2} parent=11 // pred_check_branch
        %395 = sbr.rel (%p393) target = $region60
      $region59: #{_forward_impl.2} parent=11 // pred_region
        _
      $region60: #{_forward_impl.2} parent=11 // pred_fallthru
        _
      // Predicated region
      $region61: #{_forward_impl.2} parent=11 // pred_check
        %p396 = pneg %p319
      $region62: #{_forward_impl.2} parent=11 // pred_check_branch
        %398 = sbr.rel (%p396) target = $region64
      $region63: #{_forward_impl.2} parent=11 // pred_region
        _
      $region64: #{_forward_impl.2} parent=11 // pred_fallthru
        _
    $region12: #{_forward_impl.2} parent=5 // pred_fallthru
      _
    %p399 = scmp.lt.s32.totalorder %s20, 2
    // Predicated region
    $region65: #{_forward_impl.2} parent=5 // pred_check
      %p400 = pneg %p399
    $region66: #{_forward_impl.2} parent=5 // pred_check_branch
      %402 = sbr.rel (%p400) target = $region68
    $region67: #{_forward_impl.2} parent=5 // pred_region
      // Predicated region
      $region69: #{_forward_impl.2} parent=67 // pred_check
        %p403 = pneg %p40
      $region70: #{_forward_impl.2} parent=67 // pred_check_branch
        %405 = sbr.rel (%p403) target = $region72
      $region71: #{_forward_impl.2} parent=67 // pred_region
        %p406 = scmp.lt.s32.totalorder %s20, 1
        %s407 = scalar_select %p406, %s20, 1
        %s408 = smul.addr %s407, 8
        %s409 = smul.addr %s408, 8
        %s410 = scalar_lea.vmem %s0, %s409
      $region72: #{_forward_impl.2} parent=67 // pred_fallthru
        _
    $region68: #{_forward_impl.2} parent=5 // pred_fallthru
      _
    %p411 = scmp.le.s32.totalorder 1, %s20
    %p412 = scmp.lt.s32.totalorder %s20, 3
    %p413 = pnand %p411, %p412
    %p414 = pneg %p413
    // Predicated region
    $region73: #{_forward_impl.2} parent=5 // pred_check
      _
    $region74: #{_forward_impl.2} parent=5 // pred_check_branch
      %416 = sbr.rel (%p413) target = $region76
    $region75: #{_forward_impl.2} parent=5 // pred_region
      %s417 = ssub.s32 %s20, 1
      %p418 = scmp.lt.s32.totalorder %s25, 1
      %s419 = scalar_select %p418, %s25, 1
      %s420 = smul.addr %s419, 8
      %s421 = smul.addr %s420, 8
      %s422 = scalar_lea.vmem %s0, %s421
      %p423 = pneg %p46
      %p424 = pneg %p43
      %p425 = pneg %p67
      %p426 = pneg %p64
      %p427 = pneg %p88
      %p428 = pneg %p85
      %p429 = pneg %p109
      %p430 = pneg %p106
      %p431 = pneg %p130
      %p432 = pneg %p127
      %p433 = pneg %p151
      %p434 = pneg %p148
      %p435 = pneg %p172
      %p436 = pneg %p169
      %p437 = pneg %p193
      %p438 = pneg %p190
      %p439 = pneg %p214
      %p440 = pneg %p211
      %p441 = pneg %p235
      %p442 = pneg %p232
      %p443 = pneg %p256
      %p444 = pneg %p253
      %p445 = pneg %p277
      %p446 = pneg %p274
      %p447 = pneg %p298
      %p448 = pneg %p295
      %p449 = pneg %p319
      %p450 = pneg %p316
      %p451 = pneg %p345
      %p452 = pneg %p342
      %p453 = scmp.lt.s32.totalorder %s25, 1
      %s454 = scalar_select %p453, %s25, 1
      %s455 = smul.addr %s454, 8
      %s456 = smul.addr %s455, 8
      %s457 = scalar_lea.vmem %s14, %s456
      %p458 = scmp.lt.s32.totalorder %s25, 1
      %s459 = scalar_select %p458, %s25, 1
      %s460 = smul.addr %s459, 8
      %s461 = smul.addr %s460, 8
      %s462 = scalar_lea.vmem %s0, %s461
      %p463 = scmp.lt.s32.totalorder %s25, 1
      %s464 = scalar_select %p463, %s25, 1
      %s465 = smul.addr %s464, 8
      %s466 = smul.addr %s465, 8
      %s467 = scalar_lea.vmem %s14, %s466
      %v468 = vld [vmem:[%s462] sm:$0xff]
      %v469 = vld [vmem:[%s462 + $0x8] sm:$0xff]
      %v470 = vld [vmem:[%s462 + $0x10] sm:$0xff]
      %v471 = vld [vmem:[%s462 + $0x18] sm:$0xff]
      %v472 = vld [vmem:[%s462 + $0x20] sm:$0xff]
      %v473 = vld [vmem:[%s462 + $0x28] sm:$0xff]
      %v474 = vld [vmem:[%s462 + $0x30] sm:$0xff]
      %v475 = vld [vmem:[%s462 + $0x38] sm:$0xff]
      %v476 = vld [vmem:[%s2] sm:$0x1]
      %v477 = vld [vmem:[%s3] sm:$0x1]
      %vm478 = vcmask 261120
      %v479 = vsel %vm478, %v468, 0.0
      %480 = vadd.xlane.f32.xlu0 %v479
      %v481 = vpop.xlane.xlu0 %480
      %v482 = vsel %vm478, %v469, 0.0
      %483 = vadd.xlane.f32.xlu0 %v482
      %v484 = vpop.xlane.xlu0 %483
      %v485 = vsel %vm478, %v470, 0.0
      %486 = vadd.xlane.f32.xlu0 %v485
      %v487 = vpop.xlane.xlu0 %486
      %v488 = vsel %vm478, %v471, 0.0
      %489 = vadd.xlane.f32.xlu0 %v488
      %v490 = vpop.xlane.xlu0 %489
      %v491 = vsel %vm478, %v472, 0.0
      %492 = vadd.xlane.f32.xlu0 %v491
      %v493 = vpop.xlane.xlu0 %492
      %v494 = vsel %vm478, %v473, 0.0
      %495 = vadd.xlane.f32.xlu0 %v494
      %v496 = vpop.xlane.xlu0 %495
      %v497 = vsel %vm478, %v474, 0.0
      %498 = vadd.xlane.f32.xlu0 %v497
      %v499 = vpop.xlane.xlu0 %498
      %v500 = vsel %vm478, %v475, 0.0
      %501 = vadd.xlane.f32.xlu0 %v500
      %v502 = vpop.xlane.xlu0 %501
      %v503 = vrcp.pop 32.0
      %v504 = vmul.f32 %v481, %v503
      %v505 = vmul.f32 %v484, %v503
      %v506 = vmul.f32 %v487, %v503
      %v507 = vmul.f32 %v490, %v503
      %v508 = vmul.f32 %v493, %v503
      %v509 = vmul.f32 %v496, %v503
      %v510 = vmul.f32 %v499, %v503
      %v511 = vmul.f32 %v502, %v503
      %v512 = vsub.f32 %v468, %v504
      %v513 = vsub.f32 %v469, %v505
      %v514 = vsub.f32 %v470, %v506
      %v515 = vsub.f32 %v471, %v507
      %v516 = vsub.f32 %v472, %v508
      %v517 = vsub.f32 %v473, %v509
      %v518 = vsub.f32 %v474, %v510
      %v519 = vsub.f32 %v475, %v511
      %v520 = vmul.f32 %v512, %v512
      %v521 = vmul.f32 %v513, %v513
      %v522 = vmul.f32 %v514, %v514
      %v523 = vmul.f32 %v515, %v515
      %v524 = vmul.f32 %v516, %v516
      %v525 = vmul.f32 %v517, %v517
      %v526 = vmul.f32 %v518, %v518
      %v527 = vmul.f32 %v519, %v519
      %v528 = vsel %vm478, %v520, 0.0
      %529 = vadd.xlane.f32.xlu0 %v528
      %v530 = vpop.xlane.xlu0 %529
      %v531 = vsel %vm478, %v521, 0.0
      %532 = vadd.xlane.f32.xlu0 %v531
      %v533 = vpop.xlane.xlu0 %532
      %v534 = vsel %vm478, %v522, 0.0
      %535 = vadd.xlane.f32.xlu0 %v534
      %v536 = vpop.xlane.xlu0 %535
      %v537 = vsel %vm478, %v523, 0.0
      %538 = vadd.xlane.f32.xlu0 %v537
      %v539 = vpop.xlane.xlu0 %538
      %v540 = vsel %vm478, %v524, 0.0
      %541 = vadd.xlane.f32.xlu0 %v540
      %v542 = vpop.xlane.xlu0 %541
      %v543 = vsel %vm478, %v525, 0.0
      %544 = vadd.xlane.f32.xlu0 %v543
      %v545 = vpop.xlane.xlu0 %544
      %v546 = vsel %vm478, %v526, 0.0
      %547 = vadd.xlane.f32.xlu0 %v546
      %v548 = vpop.xlane.xlu0 %547
      %v549 = vsel %vm478, %v527, 0.0
      %550 = vadd.xlane.f32.xlu0 %v549
      %v551 = vpop.xlane.xlu0 %550
      %v552 = vmul.f32 %v530, %v503
      %v553 = vmul.f32 %v533, %v503
      %v554 = vmul.f32 %v536, %v503
      %v555 = vmul.f32 %v539, %v503
      %v556 = vmul.f32 %v542, %v503
      %v557 = vmul.f32 %v545, %v503
      %v558 = vmul.f32 %v548, %v503
      %v559 = vmul.f32 %v551, %v503
      %v560 = vadd.f32 %v552, 1e-05
      %v561 = vadd.f32 %v553, 1e-05
      %v562 = vadd.f32 %v554, 1e-05
      %v563 = vadd.f32 %v555, 1e-05
      %v564 = vadd.f32 %v556, 1e-05
      %v565 = vadd.f32 %v557, 1e-05
      %v566 = vadd.f32 %v558, 1e-05
      %v567 = vadd.f32 %v559, 1e-05
      %v568 = vrsqrt.pop %v560
      %v569 = vrsqrt.pop %v561
      %v570 = vrsqrt.pop %v562
      %v571 = vrsqrt.pop %v563
      %v572 = vrsqrt.pop %v564
      %v573 = vrsqrt.pop %v565
      %v574 = vrsqrt.pop %v566
      %v575 = vrsqrt.pop %v567
      %v576 = vmul.f32 %v512, %v568
      %v577 = vmul.f32 %v513, %v569
      %v578 = vmul.f32 %v514, %v570
      %v579 = vmul.f32 %v515, %v571
      %v580 = vmul.f32 %v516, %v572
      %v581 = vmul.f32 %v517, %v573
      %v582 = vmul.f32 %v518, %v574
      %v583 = vmul.f32 %v519, %v575
      %v585 = vlaneseq
      %v586 = vshrl.u32 %v585, 7
      %v587 = vsub.s32 0, %v586
      %v588 = vrot.slane %v476, %v587
      %v590 = vmul.f32 %v576, %v588
      %v591 = vmul.f32 %v577, %v588
      %v592 = vmul.f32 %v578, %v588
      %v593 = vmul.f32 %v579, %v588
      %v594 = vmul.f32 %v580, %v588
      %v595 = vmul.f32 %v581, %v588
      %v596 = vmul.f32 %v582, %v588
      %v597 = vmul.f32 %v583, %v588
      %v599 = vlaneseq
      %v600 = vshrl.u32 %v599, 7
      %v601 = vsub.s32 0, %v600
      %v602 = vrot.slane %v477, %v601
      %v604 = vadd.f32 %v590, %v602
      %v605 = vadd.f32 %v591, %v602
      %v606 = vadd.f32 %v592, %v602
      %v607 = vadd.f32 %v593, %v602
      %v608 = vadd.f32 %v594, %v602
      %v609 = vadd.f32 %v595, %v602
      %v610 = vadd.f32 %v596, %v602
      %v611 = vadd.f32 %v597, %v602
      %v612 = vld [vmem:[%s4] sm:$0xff]
      %v613 = vld [vmem:[%s4 + $0x8] sm:$0xff]
      %v614 = vld [vmem:[%s4 + $0x10] sm:$0xff]
      %v615 = vld [vmem:[%s4 + $0x18] sm:$0xff]
      %v616 = vld [vmem:[%s5] sm:$0x1]
      %v618 = vlaneseq
      %v619 = vshrl.u32 %v618, 7
      %v620 = vsub.s32 0, %v619
      %v621 = vrot.slane %v616, %v620
      %v624 = vsel %vm478, %v604, 0
      %v627 = vsel %vm478, %v605, 0
      %v630 = vsel %vm478, %v606, 0
      %v633 = vsel %vm478, %v607, 0
      %v636 = vsel %vm478, %v608, 0
      %v639 = vsel %vm478, %v609, 0
      %v642 = vsel %vm478, %v610, 0
      %v645 = vsel %vm478, %v611, 0
      %647 = vmatprep.subr.mxu0 0.0
      %648 = vmatpush1.msra.mxu0 %v612
      %649 = vmatprep.subr.mxu0 0.0
      %650 = vmatpush1.msra.mxu0 %v613
      %651 = vmatprep.subr.mxu0 0.0
      %652 = vmatpush1.msra.mxu0 %v614
      %653 = vmatprep.subr.mxu0 0.0
      %654 = vmatpush1.msra.mxu0 %v615
      %655 = vmatprep.subr.mxu0 0.0
      %656 = vmatpush1.msra.mxu0 0.0
      %657 = vmatprep.subr.mxu0 0.0
      %658 = vmatpush1.msra.mxu0 0.0
      %659 = vmatprep.subr.mxu0 0.0
      %660 = vmatpush1.msra.mxu0 0.0
      %661 = vmatprep.subr.mxu0 0.0
      %662 = vmatpush1.msra.mxu0 0.0
      %663 = vmatprep.subr.mxu0 0.0
      %664 = vmatpush1.msra.mxu0 0.0
      %665 = vmatprep.subr.mxu0 0.0
      %666 = vmatpush1.msra.mxu0 0.0
      %667 = vmatprep.subr.mxu0 0.0
      %668 = vmatpush1.msra.mxu0 0.0
      %669 = vmatprep.subr.mxu0 0.0
      %670 = vmatpush1.msra.mxu0 0.0
      %671 = vmatprep.subr.mxu0 0.0
      %672 = vmatpush1.msra.mxu0 0.0
      %673 = vmatprep.subr.mxu0 0.0
      %674 = vmatpush1.msra.mxu0 0.0
      %675 = vmatprep.subr.mxu0 0.0
      %676 = vmatpush1.msra.mxu0 0.0
      %677 = vmatprep.subr.mxu0 0.0
      %678 = vmatpush1.msra.mxu0 0.0
      %679 = vmatprep.subr.mxu0 0.0
      %680 = vmatpush1.msra.mxu0 0.0
      %681 = vmatprep.subr.mxu0 0.0
      %682 = vmatpush1.msra.mxu0 0.0
      %683 = vmatprep.subr.mxu0 0.0
      %684 = vmatpush1.msra.mxu0 0.0
      %685 = vmatprep.subr.mxu0 0.0
      %686 = vmatpush1.msra.mxu0 0.0
      %687 = vmatprep.subr.mxu0 0.0
      %688 = vmatpush1.msra.mxu0 0.0
      %689 = vmatprep.subr.mxu0 0.0
      %690 = vmatpush1.msra.mxu0 0.0
      %691 = vmatprep.subr.mxu0 0.0
      %692 = vmatpush1.msra.mxu0 0.0
      %693 = vmatprep.subr.mxu0 0.0
      %694 = vmatpush1.msra.mxu0 0.0
      %695 = vmatprep.subr.mxu0 0.0
      %696 = vmatpush1.msra.mxu0 0.0
      %697 = vmatprep.subr.mxu0 0.0
      %698 = vmatpush1.msra.mxu0 0.0
      %699 = vmatprep.subr.mxu0 0.0
      %700 = vmatpush1.msra.mxu0 0.0
      %701 = vmatprep.subr.mxu0 0.0
      %702 = vmatpush1.msra.mxu0 0.0
      %703 = vmatprep.subr.mxu0 0.0
      %704 = vmatpush1.msra.mxu0 0.0
      %705 = vmatprep.subr.mxu0 0.0
      %706 = vmatpush1.msra.mxu0 0.0
      %707 = vmatprep.subr.mxu0 0.0
      %708 = vmatpush1.msra.mxu0 0.0
      %709 = vmatprep.subr.mxu0 0.0
      %710 = vmatpush1.msra.mxu0 0.0
      %711 = vmatprep.mubr.f32.mxu0 0.0
      %712 = vmatmul.mubr.f32.gmra.mrb[0].mxu0 %v624
      %v713 = vpop.f32.mrb[0].mxu0
      %v714 = vadd.f32 %v621, %v713
      %v715 = vpop.f32.mrb[0].mxu0
      %716 = vmatprep.mubr.f32.mxu0 0.0
      %717 = vmatmul.mubr.f32.gmra.mrb[0].mxu0 %v627
      %v718 = vpop.f32.mrb[0].mxu0
      %v719 = vadd.f32 %v621, %v718
      %v720 = vpop.f32.mrb[0].mxu0
      %721 = vmatprep.mubr.f32.mxu0 0.0
      %722 = vmatmul.mubr.f32.gmra.mrb[0].mxu0 %v630
      %v723 = vpop.f32.mrb[0].mxu0
      %v724 = vadd.f32 %v621, %v723
      %v725 = vpop.f32.mrb[0].mxu0
      %726 = vmatprep.mubr.f32.mxu0 0.0
      %727 = vmatmul.mubr.f32.gmra.mrb[0].mxu0 %v633
      %v728 = vpop.f32.mrb[0].mxu0
      %v729 = vadd.f32 %v621, %v728
      %v730 = vpop.f32.mrb[0].mxu0
      %731 = vmatprep.mubr.f32.mxu0 0.0
      %732 = vmatmul.mubr.f32.gmra.mrb[0].mxu0 %v636
      %v733 = vpop.f32.mrb[0].mxu0
      %v734 = vadd.f32 %v621, %v733
      %v735 = vpop.f32.mrb[0].mxu0
      %736 = vmatprep.mubr.f32.mxu0 0.0
      %737 = vmatmul.mubr.f32.gmra.mrb[0].mxu0 %v639
      %v738 = vpop.f32.mrb[0].mxu0
      %v739 = vadd.f32 %v621, %v738
      %v740 = vpop.f32.mrb[0].mxu0
      %741 = vmatprep.mubr.f32.mxu0 0.0
      %742 = vmatmul.mubr.f32.gmra.mrb[0].mxu0 %v642
      %v743 = vpop.f32.mrb[0].mxu0
      %v744 = vadd.f32 %v621, %v743
      %v745 = vpop.f32.mrb[0].mxu0
      %746 = vmatprep.mubr.f32.mxu0 0.0
      %747 = vmatmul.mubr.f32.gmra.mrb[0].mxu0 %v645
      %v748 = vpop.f32.mrb[0].mxu0
      %v749 = vadd.f32 %v621, %v748
      %v750 = vpop.f32.mrb[0].mxu0
      %751 = vdwg.mxu0
      %v752 = vld [vmem:[%s6] sm:$0xff]
      %v753 = vld [vmem:[%s6 + $0x8] sm:$0xff]
      %v754 = vld [vmem:[%s6 + $0x10] sm:$0xff]
      %v755 = vld [vmem:[%s6 + $0x18] sm:$0xff]
      %v756 = vmul.f32 %v714, 0.35355338
      %v757 = vmul.f32 %v719, 0.35355338
      %v758 = vmul.f32 %v724, 0.35355338
      %v759 = vmul.f32 %v729, 0.35355338
      %v760 = vmul.f32 %v734, 0.35355338
      %v761 = vmul.f32 %v739, 0.35355338
      %v762 = vmul.f32 %v744, 0.35355338
      %v763 = vmul.f32 %v749, 0.35355338
      %v764 = vld [vmem:[%s1] sm:$0xff]
      %v765 = vld [vmem:[%s1 + $0x8] sm:$0xff]
      %v766 = vld [vmem:[%s1 + $0x10] sm:$0xff]
      %v767 = vld [vmem:[%s1 + $0x18] sm:$0xff]
      %v768 = vld [vmem:[%s1 + $0x20] sm:$0xff]
      %v769 = vld [vmem:[%s1 + $0x28] sm:$0xff]
      %v770 = vld [vmem:[%s1 + $0x30] sm:$0xff]
      %v771 = vld [vmem:[%s1 + $0x38] sm:$0xff]
      %780 = vrot.lane.b32.xlu0 %v714, 96
      %v781 = vpop.permute.xlu0 %780
      %782 = vrot.lane.b32.xlu0 %v719, 96
      %v783 = vpop.permute.xlu0 %782
      %784 = vrot.lane.b32.xlu0 %v724, 96
      %v785 = vpop.permute.xlu0 %784
      %786 = vrot.lane.b32.xlu0 %v729, 96
      %v787 = vpop.permute.xlu0 %786
      %788 = vrot.lane.b32.xlu0 %v734, 96
      %v789 = vpop.permute.xlu0 %788
      %790 = vrot.lane.b32.xlu0 %v739, 96
      %v791 = vpop.permute.xlu0 %790
      %792 = vrot.lane.b32.xlu0 %v744, 96
      %v793 = vpop.permute.xlu0 %792
      %794 = vrot.lane.b32.xlu0 %v749, 96
      %v795 = vpop.permute.xlu0 %794
      %vm796 = vcmask 64512
      %v798 = vsel %vm796, %v756, 0
      %v801 = vsel %vm796, %v757, 0
      %v804 = vsel %vm796, %v758, 0
      %v807 = vsel %vm796, %v759, 0
      %v810 = vsel %vm796, %v760, 0
      %v813 = vsel %vm796, %v761, 0
      %v816 = vsel %vm796, %v762, 0
      %v819 = vsel %vm796, %v763, 0
      %v821 = vsel %vm796, %v781, 0
      %v823 = vsel %vm796, %v783, 0
      %v825 = vsel %vm796, %v785, 0
      %v827 = vsel %vm796, %v787, 0
      %v829 = vsel %vm796, %v789, 0
      %v831 = vsel %vm796, %v791, 0
      %v833 = vsel %vm796, %v793, 0
      %v835 = vsel %vm796, %v795, 0
      %837 = vmatprep.subr.mxu0 0.0
      %838 = vmatpush1.xpose.msra.mxu0 %v821
      %839 = vmatprep.subr.mxu0 0.0
      %840 = vmatpush1.xpose.msra.mxu0 %v823
      %841 = vmatprep.subr.mxu0 0.0
      %842 = vmatpush1.xpose.msra.mxu0 %v825
      %843 = vmatprep.subr.mxu0 0.0
      %844 = vmatpush1.xpose.msra.mxu0 %v827
      %845 = vmatprep.subr.mxu0 0.0
      %846 = vmatpush1.xpose.msra.mxu0 %v829
      %847 = vmatprep.subr.mxu0 0.0
      %848 = vmatpush1.xpose.msra.mxu0 %v831
      %849 = vmatprep.subr.mxu0 0.0
      %850 = vmatpush1.xpose.msra.mxu0 %v833
      %851 = vmatprep.subr.mxu0 0.0
      %852 = vmatpush1.xpose.msra.mxu0 %v835
      %853 = vmatprep.subr.mxu0 0.0
      %854 = vmatpush1.xpose.msra.mxu0 0.0
      %855 = vmatprep.subr.mxu0 0.0
      %856 = vmatpush1.xpose.msra.mxu0 0.0
      %857 = vmatprep.subr.mxu0 0.0
      %858 = vmatpush1.xpose.msra.mxu0 0.0
      %859 = vmatprep.subr.mxu0 0.0
      %860 = vmatpush1.xpose.msra.mxu0 0.0
      %861 = vmatprep.subr.mxu0 0.0
      %862 = vmatpush1.xpose.msra.mxu0 0.0
      %863 = vmatprep.subr.mxu0 0.0
      %864 = vmatpush1.xpose.msra.mxu0 0.0
      %865 = vmatprep.subr.mxu0 0.0
      %866 = vmatpush1.xpose.msra.mxu0 0.0
      %867 = vmatprep.subr.mxu0 0.0
      %868 = vmatpush1.xpose.msra.mxu0 0.0
      %869 = vmatprep.subr.mxu0 0.0
      %870 = vmatpush1.xpose.msra.mxu0 0.0
      %871 = vmatprep.subr.mxu0 0.0
      %872 = vmatpush1.xpose.msra.mxu0 0.0
      %873 = vmatprep.subr.mxu0 0.0
      %874 = vmatpush1.xpose.msra.mxu0 0.0
      %875 = vmatprep.subr.mxu0 0.0
      %876 = vmatpush1.xpose.msra.mxu0 0.0
      %877 = vmatprep.subr.mxu0 0.0
      %878 = vmatpush1.xpose.msra.mxu0 0.0
      %879 = vmatprep.subr.mxu0 0.0
      %880 = vmatpush1.xpose.msra.mxu0 0.0
      %881 = vmatprep.subr.mxu0 0.0
      %882 = vmatpush1.xpose.msra.mxu0 0.0
      %883 = vmatprep.subr.mxu0 0.0
      %884 = vmatpush1.xpose.msra.mxu0 0.0
      %885 = vmatprep.subr.mxu0 0.0
      %886 = vmatpush1.xpose.msra.mxu0 0.0
      %887 = vmatprep.subr.mxu0 0.0
      %888 = vmatpush1.xpose.msra.mxu0 0.0
      %889 = vmatprep.subr.mxu0 0.0
      %890 = vmatpush1.xpose.msra.mxu0 0.0
      %891 = vmatprep.subr.mxu0 0.0
      %892 = vmatpush1.xpose.msra.mxu0 0.0
      %893 = vmatprep.subr.mxu0 0.0
      %894 = vmatpush1.xpose.msra.mxu0 0.0
      %895 = vmatprep.subr.mxu0 0.0
      %896 = vmatpush1.xpose.msra.mxu0 0.0
      %897 = vmatprep.subr.mxu0 0.0
      %898 = vmatpush1.xpose.msra.mxu0 0.0
      %899 = vmatprep.subr.mxu0 0.0
      %900 = vmatpush1.xpose.msra.mxu0 0.0
      %901 = vmatprep.mubr.f32.mxu0 0.0
      %902 = vmatmul.mubr.f32.gmra.mrb[0].mxu0 %v798
      %v903 = vpop.f32.mrb[0].mxu0
      %v904 = vadd.f32 %v764, %v903
      %v905 = vpop.f32.mrb[0].mxu0
      %906 = vmatprep.mubr.f32.mxu0 0.0
      %907 = vmatmul.mubr.f32.gmra.mrb[0].mxu0 %v801
      %v908 = vpop.f32.mrb[0].mxu0
      %v909 = vadd.f32 %v765, %v908
      %v910 = vpop.f32.mrb[0].mxu0
      %911 = vmatprep.mubr.f32.mxu0 0.0
      %912 = vmatmul.mubr.f32.gmra.mrb[0].mxu0 %v804
      %v913 = vpop.f32.mrb[0].mxu0
      %v914 = vadd.f32 %v766, %v913
      %v915 = vpop.f32.mrb[0].mxu0
      %916 = vmatprep.mubr.f32.mxu0 0.0
      %917 = vmatmul.mubr.f32.gmra.mrb[0].mxu0 %v807
      %v918 = vpop.f32.mrb[0].mxu0
      %v919 = vadd.f32 %v767, %v918
      %v920 = vpop.f32.mrb[0].mxu0
      %921 = vmatprep.mubr.f32.mxu0 0.0
      %922 = vmatmul.mubr.f32.gmra.mrb[0].mxu0 %v810
      %v923 = vpop.f32.mrb[0].mxu0
      %v924 = vadd.f32 %v768, %v923
      %v925 = vpop.f32.mrb[0].mxu0
      %926 = vmatprep.mubr.f32.mxu0 0.0
      %927 = vmatmul.mubr.f32.gmra.mrb[0].mxu0 %v813
      %v928 = vpop.f32.mrb[0].mxu0
      %v929 = vadd.f32 %v769, %v928
      %v930 = vpop.f32.mrb[0].mxu0
      %931 = vmatprep.mubr.f32.mxu0 0.0
      %932 = vmatmul.mubr.f32.gmra.mrb[0].mxu0 %v816
      %v933 = vpop.f32.mrb[0].mxu0
      %v934 = vadd.f32 %v770, %v933
      %v935 = vpop.f32.mrb[0].mxu0
      %936 = vmatprep.mubr.f32.mxu0 0.0
      %937 = vmatmul.mubr.f32.gmra.mrb[0].mxu0 %v819
      %v938 = vpop.f32.mrb[0].mxu0
      %v939 = vadd.f32 %v771, %v938
      %v940 = vpop.f32.mrb[0].mxu0
      %941 = vdwg.mxu0
      %vm942 = vcmask 523264
      %v943 = vsel %vm942, %v904, -inf
      %944 = vmax.xlane.f32.xlu0 %v943
      %v945 = vpop.xlane.xlu0 %944
      %v946 = vsel %vm942, %v909, -inf
      %947 = vmax.xlane.f32.xlu0 %v946
      %v948 = vpop.xlane.xlu0 %947
      %v949 = vsel %vm942, %v914, -inf
      %950 = vmax.xlane.f32.xlu0 %v949
      %v951 = vpop.xlane.xlu0 %950
      %v952 = vsel %vm942, %v919, -inf
      %953 = vmax.xlane.f32.xlu0 %v952
      %v954 = vpop.xlane.xlu0 %953
      %v955 = vsel %vm942, %v924, -inf
      %956 = vmax.xlane.f32.xlu0 %v955
      %v957 = vpop.xlane.xlu0 %956
      %v958 = vsel %vm942, %v929, -inf
      %959 = vmax.xlane.f32.xlu0 %v958
      %v960 = vpop.xlane.xlu0 %959
      %v961 = vsel %vm942, %v934, -inf
      %962 = vmax.xlane.f32.xlu0 %v961
      %v963 = vpop.xlane.xlu0 %962
      %v964 = vsel %vm942, %v939, -inf
      %965 = vmax.xlane.f32.xlu0 %v964
      %v966 = vpop.xlane.xlu0 %965
      %v967 = vsub.f32 %v904, %v945
      %v968 = vsub.f32 %v909, %v948
      %v969 = vsub.f32 %v914, %v951
      %v970 = vsub.f32 %v919, %v954
      %v971 = vsub.f32 %v924, %v957
      %v972 = vsub.f32 %v929, %v960
      %v973 = vsub.f32 %v934, %v963
      %v974 = vsub.f32 %v939, %v966
      %v975 = vmul.f32 %v967, 1.442695
      %v976 = vpow.pop %v975
      %v977 = vmul.f32 %v968, 1.442695
      %v978 = vpow.pop %v977
      %v979 = vmul.f32 %v969, 1.442695
      %v980 = vpow.pop %v979
      %v981 = vmul.f32 %v970, 1.442695
      %v982 = vpow.pop %v981
      %v983 = vmul.f32 %v971, 1.442695
      %v984 = vpow.pop %v983
      %v985 = vmul.f32 %v972, 1.442695
      %v986 = vpow.pop %v985
      %v987 = vmul.f32 %v973, 1.442695
      %v988 = vpow.pop %v987
      %v989 = vmul.f32 %v974, 1.442695
      %v990 = vpow.pop %v989
      %v991 = vsel %vm942, %v976, 0.0
      %992 = vadd.xlane.f32.xlu0 %v991
      %v993 = vpop.xlane.xlu0 %992
      %v994 = vsel %vm942, %v978, 0.0
      %995 = vadd.xlane.f32.xlu0 %v994
      %v996 = vpop.xlane.xlu0 %995
      %v997 = vsel %vm942, %v980, 0.0
      %998 = vadd.xlane.f32.xlu0 %v997
      %v999 = vpop.xlane.xlu0 %998
      %v1000 = vsel %vm942, %v982, 0.0
      %1001 = vadd.xlane.f32.xlu0 %v1000
      %v1002 = vpop.xlane.xlu0 %1001
      %v1003 = vsel %vm942, %v984, 0.0
      %1004 = vadd.xlane.f32.xlu0 %v1003
      %v1005 = vpop.xlane.xlu0 %1004
      %v1006 = vsel %vm942, %v986, 0.0
      %1007 = vadd.xlane.f32.xlu0 %v1006
      %v1008 = vpop.xlane.xlu0 %1007
      %v1009 = vsel %vm942, %v988, 0.0
      %1010 = vadd.xlane.f32.xlu0 %v1009
      %v1011 = vpop.xlane.xlu0 %1010
      %v1012 = vsel %vm942, %v990, 0.0
      %1013 = vadd.xlane.f32.xlu0 %v1012
      %v1014 = vpop.xlane.xlu0 %1013
      %v1015 = vrcp.pop %v993
      %v1016 = vmul.f32 1.0, %v1015
      %v1017 = vrcp.pop %v996
      %v1018 = vmul.f32 1.0, %v1017
      %v1019 = vrcp.pop %v999
      %v1020 = vmul.f32 1.0, %v1019
      %v1021 = vrcp.pop %v1002
      %v1022 = vmul.f32 1.0, %v1021
      %v1023 = vrcp.pop %v1005
      %v1024 = vmul.f32 1.0, %v1023
      %v1025 = vrcp.pop %v1008
      %v1026 = vmul.f32 1.0, %v1025
      %v1027 = vrcp.pop %v1011
      %v1028 = vmul.f32 1.0, %v1027
      %v1029 = vrcp.pop %v1014
      %v1030 = vmul.f32 1.0, %v1029
      %v1031 = vmul.f32 %v976, %v1016
      %v1032 = vmul.f32 %v978, %v1018
      %v1033 = vmul.f32 %v980, %v1020
      %v1034 = vmul.f32 %v982, %v1022
      %v1035 = vmul.f32 %v984, %v1024
      %v1036 = vmul.f32 %v986, %v1026
      %v1037 = vmul.f32 %v988, %v1028
      %v1038 = vmul.f32 %v990, %v1030
      %1039 = vrot.lane.b32.xlu0 %v714, 64
      %v1040 = vpop.permute.xlu0 %1039
      %1041 = vrot.lane.b32.xlu0 %v719, 64
      %v1042 = vpop.permute.xlu0 %1041
      %1043 = vrot.lane.b32.xlu0 %v724, 64
      %v1044 = vpop.permute.xlu0 %1043
      %1045 = vrot.lane.b32.xlu0 %v729, 64
      %v1046 = vpop.permute.xlu0 %1045
      %1047 = vrot.lane.b32.xlu0 %v734, 64
      %v1048 = vpop.permute.xlu0 %1047
      %1049 = vrot.lane.b32.xlu0 %v739, 64
      %v1050 = vpop.permute.xlu0 %1049
      %1051 = vrot.lane.b32.xlu0 %v744, 64
      %v1052 = vpop.permute.xlu0 %1051
      %1053 = vrot.lane.b32.xlu0 %v749, 64
      %v1054 = vpop.permute.xlu0 %1053
      %v1064 = vsel %vm942, %v1031, 0
      %v1067 = vsel %vm942, %v1032, 0
      %v1070 = vsel %vm942, %v1033, 0
      %v1073 = vsel %vm942, %v1034, 0
      %v1076 = vsel %vm942, %v1035, 0
      %v1079 = vsel %vm942, %v1036, 0
      %v1082 = vsel %vm942, %v1037, 0
      %v1085 = vsel %vm942, %v1038, 0
      %1087 = vmatprep.subr.mxu0 0.0
      %1088 = vmatpush1.msra.mxu0 %v1040
      %1089 = vmatprep.subr.mxu0 0.0
      %1090 = vmatpush1.msra.mxu0 %v1042
      %1091 = vmatprep.subr.mxu0 0.0
      %1092 = vmatpush1.msra.mxu0 %v1044
      %1093 = vmatprep.subr.mxu0 0.0
      %1094 = vmatpush1.msra.mxu0 %v1046
      %1095 = vmatprep.subr.mxu0 0.0
      %1096 = vmatpush1.msra.mxu0 %v1048
      %1097 = vmatprep.subr.mxu0 0.0
      %1098 = vmatpush1.msra.mxu0 %v1050
      %1099 = vmatprep.subr.mxu0 0.0
      %1100 = vmatpush1.msra.mxu0 %v1052
      %1101 = vmatprep.subr.mxu0 0.0
      %1102 = vmatpush1.msra.mxu0 %v1054
      %1103 = vmatprep.subr.mxu0 0.0
      %1104 = vmatpush1.msra.mxu0 0.0
      %1105 = vmatprep.subr.mxu0 0.0
      %1106 = vmatpush1.msra.mxu0 0.0
      %1107 = vmatprep.subr.mxu0 0.0
      %1108 = vmatpush1.msra.mxu0 0.0
      %1109 = vmatprep.subr.mxu0 0.0
      %1110 = vmatpush1.msra.mxu0 0.0
      %1111 = vmatprep.subr.mxu0 0.0
      %1112 = vmatpush1.msra.mxu0 0.0
      %1113 = vmatprep.subr.mxu0 0.0
      %1114 = vmatpush1.msra.mxu0 0.0
      %1115 = vmatprep.subr.mxu0 0.0
      %1116 = vmatpush1.msra.mxu0 0.0
      %1117 = vmatprep.subr.mxu0 0.0
      %1118 = vmatpush1.msra.mxu0 0.0
      %1119 = vmatprep.subr.mxu0 0.0
      %1120 = vmatpush1.msra.mxu0 0.0
      %1121 = vmatprep.subr.mxu0 0.0
      %1122 = vmatpush1.msra.mxu0 0.0
      %1123 = vmatprep.subr.mxu0 0.0
      %1124 = vmatpush1.msra.mxu0 0.0
      %1125 = vmatprep.subr.mxu0 0.0
      %1126 = vmatpush1.msra.mxu0 0.0
      %1127 = vmatprep.subr.mxu0 0.0
      %1128 = vmatpush1.msra.mxu0 0.0
      %1129 = vmatprep.subr.mxu0 0.0
      %1130 = vmatpush1.msra.mxu0 0.0
      %1131 = vmatprep.subr.mxu0 0.0
      %1132 = vmatpush1.msra.mxu0 0.0
      %1133 = vmatprep.subr.mxu0 0.0
      %1134 = vmatpush1.msra.mxu0 0.0
      %1135 = vmatprep.subr.mxu0 0.0
      %1136 = vmatpush1.msra.mxu0 0.0
      %1137 = vmatprep.subr.mxu0 0.0
      %1138 = vmatpush1.msra.mxu0 0.0
      %1139 = vmatprep.subr.mxu0 0.0
      %1140 = vmatpush1.msra.mxu0 0.0
      %1141 = vmatprep.subr.mxu0 0.0
      %1142 = vmatpush1.msra.mxu0 0.0
      %1143 = vmatprep.subr.mxu0 0.0
      %1144 = vmatpush1.msra.mxu0 0.0
      %1145 = vmatprep.subr.mxu0 0.0
      %1146 = vmatpush1.msra.mxu0 0.0
      %1147 = vmatprep.subr.mxu0 0.0
      %1148 = vmatpush1.msra.mxu0 0.0
      %1149 = vmatprep.subr.mxu0 0.0
      %1150 = vmatpush1.msra.mxu0 0.0
      %1151 = vmatprep.mubr.f32.mxu0 0.0
      %1152 = vmatmul.mubr.f32.gmra.mrb[0].mxu0 %v1064
      %v1153 = vpop.f32.mrb[0].mxu0
      %v1154 = vadd.f32 0.0, %v1153
      %v1155 = vpop.f32.mrb[0].mxu0
      %1156 = vmatprep.mubr.f32.mxu0 0.0
      %1157 = vmatmul.mubr.f32.gmra.mrb[0].mxu0 %v1067
      %v1158 = vpop.f32.mrb[0].mxu0
      %v1159 = vadd.f32 0.0, %v1158
      %v1160 = vpop.f32.mrb[0].mxu0
      %1161 = vmatprep.mubr.f32.mxu0 0.0
      %1162 = vmatmul.mubr.f32.gmra.mrb[0].mxu0 %v1070
      %v1163 = vpop.f32.mrb[0].mxu0
      %v1164 = vadd.f32 0.0, %v1163
      %v1165 = vpop.f32.mrb[0].mxu0
      %1166 = vmatprep.mubr.f32.mxu0 0.0
      %1167 = vmatmul.mubr.f32.gmra.mrb[0].mxu0 %v1073
      %v1168 = vpop.f32.mrb[0].mxu0
      %v1169 = vadd.f32 0.0, %v1168
      %v1170 = vpop.f32.mrb[0].mxu0
      %1171 = vmatprep.mubr.f32.mxu0 0.0
      %1172 = vmatmul.mubr.f32.gmra.mrb[0].mxu0 %v1076
      %v1173 = vpop.f32.mrb[0].mxu0
      %v1174 = vadd.f32 0.0, %v1173
      %v1175 = vpop.f32.mrb[0].mxu0
      %1176 = vmatprep.mubr.f32.mxu0 0.0
      %1177 = vmatmul.mubr.f32.gmra.mrb[0].mxu0 %v1079
      %v1178 = vpop.f32.mrb[0].mxu0
      %v1179 = vadd.f32 0.0, %v1178
      %v1180 = vpop.f32.mrb[0].mxu0
      %1181 = vmatprep.mubr.f32.mxu0 0.0
      %1182 = vmatmul.mubr.f32.gmra.mrb[0].mxu0 %v1082
      %v1183 = vpop.f32.mrb[0].mxu0
      %v1184 = vadd.f32 0.0, %v1183
      %v1185 = vpop.f32.mrb[0].mxu0
      %1186 = vmatprep.mubr.f32.mxu0 0.0
      %1187 = vmatmul.mubr.f32.gmra.mrb[0].mxu0 %v1085
      %v1188 = vpop.f32.mrb[0].mxu0
      %v1189 = vadd.f32 0.0, %v1188
      %v1190 = vpop.f32.mrb[0].mxu0
      %1191 = vdwg.mxu0
      %s1192 = scalar_lea.vmem %s1, 64
      %v1193 = vld [vmem:[%s1192] sm:$0xff]
      %v1194 = vld [vmem:[%s1192 + $0x8] sm:$0xff]
      %v1195 = vld [vmem:[%s1192 + $0x10] sm:$0xff]
      %v1196 = vld [vmem:[%s1192 + $0x18] sm:$0xff]
      %v1197 = vld [vmem:[%s1192 + $0x20] sm:$0xff]
      %v1198 = vld [vmem:[%s1192 + $0x28] sm:$0xff]
      %v1199 = vld [vmem:[%s1192 + $0x30] sm:$0xff]
      %v1200 = vld [vmem:[%s1192 + $0x38] sm:$0xff]
      %1201 = vrot.lane.b32.xlu0 %v756, 120
      %v1202 = vpop.permute.xlu0 %1201
      %1203 = vrot.lane.b32.xlu0 %v757, 120
      %v1204 = vpop.permute.xlu0 %1203
      %1205 = vrot.lane.b32.xlu0 %v758, 120
      %v1206 = vpop.permute.xlu0 %1205
      %1207 = vrot.lane.b32.xlu0 %v759, 120
      %v1208 = vpop.permute.xlu0 %1207
      %1209 = vrot.lane.b32.xlu0 %v760, 120
      %v1210 = vpop.permute.xlu0 %1209
      %1211 = vrot.lane.b32.xlu0 %v761, 120
      %v1212 = vpop.permute.xlu0 %1211
      %1213 = vrot.lane.b32.xlu0 %v762, 120
      %v1214 = vpop.permute.xlu0 %1213
      %1215 = vrot.lane.b32.xlu0 %v763, 120
      %v1216 = vpop.permute.xlu0 %1215
      %1217 = vrot.lane.b32.xlu0 %v714, 88
      %v1218 = vpop.permute.xlu0 %1217
      %1219 = vrot.lane.b32.xlu0 %v719, 88
      %v1220 = vpop.permute.xlu0 %1219
      %1221 = vrot.lane.b32.xlu0 %v724, 88
      %v1222 = vpop.permute.xlu0 %1221
      %1223 = vrot.lane.b32.xlu0 %v729, 88
      %v1224 = vpop.permute.xlu0 %1223
      %1225 = vrot.lane.b32.xlu0 %v734, 88
      %v1226 = vpop.permute.xlu0 %1225
      %1227 = vrot.lane.b32.xlu0 %v739, 88
      %v1228 = vpop.permute.xlu0 %1227
      %1229 = vrot.lane.b32.xlu0 %v744, 88
      %v1230 = vpop.permute.xlu0 %1229
      %1231 = vrot.lane.b32.xlu0 %v749, 88
      %v1232 = vpop.permute.xlu0 %1231
      %v1233 = vsel %vm796, %v1202, 0
      %v1235 = vsel %vm796, %v1204, 0
      %v1237 = vsel %vm796, %v1206, 0
      %v1239 = vsel %vm796, %v1208, 0
      %v1241 = vsel %vm796, %v1210, 0
      %v1243 = vsel %vm796, %v1212, 0
      %v1245 = vsel %vm796, %v1214, 0
      %v1247 = vsel %vm796, %v1216, 0
      %v1249 = vsel %vm796, %v1218, 0
      %v1251 = vsel %vm796, %v1220, 0
      %v1253 = vsel %vm796, %v1222, 0
      %v1255 = vsel %vm796, %v1224, 0
      %v1257 = vsel %vm796, %v1226, 0
      %v1259 = vsel %vm796, %v1228, 0
      %v1261 = vsel %vm796, %v1230, 0
      %v1263 = vsel %vm796, %v1232, 0
      %1265 = vmatprep.subr.mxu0 0.0
      %1266 = vmatpush1.xpose.msra.mxu0 %v1249
      %1267 = vmatprep.subr.mxu0 0.0
      %1268 = vmatpush1.xpose.msra.mxu0 %v1251
      %1269 = vmatprep.subr.mxu0 0.0
      %1270 = vmatpush1.xpose.msra.mxu0 %v1253
      %1271 = vmatprep.subr.mxu0 0.0
      %1272 = vmatpush1.xpose.msra.mxu0 %v1255
      %1273 = vmatprep.subr.mxu0 0.0
      %1274 = vmatpush1.xpose.msra.mxu0 %v1257
      %1275 = vmatprep.subr.mxu0 0.0
      %1276 = vmatpush1.xpose.msra.mxu0 %v1259
      %1277 = vmatprep.subr.mxu0 0.0
      %1278 = vmatpush1.xpose.msra.mxu0 %v1261
      %1279 = vmatprep.subr.mxu0 0.0
      %1280 = vmatpush1.xpose.msra.mxu0 %v1263
      %1281 = vmatprep.subr.mxu0 0.0
      %1282 = vmatpush1.xpose.msra.mxu0 0.0
      %1283 = vmatprep.subr.mxu0 0.0
      %1284 = vmatpush1.xpose.msra.mxu0 0.0
      %1285 = vmatprep.subr.mxu0 0.0
      %1286 = vmatpush1.xpose.msra.mxu0 0.0
      %1287 = vmatprep.subr.mxu0 0.0
      %1288 = vmatpush1.xpose.msra.mxu0 0.0
      %1289 = vmatprep.subr.mxu0 0.0
      %1290 = vmatpush1.xpose.msra.mxu0 0.0
      %1291 = vmatprep.subr.mxu0 0.0
      %1292 = vmatpush1.xpose.msra.mxu0 0.0
      %1293 = vmatprep.subr.mxu0 0.0
      %1294 = vmatpush1.xpose.msra.mxu0 0.0
      %1295 = vmatprep.subr.mxu0 0.0
      %1296 = vmatpush1.xpose.msra.mxu0 0.0
      %1297 = vmatprep.subr.mxu0 0.0
      %1298 = vmatpush1.xpose.msra.mxu0 0.0
      %1299 = vmatprep.subr.mxu0 0.0
      %1300 = vmatpush1.xpose.msra.mxu0 0.0
      %1301 = vmatprep.subr.mxu0 0.0
      %1302 = vmatpush1.xpose.msra.mxu0 0.0
      %1303 = vmatprep.subr.mxu0 0.0
      %1304 = vmatpush1.xpose.msra.mxu0 0.0
      %1305 = vmatprep.subr.mxu0 0.0
      %1306 = vmatpush1.xpose.msra.mxu0 0.0
      %1307 = vmatprep.subr.mxu0 0.0
      %1308 = vmatpush1.xpose.msra.mxu0 0.0
      %1309 = vmatprep.subr.mxu0 0.0
      %1310 = vmatpush1.xpose.msra.mxu0 0.0
      %1311 = vmatprep.subr.mxu0 0.0
      %1312 = vmatpush1.xpose.msra.mxu0 0.0
      %1313 = vmatprep.subr.mxu0 0.0
      %1314 = vmatpush1.xpose.msra.mxu0 0.0
      %1315 = vmatprep.subr.mxu0 0.0
      %1316 = vmatpush1.xpose.msra.mxu0 0.0
      %1317 = vmatprep.subr.mxu0 0.0
      %1318 = vmatpush1.xpose.msra.mxu0 0.0
      %1319 = vmatprep.subr.mxu0 0.0
      %1320 = vmatpush1.xpose.msra.mxu0 0.0
      %1321 = vmatprep.subr.mxu0 0.0
      %1322 = vmatpush1.xpose.msra.mxu0 0.0
      %1323 = vmatprep.subr.mxu0 0.0
      %1324 = vmatpush1.xpose.msra.mxu0 0.0
      %1325 = vmatprep.subr.mxu0 0.0
      %1326 = vmatpush1.xpose.msra.mxu0 0.0
      %1327 = vmatprep.subr.mxu0 0.0
      %1328 = vmatpush1.xpose.msra.mxu0 0.0
      %1329 = vmatprep.mubr.f32.mxu0 0.0
      %1330 = vmatmul.mubr.f32.gmra.mrb[0].mxu0 %v1233
      %v1331 = vpop.f32.mrb[0].mxu0
      %v1332 = vadd.f32 %v1193, %v1331
      %v1333 = vpop.f32.mrb[0].mxu0
      %1334 = vmatprep.mubr.f32.mxu0 0.0
      %1335 = vmatmul.mubr.f32.gmra.mrb[0].mxu0 %v1235
      %v1336 = vpop.f32.mrb[0].mxu0
      %v1337 = vadd.f32 %v1194, %v1336
      %v1338 = vpop.f32.mrb[0].mxu0
      %1339 = vmatprep.mubr.f32.mxu0 0.0
      %1340 = vmatmul.mubr.f32.gmra.mrb[0].mxu0 %v1237
      %v1341 = vpop.f32.mrb[0].mxu0
      %v1342 = vadd.f32 %v1195, %v1341
      %v1343 = vpop.f32.mrb[0].mxu0
      %1344 = vmatprep.mubr.f32.mxu0 0.0
      %1345 = vmatmul.mubr.f32.gmra.mrb[0].mxu0 %v1239
      %v1346 = vpop.f32.mrb[0].mxu0
      %v1347 = vadd.f32 %v1196, %v1346
      %v1348 = vpop.f32.mrb[0].mxu0
      %1349 = vmatprep.mubr.f32.mxu0 0.0
      %1350 = vmatmul.mubr.f32.gmra.mrb[0].mxu0 %v1241
      %v1351 = vpop.f32.mrb[0].mxu0
      %v1352 = vadd.f32 %v1197, %v1351
      %v1353 = vpop.f32.mrb[0].mxu0
      %1354 = vmatprep.mubr.f32.mxu0 0.0
      %1355 = vmatmul.mubr.f32.gmra.mrb[0].mxu0 %v1243
      %v1356 = vpop.f32.mrb[0].mxu0
      %v1357 = vadd.f32 %v1198, %v1356
      %v1358 = vpop.f32.mrb[0].mxu0
      %1359 = vmatprep.mubr.f32.mxu0 0.0
      %1360 = vmatmul.mubr.f32.gmra.mrb[0].mxu0 %v1245
      %v1361 = vpop.f32.mrb[0].mxu0
      %v1362 = vadd.f32 %v1199, %v1361
      %v1363 = vpop.f32.mrb[0].mxu0
      %1364 = vmatprep.mubr.f32.mxu0 0.0
      %1365 = vmatmul.mubr.f32.gmra.mrb[0].mxu0 %v1247
      %v1366 = vpop.f32.mrb[0].mxu0
      %v1367 = vadd.f32 %v1200, %v1366
      %v1368 = vpop.f32.mrb[0].mxu0
      %1369 = vdwg.mxu0
      %v1370 = vsel %vm942, %v1332, -inf
      %1371 = vmax.xlane.f32.xlu0 %v1370
      %v1372 = vpop.xlane.xlu0 %1371
      %v1373 = vsel %vm942, %v1337, -inf
      %1374 = vmax.xlane.f32.xlu0 %v1373
      %v1375 = vpop.xlane.xlu0 %1374
      %v1376 = vsel %vm942, %v1342, -inf
      %1377 = vmax.xlane.f32.xlu0 %v1376
      %v1378 = vpop.xlane.xlu0 %1377
      %v1379 = vsel %vm942, %v1347, -inf
      %1380 = vmax.xlane.f32.xlu0 %v1379
      %v1381 = vpop.xlane.xlu0 %1380
      %v1382 = vsel %vm942, %v1352, -inf
      %1383 = vmax.xlane.f32.xlu0 %v1382
      %v1384 = vpop.xlane.xlu0 %1383
      %v1385 = vsel %vm942, %v1357, -inf
      %1386 = vmax.xlane.f32.xlu0 %v1385
      %v1387 = vpop.xlane.xlu0 %1386
      %v1388 = vsel %vm942, %v1362, -inf
      %1389 = vmax.xlane.f32.xlu0 %v1388
      %v1390 = vpop.xlane.xlu0 %1389
      %v1391 = vsel %vm942, %v1367, -inf
      %1392 = vmax.xlane.f32.xlu0 %v1391
      %v1393 = vpop.xlane.xlu0 %1392
      %v1394 = vsub.f32 %v1332, %v1372
      %v1395 = vsub.f32 %v1337, %v1375
      %v1396 = vsub.f32 %v1342, %v1378
      %v1397 = vsub.f32 %v1347, %v1381
      %v1398 = vsub.f32 %v1352, %v1384
      %v1399 = vsub.f32 %v1357, %v1387
      %v1400 = vsub.f32 %v1362, %v1390
      %v1401 = vsub.f32 %v1367, %v1393
      %v1402 = vmul.f32 %v1394, 1.442695
      %v1403 = vpow.pop %v1402
      %v1404 = vmul.f32 %v1395, 1.442695
      %v1405 = vpow.pop %v1404
      %v1406 = vmul.f32 %v1396, 1.442695
      %v1407 = vpow.pop %v1406
      %v1408 = vmul.f32 %v1397, 1.442695
      %v1409 = vpow.pop %v1408
      %v1410 = vmul.f32 %v1398, 1.442695
      %v1411 = vpow.pop %v1410
      %v1412 = vmul.f32 %v1399, 1.442695
      %v1413 = vpow.pop %v1412
      %v1414 = vmul.f32 %v1400, 1.442695
      %v1415 = vpow.pop %v1414
      %v1416 = vmul.f32 %v1401, 1.442695
      %v1417 = vpow.pop %v1416
      %v1418 = vsel %vm942, %v1403, 0.0
      %1419 = vadd.xlane.f32.xlu0 %v1418
      %v1420 = vpop.xlane.xlu0 %1419
      %v1421 = vsel %vm942, %v1405, 0.0
      %1422 = vadd.xlane.f32.xlu0 %v1421
      %v1423 = vpop.xlane.xlu0 %1422
      %v1424 = vsel %vm942, %v1407, 0.0
      %1425 = vadd.xlane.f32.xlu0 %v1424
      %v1426 = vpop.xlane.xlu0 %1425
      %v1427 = vsel %vm942, %v1409, 0.0
      %1428 = vadd.xlane.f32.xlu0 %v1427
      %v1429 = vpop.xlane.xlu0 %1428
      %v1430 = vsel %vm942, %v1411, 0.0
      %1431 = vadd.xlane.f32.xlu0 %v1430
      %v1432 = vpop.xlane.xlu0 %1431
      %v1433 = vsel %vm942, %v1413, 0.0
      %1434 = vadd.xlane.f32.xlu0 %v1433
      %v1435 = vpop.xlane.xlu0 %1434
      %v1436 = vsel %vm942, %v1415, 0.0
      %1437 = vadd.xlane.f32.xlu0 %v1436
      %v1438 = vpop.xlane.xlu0 %1437
      %v1439 = vsel %vm942, %v1417, 0.0
      %1440 = vadd.xlane.f32.xlu0 %v1439
      %v1441 = vpop.xlane.xlu0 %1440
      %v1442 = vrcp.pop %v1420
      %v1443 = vmul.f32 1.0, %v1442
      %v1444 = vrcp.pop %v1423
      %v1445 = vmul.f32 1.0, %v1444
      %v1446 = vrcp.pop %v1426
      %v1447 = vmul.f32 1.0, %v1446
      %v1448 = vrcp.pop %v1429
      %v1449 = vmul.f32 1.0, %v1448
      %v1450 = vrcp.pop %v1432
      %v1451 = vmul.f32 1.0, %v1450
      %v1452 = vrcp.pop %v1435
      %v1453 = vmul.f32 1.0, %v1452
      %v1454 = vrcp.pop %v1438
      %v1455 = vmul.f32 1.0, %v1454
      %v1456 = vrcp.pop %v1441
      %v1457 = vmul.f32 1.0, %v1456
      %v1458 = vmul.f32 %v1403, %v1443
      %v1459 = vmul.f32 %v1405, %v1445
      %v1460 = vmul.f32 %v1407, %v1447
      %v1461 = vmul.f32 %v1409, %v1449
      %v1462 = vmul.f32 %v1411, %v1451
      %v1463 = vmul.f32 %v1413, %v1453
      %v1464 = vmul.f32 %v1415, %v1455
      %v1465 = vmul.f32 %v1417, %v1457
      %1466 = vrot.lane.b32.xlu0 %v714, 56
      %v1467 = vpop.permute.xlu0 %1466
      %1468 = vrot.lane.b32.xlu0 %v719, 56
      %v1469 = vpop.permute.xlu0 %1468
      %1470 = vrot.lane.b32.xlu0 %v724, 56
      %v1471 = vpop.permute.xlu0 %1470
      %1472 = vrot.lane.b32.xlu0 %v729, 56
      %v1473 = vpop.permute.xlu0 %1472
      %1474 = vrot.lane.b32.xlu0 %v734, 56
      %v1475 = vpop.permute.xlu0 %1474
      %1476 = vrot.lane.b32.xlu0 %v739, 56
      %v1477 = vpop.permute.xlu0 %1476
      %1478 = vrot.lane.b32.xlu0 %v744, 56
      %v1479 = vpop.permute.xlu0 %1478
      %1480 = vrot.lane.b32.xlu0 %v749, 56
      %v1481 = vpop.permute.xlu0 %1480
      %v1491 = vsel %vm942, %v1458, 0
      %v1494 = vsel %vm942, %v1459, 0
      %v1497 = vsel %vm942, %v1460, 0
      %v1500 = vsel %vm942, %v1461, 0
      %v1503 = vsel %vm942, %v1462, 0
      %v1506 = vsel %vm942, %v1463, 0
      %v1509 = vsel %vm942, %v1464, 0
      %v1512 = vsel %vm942, %v1465, 0
      %1514 = vmatprep.subr.mxu0 0.0
      %1515 = vmatpush1.msra.mxu0 %v1467
      %1516 = vmatprep.subr.mxu0 0.0
      %1517 = vmatpush1.msra.mxu0 %v1469
      %1518 = vmatprep.subr.mxu0 0.0
      %1519 = vmatpush1.msra.mxu0 %v1471
      %1520 = vmatprep.subr.mxu0 0.0
      %1521 = vmatpush1.msra.mxu0 %v1473
      %1522 = vmatprep.subr.mxu0 0.0
      %1523 = vmatpush1.msra.mxu0 %v1475
      %1524 = vmatprep.subr.mxu0 0.0
      %1525 = vmatpush1.msra.mxu0 %v1477
      %1526 = vmatprep.subr.mxu0 0.0
      %1527 = vmatpush1.msra.mxu0 %v1479
      %1528 = vmatprep.subr.mxu0 0.0
      %1529 = vmatpush1.msra.mxu0 %v1481
      %1530 = vmatprep.subr.mxu0 0.0
      %1531 = vmatpush1.msra.mxu0 0.0
      %1532 = vmatprep.subr.mxu0 0.0
      %1533 = vmatpush1.msra.mxu0 0.0
      %1534 = vmatprep.subr.mxu0 0.0
      %1535 = vmatpush1.msra.mxu0 0.0
      %1536 = vmatprep.subr.mxu0 0.0
      %1537 = vmatpush1.msra.mxu0 0.0
      %1538 = vmatprep.subr.mxu0 0.0
      %1539 = vmatpush1.msra.mxu0 0.0
      %1540 = vmatprep.subr.mxu0 0.0
      %1541 = vmatpush1.msra.mxu0 0.0
      %1542 = vmatprep.subr.mxu0 0.0
      %1543 = vmatpush1.msra.mxu0 0.0
      %1544 = vmatprep.subr.mxu0 0.0
      %1545 = vmatpush1.msra.mxu0 0.0
      %1546 = vmatprep.subr.mxu0 0.0
      %1547 = vmatpush1.msra.mxu0 0.0
      %1548 = vmatprep.subr.mxu0 0.0
      %1549 = vmatpush1.msra.mxu0 0.0
      %1550 = vmatprep.subr.mxu0 0.0
      %1551 = vmatpush1.msra.mxu0 0.0
      %1552 = vmatprep.subr.mxu0 0.0
      %1553 = vmatpush1.msra.mxu0 0.0
      %1554 = vmatprep.subr.mxu0 0.0
      %1555 = vmatpush1.msra.mxu0 0.0
      %1556 = vmatprep.subr.mxu0 0.0
      %1557 = vmatpush1.msra.mxu0 0.0
      %1558 = vmatprep.subr.mxu0 0.0
      %1559 = vmatpush1.msra.mxu0 0.0
      %1560 = vmatprep.subr.mxu0 0.0
      %1561 = vmatpush1.msra.mxu0 0.0
      %1562 = vmatprep.subr.mxu0 0.0
      %1563 = vmatpush1.msra.mxu0 0.0
      %1564 = vmatprep.subr.mxu0 0.0
      %1565 = vmatpush1.msra.mxu0 0.0
      %1566 = vmatprep.subr.mxu0 0.0
      %1567 = vmatpush1.msra.mxu0 0.0
      %1568 = vmatprep.subr.mxu0 0.0
      %1569 = vmatpush1.msra.mxu0 0.0
      %1570 = vmatprep.subr.mxu0 0.0
      %1571 = vmatpush1.msra.mxu0 0.0
      %1572 = vmatprep.subr.mxu0 0.0
      %1573 = vmatpush1.msra.mxu0 0.0
      %1574 = vmatprep.subr.mxu0 0.0
      %1575 = vmatpush1.msra.mxu0 0.0
      %1576 = vmatprep.subr.mxu0 0.0
      %1577 = vmatpush1.msra.mxu0 0.0
      %1578 = vmatprep.mubr.f32.mxu0 0.0
      %1579 = vmatmul.mubr.f32.gmra.mrb[0].mxu0 %v1491
      %v1580 = vpop.f32.mrb[0].mxu0
      %v1581 = vadd.f32 0.0, %v1580
      %v1582 = vpop.f32.mrb[0].mxu0
      %1583 = vmatprep.mubr.f32.mxu0 0.0
      %1584 = vmatmul.mubr.f32.gmra.mrb[0].mxu0 %v1494
      %v1585 = vpop.f32.mrb[0].mxu0
      %v1586 = vadd.f32 0.0, %v1585
      %v1587 = vpop.f32.mrb[0].mxu0
      %1588 = vmatprep.mubr.f32.mxu0 0.0
      %1589 = vmatmul.mubr.f32.gmra.mrb[0].mxu0 %v1497
      %v1590 = vpop.f32.mrb[0].mxu0
      %v1591 = vadd.f32 0.0, %v1590
      %v1592 = vpop.f32.mrb[0].mxu0
      %1593 = vmatprep.mubr.f32.mxu0 0.0
      %1594 = vmatmul.mubr.f32.gmra.mrb[0].mxu0 %v1500
      %v1595 = vpop.f32.mrb[0].mxu0
      %v1596 = vadd.f32 0.0, %v1595
      %v1597 = vpop.f32.mrb[0].mxu0
      %1598 = vmatprep.mubr.f32.mxu0 0.0
      %1599 = vmatmul.mubr.f32.gmra.mrb[0].mxu0 %v1503
      %v1600 = vpop.f32.mrb[0].mxu0
      %v1601 = vadd.f32 0.0, %v1600
      %v1602 = vpop.f32.mrb[0].mxu0
      %1603 = vmatprep.mubr.f32.mxu0 0.0
      %1604 = vmatmul.mubr.f32.gmra.mrb[0].mxu0 %v1506
      %v1605 = vpop.f32.mrb[0].mxu0
      %v1606 = vadd.f32 0.0, %v1605
      %v1607 = vpop.f32.mrb[0].mxu0
      %1608 = vmatprep.mubr.f32.mxu0 0.0
      %1609 = vmatmul.mubr.f32.gmra.mrb[0].mxu0 %v1509
      %v1610 = vpop.f32.mrb[0].mxu0
      %v1611 = vadd.f32 0.0, %v1610
      %v1612 = vpop.f32.mrb[0].mxu0
      %1613 = vmatprep.mubr.f32.mxu0 0.0
      %1614 = vmatmul.mubr.f32.gmra.mrb[0].mxu0 %v1512
      %v1615 = vpop.f32.mrb[0].mxu0
      %v1616 = vadd.f32 0.0, %v1615
      %v1617 = vpop.f32.mrb[0].mxu0
      %1618 = vdwg.mxu0
      %v1620 = vsel %vm796, %v1581, 0
      %v1623 = vsel %vm796, %v1586, 0
      %v1626 = vsel %vm796, %v1591, 0
      %v1629 = vsel %vm796, %v1596, 0
      %v1632 = vsel %vm796, %v1601, 0
      %v1635 = vsel %vm796, %v1606, 0
      %v1638 = vsel %vm796, %v1611, 0
      %v1641 = vsel %vm796, %v1616, 0
      %1643 = vmatprep.subr.mxu0 0.0
      %1644 = vmatpush1.msra.mxu0 %v753
      %1645 = vmatprep.subr.mxu0 0.0
      %1646 = vmatpush1.msra.mxu0 0.0
      %1647 = vmatprep.subr.mxu0 0.0
      %1648 = vmatpush1.msra.mxu0 0.0
      %1649 = vmatprep.subr.mxu0 0.0
      %1650 = vmatpush1.msra.mxu0 0.0
      %1651 = vmatprep.subr.mxu0 0.0
      %1652 = vmatpush1.msra.mxu0 0.0
      %1653 = vmatprep.subr.mxu0 0.0
      %1654 = vmatpush1.msra.mxu0 0.0
      %1655 = vmatprep.subr.mxu0 0.0
      %1656 = vmatpush1.msra.mxu0 0.0
      %1657 = vmatprep.subr.mxu0 0.0
      %1658 = vmatpush1.msra.mxu0 0.0
      %1659 = vmatprep.subr.mxu0 0.0
      %1660 = vmatpush1.msra.mxu0 0.0
      %1661 = vmatprep.subr.mxu0 0.0
      %1662 = vmatpush1.msra.mxu0 0.0
      %1663 = vmatprep.subr.mxu0 0.0
      %1664 = vmatpush1.msra.mxu0 0.0
      %1665 = vmatprep.subr.mxu0 0.0
      %1666 = vmatpush1.msra.mxu0 0.0
      %1667 = vmatprep.subr.mxu0 0.0
      %1668 = vmatpush1.msra.mxu0 0.0
      %1669 = vmatprep.subr.mxu0 0.0
      %1670 = vmatpush1.msra.mxu0 0.0
      %1671 = vmatprep.subr.mxu0 0.0
      %1672 = vmatpush1.msra.mxu0 0.0
      %1673 = vmatprep.subr.mxu0 0.0
      %1674 = vmatpush1.msra.mxu0 0.0
      %1675 = vmatprep.subr.mxu0 0.0
      %1676 = vmatpush1.msra.mxu0 0.0
      %1677 = vmatprep.subr.mxu0 0.0
      %1678 = vmatpush1.msra.mxu0 0.0
      %1679 = vmatprep.subr.mxu0 0.0
      %1680 = vmatpush1.msra.mxu0 0.0
      %1681 = vmatprep.subr.mxu0 0.0
      %1682 = vmatpush1.msra.mxu0 0.0
      %1683 = vmatprep.subr.mxu0 0.0
      %1684 = vmatpush1.msra.mxu0 0.0
      %1685 = vmatprep.subr.mxu0 0.0
      %1686 = vmatpush1.msra.mxu0 0.0
      %1687 = vmatprep.subr.mxu0 0.0
      %1688 = vmatpush1.msra.mxu0 0.0
      %1689 = vmatprep.subr.mxu0 0.0
      %1690 = vmatpush1.msra.mxu0 0.0
      %1691 = vmatprep.subr.mxu0 0.0
      %1692 = vmatpush1.msra.mxu0 0.0
      %1693 = vmatprep.subr.mxu0 0.0
      %1694 = vmatpush1.msra.mxu0 0.0
      %1695 = vmatprep.subr.mxu0 0.0
      %1696 = vmatpush1.msra.mxu0 0.0
      %1697 = vmatprep.subr.mxu0 0.0
      %1698 = vmatpush1.msra.mxu0 0.0
      %1699 = vmatprep.subr.mxu0 0.0
      %1700 = vmatpush1.msra.mxu0 0.0
      %1701 = vmatprep.subr.mxu0 0.0
      %1702 = vmatpush1.msra.mxu0 0.0
      %1703 = vmatprep.subr.mxu0 0.0
      %1704 = vmatpush1.msra.mxu0 0.0
      %1705 = vmatprep.subr.mxu0 0.0
      %1706 = vmatpush1.msra.mxu0 0.0
      %1707 = vmatprep.mubr.f32.mxu0 0.0
      %1708 = vmatmul.mubr.f32.gmra.mrb[0].mxu0 %v1620
      %v1709 = vpop.f32.mrb[0].mxu0
      %v1710 = vadd.f32 0.0, %v1709
      %v1711 = vpop.f32.mrb[0].mxu0
      %1712 = vmatprep.mubr.f32.mxu0 0.0
      %1713 = vmatmul.mubr.f32.gmra.mrb[0].mxu0 %v1623
      %v1714 = vpop.f32.mrb[0].mxu0
      %v1715 = vadd.f32 0.0, %v1714
      %v1716 = vpop.f32.mrb[0].mxu0
      %1717 = vmatprep.mubr.f32.mxu0 0.0
      %1718 = vmatmul.mubr.f32.gmra.mrb[0].mxu0 %v1626
      %v1719 = vpop.f32.mrb[0].mxu0
      %v1720 = vadd.f32 0.0, %v1719
      %v1721 = vpop.f32.mrb[0].mxu0
      %1722 = vmatprep.mubr.f32.mxu0 0.0
      %1723 = vmatmul.mubr.f32.gmra.mrb[0].mxu0 %v1629
      %v1724 = vpop.f32.mrb[0].mxu0
      %v1725 = vadd.f32 0.0, %v1724
      %v1726 = vpop.f32.mrb[0].mxu0
      %1727 = vmatprep.mubr.f32.mxu0 0.0
      %1728 = vmatmul.mubr.f32.gmra.mrb[0].mxu0 %v1632
      %v1729 = vpop.f32.mrb[0].mxu0
      %v1730 = vadd.f32 0.0, %v1729
      %v1731 = vpop.f32.mrb[0].mxu0
      %1732 = vmatprep.mubr.f32.mxu0 0.0
      %1733 = vmatmul.mubr.f32.gmra.mrb[0].mxu0 %v1635
      %v1734 = vpop.f32.mrb[0].mxu0
      %v1735 = vadd.f32 0.0, %v1734
      %v1736 = vpop.f32.mrb[0].mxu0
      %1737 = vmatprep.mubr.f32.mxu0 0.0
      %1738 = vmatmul.mubr.f32.gmra.mrb[0].mxu0 %v1638
      %v1739 = vpop.f32.mrb[0].mxu0
      %v1740 = vadd.f32 0.0, %v1739
      %v1741 = vpop.f32.mrb[0].mxu0
      %1742 = vmatprep.mubr.f32.mxu0 0.0
      %1743 = vmatmul.mubr.f32.gmra.mrb[0].mxu0 %v1641
      %v1744 = vpop.f32.mrb[0].mxu0
      %v1745 = vadd.f32 0.0, %v1744
      %v1746 = vpop.f32.mrb[0].mxu0
      %1747 = vdwg.mxu0
      %v1749 = vsel %vm796, %v1154, 0
      %v1752 = vsel %vm796, %v1159, 0
      %v1755 = vsel %vm796, %v1164, 0
      %v1758 = vsel %vm796, %v1169, 0
      %v1761 = vsel %vm796, %v1174, 0
      %v1764 = vsel %vm796, %v1179, 0
      %v1767 = vsel %vm796, %v1184, 0
      %v1770 = vsel %vm796, %v1189, 0
      %1772 = vmatprep.subr.mxu0 0.0
      %1773 = vmatpush1.msra.mxu0 %v752
      %1774 = vmatprep.subr.mxu0 0.0
      %1775 = vmatpush1.msra.mxu0 0.0
      %1776 = vmatprep.subr.mxu0 0.0
      %1777 = vmatpush1.msra.mxu0 0.0
      %1778 = vmatprep.subr.mxu0 0.0
      %1779 = vmatpush1.msra.mxu0 0.0
      %1780 = vmatprep.subr.mxu0 0.0
      %1781 = vmatpush1.msra.mxu0 0.0
      %1782 = vmatprep.subr.mxu0 0.0
      %1783 = vmatpush1.msra.mxu0 0.0
      %1784 = vmatprep.subr.mxu0 0.0
      %1785 = vmatpush1.msra.mxu0 0.0
      %1786 = vmatprep.subr.mxu0 0.0
      %1787 = vmatpush1.msra.mxu0 0.0
      %1788 = vmatprep.subr.mxu0 0.0
      %1789 = vmatpush1.msra.mxu0 0.0
      %1790 = vmatprep.subr.mxu0 0.0
      %1791 = vmatpush1.msra.mxu0 0.0
      %1792 = vmatprep.subr.mxu0 0.0
      %1793 = vmatpush1.msra.mxu0 0.0
      %1794 = vmatprep.subr.mxu0 0.0
      %1795 = vmatpush1.msra.mxu0 0.0
      %1796 = vmatprep.subr.mxu0 0.0
      %1797 = vmatpush1.msra.mxu0 0.0
      %1798 = vmatprep.subr.mxu0 0.0
      %1799 = vmatpush1.msra.mxu0 0.0
      %1800 = vmatprep.subr.mxu0 0.0
      %1801 = vmatpush1.msra.mxu0 0.0
      %1802 = vmatprep.subr.mxu0 0.0
      %1803 = vmatpush1.msra.mxu0 0.0
      %1804 = vmatprep.subr.mxu0 0.0
      %1805 = vmatpush1.msra.mxu0 0.0
      %1806 = vmatprep.subr.mxu0 0.0
      %1807 = vmatpush1.msra.mxu0 0.0
      %1808 = vmatprep.subr.mxu0 0.0
      %1809 = vmatpush1.msra.mxu0 0.0
      %1810 = vmatprep.subr.mxu0 0.0
      %1811 = vmatpush1.msra.mxu0 0.0
      %1812 = vmatprep.subr.mxu0 0.0
      %1813 = vmatpush1.msra.mxu0 0.0
      %1814 = vmatprep.subr.mxu0 0.0
      %1815 = vmatpush1.msra.mxu0 0.0
      %1816 = vmatprep.subr.mxu0 0.0
      %1817 = vmatpush1.msra.mxu0 0.0
      %1818 = vmatprep.subr.mxu0 0.0
      %1819 = vmatpush1.msra.mxu0 0.0
      %1820 = vmatprep.subr.mxu0 0.0
      %1821 = vmatpush1.msra.mxu0 0.0
      %1822 = vmatprep.subr.mxu0 0.0
      %1823 = vmatpush1.msra.mxu0 0.0
      %1824 = vmatprep.subr.mxu0 0.0
      %1825 = vmatpush1.msra.mxu0 0.0
      %1826 = vmatprep.subr.mxu0 0.0
      %1827 = vmatpush1.msra.mxu0 0.0
      %1828 = vmatprep.subr.mxu0 0.0
      %1829 = vmatpush1.msra.mxu0 0.0
      %1830 = vmatprep.subr.mxu0 0.0
      %1831 = vmatpush1.msra.mxu0 0.0
      %1832 = vmatprep.subr.mxu0 0.0
      %1833 = vmatpush1.msra.mxu0 0.0
      %1834 = vmatprep.subr.mxu0 0.0
      %1835 = vmatpush1.msra.mxu0 0.0
      %1836 = vmatprep.mubr.f32.mxu0 0.0
      %1837 = vmatmul.mubr.f32.gmra.mrb[0].mxu0 %v1749
      %v1838 = vpop.f32.mrb[0].mxu0
      %v1839 = vadd.f32 %v1710, %v1838
      %v1840 = vpop.f32.mrb[0].mxu0
      %1841 = vmatprep.mubr.f32.mxu0 0.0
      %1842 = vmatmul.mubr.f32.gmra.mrb[0].mxu0 %v1752
      %v1843 = vpop.f32.mrb[0].mxu0
      %v1844 = vadd.f32 %v1715, %v1843
      %v1845 = vpop.f32.mrb[0].mxu0
      %1846 = vmatprep.mubr.f32.mxu0 0.0
      %1847 = vmatmul.mubr.f32.gmra.mrb[0].mxu0 %v1755
      %v1848 = vpop.f32.mrb[0].mxu0
      %v1849 = vadd.f32 %v1720, %v1848
      %v1850 = vpop.f32.mrb[0].mxu0
      %1851 = vmatprep.mubr.f32.mxu0 0.0
      %1852 = vmatmul.mubr.f32.gmra.mrb[0].mxu0 %v1758
      %v1853 = vpop.f32.mrb[0].mxu0
      %v1854 = vadd.f32 %v1725, %v1853
      %v1855 = vpop.f32.mrb[0].mxu0
      %1856 = vmatprep.mubr.f32.mxu0 0.0
      %1857 = vmatmul.mubr.f32.gmra.mrb[0].mxu0 %v1761
      %v1858 = vpop.f32.mrb[0].mxu0
      %v1859 = vadd.f32 %v1730, %v1858
      %v1860 = vpop.f32.mrb[0].mxu0
      %1861 = vmatprep.mubr.f32.mxu0 0.0
      %1862 = vmatmul.mubr.f32.gmra.mrb[0].mxu0 %v1764
      %v1863 = vpop.f32.mrb[0].mxu0
      %v1864 = vadd.f32 %v1735, %v1863
      %v1865 = vpop.f32.mrb[0].mxu0
      %1866 = vmatprep.mubr.f32.mxu0 0.0
      %1867 = vmatmul.mubr.f32.gmra.mrb[0].mxu0 %v1767
      %v1868 = vpop.f32.mrb[0].mxu0
      %v1869 = vadd.f32 %v1740, %v1868
      %v1870 = vpop.f32.mrb[0].mxu0
      %1871 = vmatprep.mubr.f32.mxu0 0.0
      %1872 = vmatmul.mubr.f32.gmra.mrb[0].mxu0 %v1770
      %v1873 = vpop.f32.mrb[0].mxu0
      %v1874 = vadd.f32 %v1745, %v1873
      %v1875 = vpop.f32.mrb[0].mxu0
      %1876 = vdwg.mxu0
      %s1877 = scalar_lea.vmem %s1, 128
      %v1878 = vld [vmem:[%s1877] sm:$0xff]
      %v1879 = vld [vmem:[%s1877 + $0x8] sm:$0xff]
      %v1880 = vld [vmem:[%s1877 + $0x10] sm:$0xff]
      %v1881 = vld [vmem:[%s1877 + $0x18] sm:$0xff]
      %v1882 = vld [vmem:[%s1877 + $0x20] sm:$0xff]
      %v1883 = vld [vmem:[%s1877 + $0x28] sm:$0xff]
      %v1884 = vld [vmem:[%s1877 + $0x30] sm:$0xff]
      %v1885 = vld [vmem:[%s1877 + $0x38] sm:$0xff]
      %1886 = vrot.lane.b32.xlu0 %v756, 112
      %v1887 = vpop.permute.xlu0 %1886
      %1888 = vrot.lane.b32.xlu0 %v757, 112
      %v1889 = vpop.permute.xlu0 %1888
      %1890 = vrot.lane.b32.xlu0 %v758, 112
      %v1891 = vpop.permute.xlu0 %1890
      %1892 = vrot.lane.b32.xlu0 %v759, 112
      %v1893 = vpop.permute.xlu0 %1892
      %1894 = vrot.lane.b32.xlu0 %v760, 112
      %v1895 = vpop.permute.xlu0 %1894
      %1896 = vrot.lane.b32.xlu0 %v761, 112
      %v1897 = vpop.permute.xlu0 %1896
      %1898 = vrot.lane.b32.xlu0 %v762, 112
      %v1899 = vpop.permute.xlu0 %1898
      %1900 = vrot.lane.b32.xlu0 %v763, 112
      %v1901 = vpop.permute.xlu0 %1900
      %1902 = vrot.lane.b32.xlu0 %v714, 80
      %v1903 = vpop.permute.xlu0 %1902
      %1904 = vrot.lane.b32.xlu0 %v719, 80
      %v1905 = vpop.permute.xlu0 %1904
      %1906 = vrot.lane.b32.xlu0 %v724, 80
      %v1907 = vpop.permute.xlu0 %1906
      %1908 = vrot.lane.b32.xlu0 %v729, 80
      %v1909 = vpop.permute.xlu0 %1908
      %1910 = vrot.lane.b32.xlu0 %v734, 80
      %v1911 = vpop.permute.xlu0 %1910
      %1912 = vrot.lane.b32.xlu0 %v739, 80
      %v1913 = vpop.permute.xlu0 %1912
      %1914 = vrot.lane.b32.xlu0 %v744, 80
      %v1915 = vpop.permute.xlu0 %1914
      %1916 = vrot.lane.b32.xlu0 %v749, 80
      %v1917 = vpop.permute.xlu0 %1916
      %v1918 = vsel %vm796, %v1887, 0
      %v1920 = vsel %vm796, %v1889, 0
      %v1922 = vsel %vm796, %v1891, 0
      %v1924 = vsel %vm796, %v1893, 0
      %v1926 = vsel %vm796, %v1895, 0
      %v1928 = vsel %vm796, %v1897, 0
      %v1930 = vsel %vm796, %v1899, 0
      %v1932 = vsel %vm796, %v1901, 0
      %v1934 = vsel %vm796, %v1903, 0
      %v1936 = vsel %vm796, %v1905, 0
      %v1938 = vsel %vm796, %v1907, 0
      %v1940 = vsel %vm796, %v1909, 0
      %v1942 = vsel %vm796, %v1911, 0
      %v1944 = vsel %vm796, %v1913, 0
      %v1946 = vsel %vm796, %v1915, 0
      %v1948 = vsel %vm796, %v1917, 0
      %1950 = vmatprep.subr.mxu0 0.0
      %1951 = vmatpush1.xpose.msra.mxu0 %v1934
      %1952 = vmatprep.subr.mxu0 0.0
      %1953 = vmatpush1.xpose.msra.mxu0 %v1936
      %1954 = vmatprep.subr.mxu0 0.0
      %1955 = vmatpush1.xpose.msra.mxu0 %v1938
      %1956 = vmatprep.subr.mxu0 0.0
      %1957 = vmatpush1.xpose.msra.mxu0 %v1940
      %1958 = vmatprep.subr.mxu0 0.0
      %1959 = vmatpush1.xpose.msra.mxu0 %v1942
      %1960 = vmatprep.subr.mxu0 0.0
      %1961 = vmatpush1.xpose.msra.mxu0 %v1944
      %1962 = vmatprep.subr.mxu0 0.0
      %1963 = vmatpush1.xpose.msra.mxu0 %v1946
      %1964 = vmatprep.subr.mxu0 0.0
      %1965 = vmatpush1.xpose.msra.mxu0 %v1948
      %1966 = vmatprep.subr.mxu0 0.0
      %1967 = vmatpush1.xpose.msra.mxu0 0.0
      %1968 = vmatprep.subr.mxu0 0.0
      %1969 = vmatpush1.xpose.msra.mxu0 0.0
      %1970 = vmatprep.subr.mxu0 0.0
      %1971 = vmatpush1.xpose.msra.mxu0 0.0
      %1972 = vmatprep.subr.mxu0 0.0
      %1973 = vmatpush1.xpose.msra.mxu0 0.0
      %1974 = vmatprep.subr.mxu0 0.0
      %1975 = vmatpush1.xpose.msra.mxu0 0.0
      %1976 = vmatprep.subr.mxu0 0.0
      %1977 = vmatpush1.xpose.msra.mxu0 0.0
      %1978 = vmatprep.subr.mxu0 0.0
      %1979 = vmatpush1.xpose.msra.mxu0 0.0
      %1980 = vmatprep.subr.mxu0 0.0
      %1981 = vmatpush1.xpose.msra.mxu0 0.0
      %1982 = vmatprep.subr.mxu0 0.0
      %1983 = vmatpush1.xpose.msra.mxu0 0.0
      %1984 = vmatprep.subr.mxu0 0.0
      %1985 = vmatpush1.xpose.msra.mxu0 0.0
      %1986 = vmatprep.subr.mxu0 0.0
      %1987 = vmatpush1.xpose.msra.mxu0 0.0
      %1988 = vmatprep.subr.mxu0 0.0
      %1989 = vmatpush1.xpose.msra.mxu0 0.0
      %1990 = vmatprep.subr.mxu0 0.0
      %1991 = vmatpush1.xpose.msra.mxu0 0.0
      %1992 = vmatprep.subr.mxu0 0.0
      %1993 = vmatpush1.xpose.msra.mxu0 0.0
      %1994 = vmatprep.subr.mxu0 0.0
      %1995 = vmatpush1.xpose.msra.mxu0 0.0
      %1996 = vmatprep.subr.mxu0 0.0
      %1997 = vmatpush1.xpose.msra.mxu0 0.0
      %1998 = vmatprep.subr.mxu0 0.0
      %1999 = vmatpush1.xpose.msra.mxu0 0.0
      %2000 = vmatprep.subr.mxu0 0.0
      %2001 = vmatpush1.xpose.msra.mxu0 0.0
      %2002 = vmatprep.subr.mxu0 0.0
      %2003 = vmatpush1.xpose.msra.mxu0 0.0
      %2004 = vmatprep.subr.mxu0 0.0
      %2005 = vmatpush1.xpose.msra.mxu0 0.0
      %2006 = vmatprep.subr.mxu0 0.0
      %2007 = vmatpush1.xpose.msra.mxu0 0.0
      %2008 = vmatprep.subr.mxu0 0.0
      %2009 = vmatpush1.xpose.msra.mxu0 0.0
      %2010 = vmatprep.subr.mxu0 0.0
      %2011 = vmatpush1.xpose.msra.mxu0 0.0
      %2012 = vmatprep.subr.mxu0 0.0
      %2013 = vmatpush1.xpose.msra.mxu0 0.0
      %2014 = vmatprep.mubr.f32.mxu0 0.0
      %2015 = vmatmul.mubr.f32.gmra.mrb[0].mxu0 %v1918
      %v2016 = vpop.f32.mrb[0].mxu0
      %v2017 = vadd.f32 %v1878, %v2016
      %v2018 = vpop.f32.mrb[0].mxu0
      %2019 = vmatprep.mubr.f32.mxu0 0.0
      %2020 = vmatmul.mubr.f32.gmra.mrb[0].mxu0 %v1920
      %v2021 = vpop.f32.mrb[0].mxu0
      %v2022 = vadd.f32 %v1879, %v2021
      %v2023 = vpop.f32.mrb[0].mxu0
      %2024 = vmatprep.mubr.f32.mxu0 0.0
      %2025 = vmatmul.mubr.f32.gmra.mrb[0].mxu0 %v1922
      %v2026 = vpop.f32.mrb[0].mxu0
      %v2027 = vadd.f32 %v1880, %v2026
      %v2028 = vpop.f32.mrb[0].mxu0
      %2029 = vmatprep.mubr.f32.mxu0 0.0
      %2030 = vmatmul.mubr.f32.gmra.mrb[0].mxu0 %v1924
      %v2031 = vpop.f32.mrb[0].mxu0
      %v2032 = vadd.f32 %v1881, %v2031
      %v2033 = vpop.f32.mrb[0].mxu0
      %2034 = vmatprep.mubr.f32.mxu0 0.0
      %2035 = vmatmul.mubr.f32.gmra.mrb[0].mxu0 %v1926
      %v2036 = vpop.f32.mrb[0].mxu0
      %v2037 = vadd.f32 %v1882, %v2036
      %v2038 = vpop.f32.mrb[0].mxu0
      %2039 = vmatprep.mubr.f32.mxu0 0.0
      %2040 = vmatmul.mubr.f32.gmra.mrb[0].mxu0 %v1928
      %v2041 = vpop.f32.mrb[0].mxu0
      %v2042 = vadd.f32 %v1883, %v2041
      %v2043 = vpop.f32.mrb[0].mxu0
      %2044 = vmatprep.mubr.f32.mxu0 0.0
      %2045 = vmatmul.mubr.f32.gmra.mrb[0].mxu0 %v1930
      %v2046 = vpop.f32.mrb[0].mxu0
      %v2047 = vadd.f32 %v1884, %v2046
      %v2048 = vpop.f32.mrb[0].mxu0
      %2049 = vmatprep.mubr.f32.mxu0 0.0
      %2050 = vmatmul.mubr.f32.gmra.mrb[0].mxu0 %v1932
      %v2051 = vpop.f32.mrb[0].mxu0
      %v2052 = vadd.f32 %v1885, %v2051
      %v2053 = vpop.f32.mrb[0].mxu0
      %2054 = vdwg.mxu0
      %v2055 = vsel %vm942, %v2017, -inf
      %2056 = vmax.xlane.f32.xlu0 %v2055
      %v2057 = vpop.xlane.xlu0 %2056
      %v2058 = vsel %vm942, %v2022, -inf
      %2059 = vmax.xlane.f32.xlu0 %v2058
      %v2060 = vpop.xlane.xlu0 %2059
      %v2061 = vsel %vm942, %v2027, -inf
      %2062 = vmax.xlane.f32.xlu0 %v2061
      %v2063 = vpop.xlane.xlu0 %2062
      %v2064 = vsel %vm942, %v2032, -inf
      %2065 = vmax.xlane.f32.xlu0 %v2064
      %v2066 = vpop.xlane.xlu0 %2065
      %v2067 = vsel %vm942, %v2037, -inf
      %2068 = vmax.xlane.f32.xlu0 %v2067
      %v2069 = vpop.xlane.xlu0 %2068
      %v2070 = vsel %vm942, %v2042, -inf
      %2071 = vmax.xlane.f32.xlu0 %v2070
      %v2072 = vpop.xlane.xlu0 %2071
      %v2073 = vsel %vm942, %v2047, -inf
      %2074 = vmax.xlane.f32.xlu0 %v2073
      %v2075 = vpop.xlane.xlu0 %2074
      %v2076 = vsel %vm942, %v2052, -inf
      %2077 = vmax.xlane.f32.xlu0 %v2076
      %v2078 = vpop.xlane.xlu0 %2077
      %v2079 = vsub.f32 %v2017, %v2057
      %v2080 = vsub.f32 %v2022, %v2060
      %v2081 = vsub.f32 %v2027, %v2063
      %v2082 = vsub.f32 %v2032, %v2066
      %v2083 = vsub.f32 %v2037, %v2069
      %v2084 = vsub.f32 %v2042, %v2072
      %v2085 = vsub.f32 %v2047, %v2075
      %v2086 = vsub.f32 %v2052, %v2078
      %v2087 = vmul.f32 %v2079, 1.442695
      %v2088 = vpow.pop %v2087
      %v2089 = vmul.f32 %v2080, 1.442695
      %v2090 = vpow.pop %v2089
      %v2091 = vmul.f32 %v2081, 1.442695
      %v2092 = vpow.pop %v2091
      %v2093 = vmul.f32 %v2082, 1.442695
      %v2094 = vpow.pop %v2093
      %v2095 = vmul.f32 %v2083, 1.442695
      %v2096 = vpow.pop %v2095
      %v2097 = vmul.f32 %v2084, 1.442695
      %v2098 = vpow.pop %v2097
      %v2099 = vmul.f32 %v2085, 1.442695
      %v2100 = vpow.pop %v2099
      %v2101 = vmul.f32 %v2086, 1.442695
      %v2102 = vpow.pop %v2101
      %v2103 = vsel %vm942, %v2088, 0.0
      %2104 = vadd.xlane.f32.xlu0 %v2103
      %v2105 = vpop.xlane.xlu0 %2104
      %v2106 = vsel %vm942, %v2090, 0.0
      %2107 = vadd.xlane.f32.xlu0 %v2106
      %v2108 = vpop.xlane.xlu0 %2107
      %v2109 = vsel %vm942, %v2092, 0.0
      %2110 = vadd.xlane.f32.xlu0 %v2109
      %v2111 = vpop.xlane.xlu0 %2110
      %v2112 = vsel %vm942, %v2094, 0.0
      %2113 = vadd.xlane.f32.xlu0 %v2112
      %v2114 = vpop.xlane.xlu0 %2113
      %v2115 = vsel %vm942, %v2096, 0.0
      %2116 = vadd.xlane.f32.xlu0 %v2115
      %v2117 = vpop.xlane.xlu0 %2116
      %v2118 = vsel %vm942, %v2098, 0.0
      %2119 = vadd.xlane.f32.xlu0 %v2118
      %v2120 = vpop.xlane.xlu0 %2119
      %v2121 = vsel %vm942, %v2100, 0.0
      %2122 = vadd.xlane.f32.xlu0 %v2121
      %v2123 = vpop.xlane.xlu0 %2122
      %v2124 = vsel %vm942, %v2102, 0.0
      %2125 = vadd.xlane.f32.xlu0 %v2124
      %v2126 = vpop.xlane.xlu0 %2125
      %v2127 = vrcp.pop %v2105
      %v2128 = vmul.f32 1.0, %v2127
      %v2129 = vrcp.pop %v2108
      %v2130 = vmul.f32 1.0, %v2129
      %v2131 = vrcp.pop %v2111
      %v2132 = vmul.f32 1.0, %v2131
      %v2133 = vrcp.pop %v2114
      %v2134 = vmul.f32 1.0, %v2133
      %v2135 = vrcp.pop %v2117
      %v2136 = vmul.f32 1.0, %v2135
      %v2137 = vrcp.pop %v2120
      %v2138 = vmul.f32 1.0, %v2137
      %v2139 = vrcp.pop %v2123
      %v2140 = vmul.f32 1.0, %v2139
      %v2141 = vrcp.pop %v2126
      %v2142 = vmul.f32 1.0, %v2141
      %v2143 = vmul.f32 %v2088, %v2128
      %v2144 = vmul.f32 %v2090, %v2130
      %v2145 = vmul.f32 %v2092, %v2132
      %v2146 = vmul.f32 %v2094, %v2134
      %v2147 = vmul.f32 %v2096, %v2136
      %v2148 = vmul.f32 %v2098, %v2138
      %v2149 = vmul.f32 %v2100, %v2140
      %v2150 = vmul.f32 %v2102, %v2142
      %2151 = vrot.lane.b32.xlu0 %v714, 48
      %v2152 = vpop.permute.xlu0 %2151
      %2153 = vrot.lane.b32.xlu0 %v719, 48
      %v2154 = vpop.permute.xlu0 %2153
      %2155 = vrot.lane.b32.xlu0 %v724, 48
      %v2156 = vpop.permute.xlu0 %2155
      %2157 = vrot.lane.b32.xlu0 %v729, 48
      %v2158 = vpop.permute.xlu0 %2157
      %2159 = vrot.lane.b32.xlu0 %v734, 48
      %v2160 = vpop.permute.xlu0 %2159
      %2161 = vrot.lane.b32.xlu0 %v739, 48
      %v2162 = vpop.permute.xlu0 %2161
      %2163 = vrot.lane.b32.xlu0 %v744, 48
      %v2164 = vpop.permute.xlu0 %2163
      %2165 = vrot.lane.b32.xlu0 %v749, 48
      %v2166 = vpop.permute.xlu0 %2165
      %v2176 = vsel %vm942, %v2143, 0
      %v2179 = vsel %vm942, %v2144, 0
      %v2182 = vsel %vm942, %v2145, 0
      %v2185 = vsel %vm942, %v2146, 0
      %v2188 = vsel %vm942, %v2147, 0
      %v2191 = vsel %vm942, %v2148, 0
      %v2194 = vsel %vm942, %v2149, 0
      %v2197 = vsel %vm942, %v2150, 0
      %2199 = vmatprep.subr.mxu0 0.0
      %2200 = vmatpush1.msra.mxu0 %v2152
      %2201 = vmatprep.subr.mxu0 0.0
      %2202 = vmatpush1.msra.mxu0 %v2154
      %2203 = vmatprep.subr.mxu0 0.0
      %2204 = vmatpush1.msra.mxu0 %v2156
      %2205 = vmatprep.subr.mxu0 0.0
      %2206 = vmatpush1.msra.mxu0 %v2158
      %2207 = vmatprep.subr.mxu0 0.0
      %2208 = vmatpush1.msra.mxu0 %v2160
      %2209 = vmatprep.subr.mxu0 0.0
      %2210 = vmatpush1.msra.mxu0 %v2162
      %2211 = vmatprep.subr.mxu0 0.0
      %2212 = vmatpush1.msra.mxu0 %v2164
      %2213 = vmatprep.subr.mxu0 0.0
      %2214 = vmatpush1.msra.mxu0 %v2166
      %2215 = vmatprep.subr.mxu0 0.0
      %2216 = vmatpush1.msra.mxu0 0.0
      %2217 = vmatprep.subr.mxu0 0.0
      %2218 = vmatpush1.msra.mxu0 0.0
      %2219 = vmatprep.subr.mxu0 0.0
      %2220 = vmatpush1.msra.mxu0 0.0
      %2221 = vmatprep.subr.mxu0 0.0
      %2222 = vmatpush1.msra.mxu0 0.0
      %2223 = vmatprep.subr.mxu0 0.0
      %2224 = vmatpush1.msra.mxu0 0.0
      %2225 = vmatprep.subr.mxu0 0.0
      %2226 = vmatpush1.msra.mxu0 0.0
      %2227 = vmatprep.subr.mxu0 0.0
      %2228 = vmatpush1.msra.mxu0 0.0
      %2229 = vmatprep.subr.mxu0 0.0
      %2230 = vmatpush1.msra.mxu0 0.0
      %2231 = vmatprep.subr.mxu0 0.0
      %2232 = vmatpush1.msra.mxu0 0.0
      %2233 = vmatprep.subr.mxu0 0.0
      %2234 = vmatpush1.msra.mxu0 0.0
      %2235 = vmatprep.subr.mxu0 0.0
      %2236 = vmatpush1.msra.mxu0 0.0
      %2237 = vmatprep.subr.mxu0 0.0
      %2238 = vmatpush1.msra.mxu0 0.0
      %2239 = vmatprep.subr.mxu0 0.0
      %2240 = vmatpush1.msra.mxu0 0.0
      %2241 = vmatprep.subr.mxu0 0.0
      %2242 = vmatpush1.msra.mxu0 0.0
      %2243 = vmatprep.subr.mxu0 0.0
      %2244 = vmatpush1.msra.mxu0 0.0
      %2245 = vmatprep.subr.mxu0 0.0
      %2246 = vmatpush1.msra.mxu0 0.0
      %2247 = vmatprep.subr.mxu0 0.0
      %2248 = vmatpush1.msra.mxu0 0.0
      %2249 = vmatprep.subr.mxu0 0.0
      %2250 = vmatpush1.msra.mxu0 0.0
      %2251 = vmatprep.subr.mxu0 0.0
      %2252 = vmatpush1.msra.mxu0 0.0
      %2253 = vmatprep.subr.mxu0 0.0
      %2254 = vmatpush1.msra.mxu0 0.0
      %2255 = vmatprep.subr.mxu0 0.0
      %2256 = vmatpush1.msra.mxu0 0.0
      %2257 = vmatprep.subr.mxu0 0.0
      %2258 = vmatpush1.msra.mxu0 0.0
      %2259 = vmatprep.subr.mxu0 0.0
      %2260 = vmatpush1.msra.mxu0 0.0
      %2261 = vmatprep.subr.mxu0 0.0
      %2262 = vmatpush1.msra.mxu0 0.0
      %2263 = vmatprep.mubr.f32.mxu0 0.0
      %2264 = vmatmul.mubr.f32.gmra.mrb[0].mxu0 %v2176
      %v2265 = vpop.f32.mrb[0].mxu0
      %v2266 = vadd.f32 0.0, %v2265
      %v2267 = vpop.f32.mrb[0].mxu0
      %2268 = vmatprep.mubr.f32.mxu0 0.0
      %2269 = vmatmul.mubr.f32.gmra.mrb[0].mxu0 %v2179
      %v2270 = vpop.f32.mrb[0].mxu0
      %v2271 = vadd.f32 0.0, %v2270
      %v2272 = vpop.f32.mrb[0].mxu0
      %2273 = vmatprep.mubr.f32.mxu0 0.0
      %2274 = vmatmul.mubr.f32.gmra.mrb[0].mxu0 %v2182
      %v2275 = vpop.f32.mrb[0].mxu0
      %v2276 = vadd.f32 0.0, %v2275
      %v2277 = vpop.f32.mrb[0].mxu0
      %2278 = vmatprep.mubr.f32.mxu0 0.0
      %2279 = vmatmul.mubr.f32.gmra.mrb[0].mxu0 %v2185
      %v2280 = vpop.f32.mrb[0].mxu0
      %v2281 = vadd.f32 0.0, %v2280
      %v2282 = vpop.f32.mrb[0].mxu0
      %2283 = vmatprep.mubr.f32.mxu0 0.0
      %2284 = vmatmul.mubr.f32.gmra.mrb[0].mxu0 %v2188
      %v2285 = vpop.f32.mrb[0].mxu0
      %v2286 = vadd.f32 0.0, %v2285
      %v2287 = vpop.f32.mrb[0].mxu0
      %2288 = vmatprep.mubr.f32.mxu0 0.0
      %2289 = vmatmul.mubr.f32.gmra.mrb[0].mxu0 %v2191
      %v2290 = vpop.f32.mrb[0].mxu0
      %v2291 = vadd.f32 0.0, %v2290
      %v2292 = vpop.f32.mrb[0].mxu0
      %2293 = vmatprep.mubr.f32.mxu0 0.0
      %2294 = vmatmul.mubr.f32.gmra.mrb[0].mxu0 %v2194
      %v2295 = vpop.f32.mrb[0].mxu0
      %v2296 = vadd.f32 0.0, %v2295
      %v2297 = vpop.f32.mrb[0].mxu0
      %2298 = vmatprep.mubr.f32.mxu0 0.0
      %2299 = vmatmul.mubr.f32.gmra.mrb[0].mxu0 %v2197
      %v2300 = vpop.f32.mrb[0].mxu0
      %v2301 = vadd.f32 0.0, %v2300
      %v2302 = vpop.f32.mrb[0].mxu0
      %2303 = vdwg.mxu0
      %v2305 = vsel %vm796, %v2266, 0
      %v2308 = vsel %vm796, %v2271, 0
      %v2311 = vsel %vm796, %v2276, 0
      %v2314 = vsel %vm796, %v2281, 0
      %v2317 = vsel %vm796, %v2286, 0
      %v2320 = vsel %vm796, %v2291, 0
      %v2323 = vsel %vm796, %v2296, 0
      %v2326 = vsel %vm796, %v2301, 0
      %2328 = vmatprep.subr.mxu0 0.0
      %2329 = vmatpush1.msra.mxu0 %v754
      %2330 = vmatprep.subr.mxu0 0.0
      %2331 = vmatpush1.msra.mxu0 0.0
      %2332 = vmatprep.subr.mxu0 0.0
      %2333 = vmatpush1.msra.mxu0 0.0
      %2334 = vmatprep.subr.mxu0 0.0
      %2335 = vmatpush1.msra.mxu0 0.0
      %2336 = vmatprep.subr.mxu0 0.0
      %2337 = vmatpush1.msra.mxu0 0.0
      %2338 = vmatprep.subr.mxu0 0.0
      %2339 = vmatpush1.msra.mxu0 0.0
      %2340 = vmatprep.subr.mxu0 0.0
      %2341 = vmatpush1.msra.mxu0 0.0
      %2342 = vmatprep.subr.mxu0 0.0
      %2343 = vmatpush1.msra.mxu0 0.0
      %2344 = vmatprep.subr.mxu0 0.0
      %2345 = vmatpush1.msra.mxu0 0.0
      %2346 = vmatprep.subr.mxu0 0.0
      %2347 = vmatpush1.msra.mxu0 0.0
      %2348 = vmatprep.subr.mxu0 0.0
      %2349 = vmatpush1.msra.mxu0 0.0
      %2350 = vmatprep.subr.mxu0 0.0
      %2351 = vmatpush1.msra.mxu0 0.0
      %2352 = vmatprep.subr.mxu0 0.0
      %2353 = vmatpush1.msra.mxu0 0.0
      %2354 = vmatprep.subr.mxu0 0.0
      %2355 = vmatpush1.msra.mxu0 0.0
      %2356 = vmatprep.subr.mxu0 0.0
      %2357 = vmatpush1.msra.mxu0 0.0
      %2358 = vmatprep.subr.mxu0 0.0
      %2359 = vmatpush1.msra.mxu0 0.0
      %2360 = vmatprep.subr.mxu0 0.0
      %2361 = vmatpush1.msra.mxu0 0.0
      %2362 = vmatprep.subr.mxu0 0.0
      %2363 = vmatpush1.msra.mxu0 0.0
      %2364 = vmatprep.subr.mxu0 0.0
      %2365 = vmatpush1.msra.mxu0 0.0
      %2366 = vmatprep.subr.mxu0 0.0
      %2367 = vmatpush1.msra.mxu0 0.0
      %2368 = vmatprep.subr.mxu0 0.0
      %2369 = vmatpush1.msra.mxu0 0.0
      %2370 = vmatprep.subr.mxu0 0.0
      %2371 = vmatpush1.msra.mxu0 0.0
      %2372 = vmatprep.subr.mxu0 0.0
      %2373 = vmatpush1.msra.mxu0 0.0
      %2374 = vmatprep.subr.mxu0 0.0
      %2375 = vmatpush1.msra.mxu0 0.0
      %2376 = vmatprep.subr.mxu0 0.0
      %2377 = vmatpush1.msra.mxu0 0.0
      %2378 = vmatprep.subr.mxu0 0.0
      %2379 = vmatpush1.msra.mxu0 0.0
      %2380 = vmatprep.subr.mxu0 0.0
      %2381 = vmatpush1.msra.mxu0 0.0
      %2382 = vmatprep.subr.mxu0 0.0
      %2383 = vmatpush1.msra.mxu0 0.0
      %2384 = vmatprep.subr.mxu0 0.0
      %2385 = vmatpush1.msra.mxu0 0.0
      %2386 = vmatprep.subr.mxu0 0.0
      %2387 = vmatpush1.msra.mxu0 0.0
      %2388 = vmatprep.subr.mxu0 0.0
      %2389 = vmatpush1.msra.mxu0 0.0
      %2390 = vmatprep.subr.mxu0 0.0
      %2391 = vmatpush1.msra.mxu0 0.0
      %2392 = vmatprep.mubr.f32.mxu0 0.0
      %2393 = vmatmul.mubr.f32.gmra.mrb[0].mxu0 %v2305
      %v2394 = vpop.f32.mrb[0].mxu0
      %v2395 = vadd.f32 0.0, %v2394
      %v2396 = vpop.f32.mrb[0].mxu0
      %2397 = vmatprep.mubr.f32.mxu0 0.0
      %2398 = vmatmul.mubr.f32.gmra.mrb[0].mxu0 %v2308
      %v2399 = vpop.f32.mrb[0].mxu0
      %v2400 = vadd.f32 0.0, %v2399
      %v2401 = vpop.f32.mrb[0].mxu0
      %2402 = vmatprep.mubr.f32.mxu0 0.0
      %2403 = vmatmul.mubr.f32.gmra.mrb[0].mxu0 %v2311
      %v2404 = vpop.f32.mrb[0].mxu0
      %v2405 = vadd.f32 0.0, %v2404
      %v2406 = vpop.f32.mrb[0].mxu0
      %2407 = vmatprep.mubr.f32.mxu0 0.0
      %2408 = vmatmul.mubr.f32.gmra.mrb[0].mxu0 %v2314
      %v2409 = vpop.f32.mrb[0].mxu0
      %v2410 = vadd.f32 0.0, %v2409
      %v2411 = vpop.f32.mrb[0].mxu0
      %2412 = vmatprep.mubr.f32.mxu0 0.0
      %2413 = vmatmul.mubr.f32.gmra.mrb[0].mxu0 %v2317
      %v2414 = vpop.f32.mrb[0].mxu0
      %v2415 = vadd.f32 0.0, %v2414
      %v2416 = vpop.f32.mrb[0].mxu0
      %2417 = vmatprep.mubr.f32.mxu0 0.0
      %2418 = vmatmul.mubr.f32.gmra.mrb[0].mxu0 %v2320
      %v2419 = vpop.f32.mrb[0].mxu0
      %v2420 = vadd.f32 0.0, %v2419
      %v2421 = vpop.f32.mrb[0].mxu0
      %2422 = vmatprep.mubr.f32.mxu0 0.0
      %2423 = vmatmul.mubr.f32.gmra.mrb[0].mxu0 %v2323
      %v2424 = vpop.f32.mrb[0].mxu0
      %v2425 = vadd.f32 0.0, %v2424
      %v2426 = vpop.f32.mrb[0].mxu0
      %2427 = vmatprep.mubr.f32.mxu0 0.0
      %2428 = vmatmul.mubr.f32.gmra.mrb[0].mxu0 %v2326
      %v2429 = vpop.f32.mrb[0].mxu0
      %v2430 = vadd.f32 0.0, %v2429
      %v2431 = vpop.f32.mrb[0].mxu0
      %2432 = vdwg.mxu0
      %v2433 = vadd.f32 %v1839, %v2395
      %v2434 = vadd.f32 %v1844, %v2400
      %v2435 = vadd.f32 %v1849, %v2405
      %v2436 = vadd.f32 %v1854, %v2410
      %v2437 = vadd.f32 %v1859, %v2415
      %v2438 = vadd.f32 %v1864, %v2420
      %v2439 = vadd.f32 %v1869, %v2425
      %v2440 = vadd.f32 %v1874, %v2430
      %s2441 = scalar_lea.vmem %s1, 192
      %v2442 = vld [vmem:[%s2441] sm:$0xff]
      %v2443 = vld [vmem:[%s2441 + $0x8] sm:$0xff]
      %v2444 = vld [vmem:[%s2441 + $0x10] sm:$0xff]
      %v2445 = vld [vmem:[%s2441 + $0x18] sm:$0xff]
      %v2446 = vld [vmem:[%s2441 + $0x20] sm:$0xff]
      %v2447 = vld [vmem:[%s2441 + $0x28] sm:$0xff]
      %v2448 = vld [vmem:[%s2441 + $0x30] sm:$0xff]
      %v2449 = vld [vmem:[%s2441 + $0x38] sm:$0xff]
      %2450 = vrot.lane.b32.xlu0 %v756, 104
      %v2451 = vpop.permute.xlu0 %2450
      %2452 = vrot.lane.b32.xlu0 %v757, 104
      %v2453 = vpop.permute.xlu0 %2452
      %2454 = vrot.lane.b32.xlu0 %v758, 104
      %v2455 = vpop.permute.xlu0 %2454
      %2456 = vrot.lane.b32.xlu0 %v759, 104
      %v2457 = vpop.permute.xlu0 %2456
      %2458 = vrot.lane.b32.xlu0 %v760, 104
      %v2459 = vpop.permute.xlu0 %2458
      %2460 = vrot.lane.b32.xlu0 %v761, 104
      %v2461 = vpop.permute.xlu0 %2460
      %2462 = vrot.lane.b32.xlu0 %v762, 104
      %v2463 = vpop.permute.xlu0 %2462
      %2464 = vrot.lane.b32.xlu0 %v763, 104
      %v2465 = vpop.permute.xlu0 %2464
      %2466 = vrot.lane.b32.xlu0 %v714, 72
      %v2467 = vpop.permute.xlu0 %2466
      %2468 = vrot.lane.b32.xlu0 %v719, 72
      %v2469 = vpop.permute.xlu0 %2468
      %2470 = vrot.lane.b32.xlu0 %v724, 72
      %v2471 = vpop.permute.xlu0 %2470
      %2472 = vrot.lane.b32.xlu0 %v729, 72
      %v2473 = vpop.permute.xlu0 %2472
      %2474 = vrot.lane.b32.xlu0 %v734, 72
      %v2475 = vpop.permute.xlu0 %2474
      %2476 = vrot.lane.b32.xlu0 %v739, 72
      %v2477 = vpop.permute.xlu0 %2476
      %2478 = vrot.lane.b32.xlu0 %v744, 72
      %v2479 = vpop.permute.xlu0 %2478
      %2480 = vrot.lane.b32.xlu0 %v749, 72
      %v2481 = vpop.permute.xlu0 %2480
      %v2482 = vsel %vm796, %v2451, 0
      %v2484 = vsel %vm796, %v2453, 0
      %v2486 = vsel %vm796, %v2455, 0
      %v2488 = vsel %vm796, %v2457, 0
      %v2490 = vsel %vm796, %v2459, 0
      %v2492 = vsel %vm796, %v2461, 0
      %v2494 = vsel %vm796, %v2463, 0
      %v2496 = vsel %vm796, %v2465, 0
      %v2498 = vsel %vm796, %v2467, 0
      %v2500 = vsel %vm796, %v2469, 0
      %v2502 = vsel %vm796, %v2471, 0
      %v2504 = vsel %vm796, %v2473, 0
      %v2506 = vsel %vm796, %v2475, 0
      %v2508 = vsel %vm796, %v2477, 0
      %v2510 = vsel %vm796, %v2479, 0
      %v2512 = vsel %vm796, %v2481, 0
      %2514 = vmatprep.subr.mxu0 0.0
      %2515 = vmatpush1.xpose.msra.mxu0 %v2498
      %2516 = vmatprep.subr.mxu0 0.0
      %2517 = vmatpush1.xpose.msra.mxu0 %v2500
      %2518 = vmatprep.subr.mxu0 0.0
      %2519 = vmatpush1.xpose.msra.mxu0 %v2502
      %2520 = vmatprep.subr.mxu0 0.0
      %2521 = vmatpush1.xpose.msra.mxu0 %v2504
      %2522 = vmatprep.subr.mxu0 0.0
      %2523 = vmatpush1.xpose.msra.mxu0 %v2506
      %2524 = vmatprep.subr.mxu0 0.0
      %2525 = vmatpush1.xpose.msra.mxu0 %v2508
      %2526 = vmatprep.subr.mxu0 0.0
      %2527 = vmatpush1.xpose.msra.mxu0 %v2510
      %2528 = vmatprep.subr.mxu0 0.0
      %2529 = vmatpush1.xpose.msra.mxu0 %v2512
      %2530 = vmatprep.subr.mxu0 0.0
      %2531 = vmatpush1.xpose.msra.mxu0 0.0
      %2532 = vmatprep.subr.mxu0 0.0
      %2533 = vmatpush1.xpose.msra.mxu0 0.0
      %2534 = vmatprep.subr.mxu0 0.0
      %2535 = vmatpush1.xpose.msra.mxu0 0.0
      %2536 = vmatprep.subr.mxu0 0.0
      %2537 = vmatpush1.xpose.msra.mxu0 0.0
      %2538 = vmatprep.subr.mxu0 0.0
      %2539 = vmatpush1.xpose.msra.mxu0 0.0
      %2540 = vmatprep.subr.mxu0 0.0
      %2541 = vmatpush1.xpose.msra.mxu0 0.0
      %2542 = vmatprep.subr.mxu0 0.0
      %2543 = vmatpush1.xpose.msra.mxu0 0.0
      %2544 = vmatprep.subr.mxu0 0.0
      %2545 = vmatpush1.xpose.msra.mxu0 0.0
      %2546 = vmatprep.subr.mxu0 0.0
      %2547 = vmatpush1.xpose.msra.mxu0 0.0
      %2548 = vmatprep.subr.mxu0 0.0
      %2549 = vmatpush1.xpose.msra.mxu0 0.0
      %2550 = vmatprep.subr.mxu0 0.0
      %2551 = vmatpush1.xpose.msra.mxu0 0.0
      %2552 = vmatprep.subr.mxu0 0.0
      %2553 = vmatpush1.xpose.msra.mxu0 0.0
      %2554 = vmatprep.subr.mxu0 0.0
      %2555 = vmatpush1.xpose.msra.mxu0 0.0
      %2556 = vmatprep.subr.mxu0 0.0
      %2557 = vmatpush1.xpose.msra.mxu0 0.0
      %2558 = vmatprep.subr.mxu0 0.0
      %2559 = vmatpush1.xpose.msra.mxu0 0.0
      %2560 = vmatprep.subr.mxu0 0.0
      %2561 = vmatpush1.xpose.msra.mxu0 0.0
      %2562 = vmatprep.subr.mxu0 0.0
      %2563 = vmatpush1.xpose.msra.mxu0 0.0
      %2564 = vmatprep.subr.mxu0 0.0
      %2565 = vmatpush1.xpose.msra.mxu0 0.0
      %2566 = vmatprep.subr.mxu0 0.0
      %2567 = vmatpush1.xpose.msra.mxu0 0.0
      %2568 = vmatprep.subr.mxu0 0.0
      %2569 = vmatpush1.xpose.msra.mxu0 0.0
      %2570 = vmatprep.subr.mxu0 0.0
      %2571 = vmatpush1.xpose.msra.mxu0 0.0
      %2572 = vmatprep.subr.mxu0 0.0
      %2573 = vmatpush1.xpose.msra.mxu0 0.0
      %2574 = vmatprep.subr.mxu0 0.0
      %2575 = vmatpush1.xpose.msra.mxu0 0.0
      %2576 = vmatprep.subr.mxu0 0.0
      %2577 = vmatpush1.xpose.msra.mxu0 0.0
      %2578 = vmatprep.mubr.f32.mxu0 0.0
      %2579 = vmatmul.mubr.f32.gmra.mrb[0].mxu0 %v2482
      %v2580 = vpop.f32.mrb[0].mxu0
      %v2581 = vadd.f32 %v2442, %v2580
      %v2582 = vpop.f32.mrb[0].mxu0
      %2583 = vmatprep.mubr.f32.mxu0 0.0
      %2584 = vmatmul.mubr.f32.gmra.mrb[0].mxu0 %v2484
      %v2585 = vpop.f32.mrb[0].mxu0
      %v2586 = vadd.f32 %v2443, %v2585
      %v2587 = vpop.f32.mrb[0].mxu0
      %2588 = vmatprep.mubr.f32.mxu0 0.0
      %2589 = vmatmul.mubr.f32.gmra.mrb[0].mxu0 %v2486
      %v2590 = vpop.f32.mrb[0].mxu0
      %v2591 = vadd.f32 %v2444, %v2590
      %v2592 = vpop.f32.mrb[0].mxu0
      %2593 = vmatprep.mubr.f32.mxu0 0.0
      %2594 = vmatmul.mubr.f32.gmra.mrb[0].mxu0 %v2488
      %v2595 = vpop.f32.mrb[0].mxu0
      %v2596 = vadd.f32 %v2445, %v2595
      %v2597 = vpop.f32.mrb[0].mxu0
      %2598 = vmatprep.mubr.f32.mxu0 0.0
      %2599 = vmatmul.mubr.f32.gmra.mrb[0].mxu0 %v2490
      %v2600 = vpop.f32.mrb[0].mxu0
      %v2601 = vadd.f32 %v2446, %v2600
      %v2602 = vpop.f32.mrb[0].mxu0
      %2603 = vmatprep.mubr.f32.mxu0 0.0
      %2604 = vmatmul.mubr.f32.gmra.mrb[0].mxu0 %v2492
      %v2605 = vpop.f32.mrb[0].mxu0
      %v2606 = vadd.f32 %v2447, %v2605
      %v2607 = vpop.f32.mrb[0].mxu0
      %2608 = vmatprep.mubr.f32.mxu0 0.0
      %2609 = vmatmul.mubr.f32.gmra.mrb[0].mxu0 %v2494
      %v2610 = vpop.f32.mrb[0].mxu0
      %v2611 = vadd.f32 %v2448, %v2610
      %v2612 = vpop.f32.mrb[0].mxu0
      %2613 = vmatprep.mubr.f32.mxu0 0.0
      %2614 = vmatmul.mubr.f32.gmra.mrb[0].mxu0 %v2496
      %v2615 = vpop.f32.mrb[0].mxu0
      %v2616 = vadd.f32 %v2449, %v2615
      %v2617 = vpop.f32.mrb[0].mxu0
      %2618 = vdwg.mxu0
      %v2619 = vsel %vm942, %v2581, -inf
      %2620 = vmax.xlane.f32.xlu0 %v2619
      %v2621 = vpop.xlane.xlu0 %2620
      %v2622 = vsel %vm942, %v2586, -inf
      %2623 = vmax.xlane.f32.xlu0 %v2622
      %v2624 = vpop.xlane.xlu0 %2623
      %v2625 = vsel %vm942, %v2591, -inf
      %2626 = vmax.xlane.f32.xlu0 %v2625
      %v2627 = vpop.xlane.xlu0 %2626
      %v2628 = vsel %vm942, %v2596, -inf
      %2629 = vmax.xlane.f32.xlu0 %v2628
      %v2630 = vpop.xlane.xlu0 %2629
      %v2631 = vsel %vm942, %v2601, -inf
      %2632 = vmax.xlane.f32.xlu0 %v2631
      %v2633 = vpop.xlane.xlu0 %2632
      %v2634 = vsel %vm942, %v2606, -inf
      %2635 = vmax.xlane.f32.xlu0 %v2634
      %v2636 = vpop.xlane.xlu0 %2635
      %v2637 = vsel %vm942, %v2611, -inf
      %2638 = vmax.xlane.f32.xlu0 %v2637
      %v2639 = vpop.xlane.xlu0 %2638
      %v2640 = vsel %vm942, %v2616, -inf
      %2641 = vmax.xlane.f32.xlu0 %v2640
      %v2642 = vpop.xlane.xlu0 %2641
      %v2643 = vsub.f32 %v2581, %v2621
      %v2644 = vsub.f32 %v2586, %v2624
      %v2645 = vsub.f32 %v2591, %v2627
      %v2646 = vsub.f32 %v2596, %v2630
      %v2647 = vsub.f32 %v2601, %v2633
      %v2648 = vsub.f32 %v2606, %v2636
      %v2649 = vsub.f32 %v2611, %v2639
      %v2650 = vsub.f32 %v2616, %v2642
      %v2651 = vmul.f32 %v2643, 1.442695
      %v2652 = vpow.pop %v2651
      %v2653 = vmul.f32 %v2644, 1.442695
      %v2654 = vpow.pop %v2653
      %v2655 = vmul.f32 %v2645, 1.442695
      %v2656 = vpow.pop %v2655
      %v2657 = vmul.f32 %v2646, 1.442695
      %v2658 = vpow.pop %v2657
      %v2659 = vmul.f32 %v2647, 1.442695
      %v2660 = vpow.pop %v2659
      %v2661 = vmul.f32 %v2648, 1.442695
      %v2662 = vpow.pop %v2661
      %v2663 = vmul.f32 %v2649, 1.442695
      %v2664 = vpow.pop %v2663
      %v2665 = vmul.f32 %v2650, 1.442695
      %v2666 = vpow.pop %v2665
      %v2667 = vsel %vm942, %v2652, 0.0
      %2668 = vadd.xlane.f32.xlu0 %v2667
      %v2669 = vpop.xlane.xlu0 %2668
      %v2670 = vsel %vm942, %v2654, 0.0
      %2671 = vadd.xlane.f32.xlu0 %v2670
      %v2672 = vpop.xlane.xlu0 %2671
      %v2673 = vsel %vm942, %v2656, 0.0
      %2674 = vadd.xlane.f32.xlu0 %v2673
      %v2675 = vpop.xlane.xlu0 %2674
      %v2676 = vsel %vm942, %v2658, 0.0
      %2677 = vadd.xlane.f32.xlu0 %v2676
      %v2678 = vpop.xlane.xlu0 %2677
      %v2679 = vsel %vm942, %v2660, 0.0
      %2680 = vadd.xlane.f32.xlu0 %v2679
      %v2681 = vpop.xlane.xlu0 %2680
      %v2682 = vsel %vm942, %v2662, 0.0
      %2683 = vadd.xlane.f32.xlu0 %v2682
      %v2684 = vpop.xlane.xlu0 %2683
      %v2685 = vsel %vm942, %v2664, 0.0
      %2686 = vadd.xlane.f32.xlu0 %v2685
      %v2687 = vpop.xlane.xlu0 %2686
      %v2688 = vsel %vm942, %v2666, 0.0
      %2689 = vadd.xlane.f32.xlu0 %v2688
      %v2690 = vpop.xlane.xlu0 %2689
      %v2691 = vrcp.pop %v2669
      %v2692 = vmul.f32 1.0, %v2691
      %v2693 = vrcp.pop %v2672
      %v2694 = vmul.f32 1.0, %v2693
      %v2695 = vrcp.pop %v2675
      %v2696 = vmul.f32 1.0, %v2695
      %v2697 = vrcp.pop %v2678
      %v2698 = vmul.f32 1.0, %v2697
      %v2699 = vrcp.pop %v2681
      %v2700 = vmul.f32 1.0, %v2699
      %v2701 = vrcp.pop %v2684
      %v2702 = vmul.f32 1.0, %v2701
      %v2703 = vrcp.pop %v2687
      %v2704 = vmul.f32 1.0, %v2703
      %v2705 = vrcp.pop %v2690
      %v2706 = vmul.f32 1.0, %v2705
      %v2707 = vmul.f32 %v2652, %v2692
      %v2708 = vmul.f32 %v2654, %v2694
      %v2709 = vmul.f32 %v2656, %v2696
      %v2710 = vmul.f32 %v2658, %v2698
      %v2711 = vmul.f32 %v2660, %v2700
      %v2712 = vmul.f32 %v2662, %v2702
      %v2713 = vmul.f32 %v2664, %v2704
      %v2714 = vmul.f32 %v2666, %v2706
      %2715 = vrot.lane.b32.xlu0 %v714, 40
      %v2716 = vpop.permute.xlu0 %2715
      %2717 = vrot.lane.b32.xlu0 %v719, 40
      %v2718 = vpop.permute.xlu0 %2717
      %2719 = vrot.lane.b32.xlu0 %v724, 40
      %v2720 = vpop.permute.xlu0 %2719
      %2721 = vrot.lane.b32.xlu0 %v729, 40
      %v2722 = vpop.permute.xlu0 %2721
      %2723 = vrot.lane.b32.xlu0 %v734, 40
      %v2724 = vpop.permute.xlu0 %2723
      %2725 = vrot.lane.b32.xlu0 %v739, 40
      %v2726 = vpop.permute.xlu0 %2725
      %2727 = vrot.lane.b32.xlu0 %v744, 40
      %v2728 = vpop.permute.xlu0 %2727
      %2729 = vrot.lane.b32.xlu0 %v749, 40
      %v2730 = vpop.permute.xlu0 %2729
      %v2740 = vsel %vm942, %v2707, 0
      %v2743 = vsel %vm942, %v2708, 0
      %v2746 = vsel %vm942, %v2709, 0
      %v2749 = vsel %vm942, %v2710, 0
      %v2752 = vsel %vm942, %v2711, 0
      %v2755 = vsel %vm942, %v2712, 0
      %v2758 = vsel %vm942, %v2713, 0
      %v2761 = vsel %vm942, %v2714, 0
      %2763 = vmatprep.subr.mxu0 0.0
      %2764 = vmatpush1.msra.mxu0 %v2716
      %2765 = vmatprep.subr.mxu0 0.0
      %2766 = vmatpush1.msra.mxu0 %v2718
      %2767 = vmatprep.subr.mxu0 0.0
      %2768 = vmatpush1.msra.mxu0 %v2720
      %2769 = vmatprep.subr.mxu0 0.0
      %2770 = vmatpush1.msra.mxu0 %v2722
      %2771 = vmatprep.subr.mxu0 0.0
      %2772 = vmatpush1.msra.mxu0 %v2724
      %2773 = vmatprep.subr.mxu0 0.0
      %2774 = vmatpush1.msra.mxu0 %v2726
      %2775 = vmatprep.subr.mxu0 0.0
      %2776 = vmatpush1.msra.mxu0 %v2728
      %2777 = vmatprep.subr.mxu0 0.0
      %2778 = vmatpush1.msra.mxu0 %v2730
      %2779 = vmatprep.subr.mxu0 0.0
      %2780 = vmatpush1.msra.mxu0 0.0
      %2781 = vmatprep.subr.mxu0 0.0
      %2782 = vmatpush1.msra.mxu0 0.0
      %2783 = vmatprep.subr.mxu0 0.0
      %2784 = vmatpush1.msra.mxu0 0.0
      %2785 = vmatprep.subr.mxu0 0.0
      %2786 = vmatpush1.msra.mxu0 0.0
      %2787 = vmatprep.subr.mxu0 0.0
      %2788 = vmatpush1.msra.mxu0 0.0
      %2789 = vmatprep.subr.mxu0 0.0
      %2790 = vmatpush1.msra.mxu0 0.0
      %2791 = vmatprep.subr.mxu0 0.0
      %2792 = vmatpush1.msra.mxu0 0.0
      %2793 = vmatprep.subr.mxu0 0.0
      %2794 = vmatpush1.msra.mxu0 0.0
      %2795 = vmatprep.subr.mxu0 0.0
      %2796 = vmatpush1.msra.mxu0 0.0
      %2797 = vmatprep.subr.mxu0 0.0
      %2798 = vmatpush1.msra.mxu0 0.0
      %2799 = vmatprep.subr.mxu0 0.0
      %2800 = vmatpush1.msra.mxu0 0.0
      %2801 = vmatprep.subr.mxu0 0.0
      %2802 = vmatpush1.msra.mxu0 0.0
      %2803 = vmatprep.subr.mxu0 0.0
      %2804 = vmatpush1.msra.mxu0 0.0
      %2805 = vmatprep.subr.mxu0 0.0
      %2806 = vmatpush1.msra.mxu0 0.0
      %2807 = vmatprep.subr.mxu0 0.0
      %2808 = vmatpush1.msra.mxu0 0.0
      %2809 = vmatprep.subr.mxu0 0.0
      %2810 = vmatpush1.msra.mxu0 0.0
      %2811 = vmatprep.subr.mxu0 0.0
      %2812 = vmatpush1.msra.mxu0 0.0
      %2813 = vmatprep.subr.mxu0 0.0
      %2814 = vmatpush1.msra.mxu0 0.0
      %2815 = vmatprep.subr.mxu0 0.0
      %2816 = vmatpush1.msra.mxu0 0.0
      %2817 = vmatprep.subr.mxu0 0.0
      %2818 = vmatpush1.msra.mxu0 0.0
      %2819 = vmatprep.subr.mxu0 0.0
      %2820 = vmatpush1.msra.mxu0 0.0
      %2821 = vmatprep.subr.mxu0 0.0
      %2822 = vmatpush1.msra.mxu0 0.0
      %2823 = vmatprep.subr.mxu0 0.0
      %2824 = vmatpush1.msra.mxu0 0.0
      %2825 = vmatprep.subr.mxu0 0.0
      %2826 = vmatpush1.msra.mxu0 0.0
      %2827 = vmatprep.mubr.f32.mxu0 0.0
      %2828 = vmatmul.mubr.f32.gmra.mrb[0].mxu0 %v2740
      %v2829 = vpop.f32.mrb[0].mxu0
      %v2830 = vadd.f32 0.0, %v2829
      %v2831 = vpop.f32.mrb[0].mxu0
      %2832 = vmatprep.mubr.f32.mxu0 0.0
      %2833 = vmatmul.mubr.f32.gmra.mrb[0].mxu0 %v2743
      %v2834 = vpop.f32.mrb[0].mxu0
      %v2835 = vadd.f32 0.0, %v2834
      %v2836 = vpop.f32.mrb[0].mxu0
      %2837 = vmatprep.mubr.f32.mxu0 0.0
      %2838 = vmatmul.mubr.f32.gmra.mrb[0].mxu0 %v2746
      %v2839 = vpop.f32.mrb[0].mxu0
      %v2840 = vadd.f32 0.0, %v2839
      %v2841 = vpop.f32.mrb[0].mxu0
      %2842 = vmatprep.mubr.f32.mxu0 0.0
      %2843 = vmatmul.mubr.f32.gmra.mrb[0].mxu0 %v2749
      %v2844 = vpop.f32.mrb[0].mxu0
      %v2845 = vadd.f32 0.0, %v2844
      %v2846 = vpop.f32.mrb[0].mxu0
      %2847 = vmatprep.mubr.f32.mxu0 0.0
      %2848 = vmatmul.mubr.f32.gmra.mrb[0].mxu0 %v2752
      %v2849 = vpop.f32.mrb[0].mxu0
      %v2850 = vadd.f32 0.0, %v2849
      %v2851 = vpop.f32.mrb[0].mxu0
      %2852 = vmatprep.mubr.f32.mxu0 0.0
      %2853 = vmatmul.mubr.f32.gmra.mrb[0].mxu0 %v2755
      %v2854 = vpop.f32.mrb[0].mxu0
      %v2855 = vadd.f32 0.0, %v2854
      %v2856 = vpop.f32.mrb[0].mxu0
      %2857 = vmatprep.mubr.f32.mxu0 0.0
      %2858 = vmatmul.mubr.f32.gmra.mrb[0].mxu0 %v2758
      %v2859 = vpop.f32.mrb[0].mxu0
      %v2860 = vadd.f32 0.0, %v2859
      %v2861 = vpop.f32.mrb[0].mxu0
      %2862 = vmatprep.mubr.f32.mxu0 0.0
      %2863 = vmatmul.mubr.f32.gmra.mrb[0].mxu0 %v2761
      %v2864 = vpop.f32.mrb[0].mxu0
      %v2865 = vadd.f32 0.0, %v2864
      %v2866 = vpop.f32.mrb[0].mxu0
      %2867 = vdwg.mxu0
      %v2869 = vsel %vm796, %v2830, 0
      %v2872 = vsel %vm796, %v2835, 0
      %v2875 = vsel %vm796, %v2840, 0
      %v2878 = vsel %vm796, %v2845, 0
      %v2881 = vsel %vm796, %v2850, 0
      %v2884 = vsel %vm796, %v2855, 0
      %v2887 = vsel %vm796, %v2860, 0
      %v2890 = vsel %vm796, %v2865, 0
      %2892 = vmatprep.subr.mxu0 0.0
      %2893 = vmatpush1.msra.mxu0 %v755
      %2894 = vmatprep.subr.mxu0 0.0
      %2895 = vmatpush1.msra.mxu0 0.0
      %2896 = vmatprep.subr.mxu0 0.0
      %2897 = vmatpush1.msra.mxu0 0.0
      %2898 = vmatprep.subr.mxu0 0.0
      %2899 = vmatpush1.msra.mxu0 0.0
      %2900 = vmatprep.subr.mxu0 0.0
      %2901 = vmatpush1.msra.mxu0 0.0
      %2902 = vmatprep.subr.mxu0 0.0
      %2903 = vmatpush1.msra.mxu0 0.0
      %2904 = vmatprep.subr.mxu0 0.0
      %2905 = vmatpush1.msra.mxu0 0.0
      %2906 = vmatprep.subr.mxu0 0.0
      %2907 = vmatpush1.msra.mxu0 0.0
      %2908 = vmatprep.subr.mxu0 0.0
      %2909 = vmatpush1.msra.mxu0 0.0
      %2910 = vmatprep.subr.mxu0 0.0
      %2911 = vmatpush1.msra.mxu0 0.0
      %2912 = vmatprep.subr.mxu0 0.0
      %2913 = vmatpush1.msra.mxu0 0.0
      %2914 = vmatprep.subr.mxu0 0.0
      %2915 = vmatpush1.msra.mxu0 0.0
      %2916 = vmatprep.subr.mxu0 0.0
      %2917 = vmatpush1.msra.mxu0 0.0
      %2918 = vmatprep.subr.mxu0 0.0
      %2919 = vmatpush1.msra.mxu0 0.0
      %2920 = vmatprep.subr.mxu0 0.0
      %2921 = vmatpush1.msra.mxu0 0.0
      %2922 = vmatprep.subr.mxu0 0.0
      %2923 = vmatpush1.msra.mxu0 0.0
      %2924 = vmatprep.subr.mxu0 0.0
      %2925 = vmatpush1.msra.mxu0 0.0
      %2926 = vmatprep.subr.mxu0 0.0
      %2927 = vmatpush1.msra.mxu0 0.0
      %2928 = vmatprep.subr.mxu0 0.0
      %2929 = vmatpush1.msra.mxu0 0.0
      %2930 = vmatprep.subr.mxu0 0.0
      %2931 = vmatpush1.msra.mxu0 0.0
      %2932 = vmatprep.subr.mxu0 0.0
      %2933 = vmatpush1.msra.mxu0 0.0
      %2934 = vmatprep.subr.mxu0 0.0
      %2935 = vmatpush1.msra.mxu0 0.0
      %2936 = vmatprep.subr.mxu0 0.0
      %2937 = vmatpush1.msra.mxu0 0.0
      %2938 = vmatprep.subr.mxu0 0.0
      %2939 = vmatpush1.msra.mxu0 0.0
      %2940 = vmatprep.subr.mxu0 0.0
      %2941 = vmatpush1.msra.mxu0 0.0
      %2942 = vmatprep.subr.mxu0 0.0
      %2943 = vmatpush1.msra.mxu0 0.0
      %2944 = vmatprep.subr.mxu0 0.0
      %2945 = vmatpush1.msra.mxu0 0.0
      %2946 = vmatprep.subr.mxu0 0.0
      %2947 = vmatpush1.msra.mxu0 0.0
      %2948 = vmatprep.subr.mxu0 0.0
      %2949 = vmatpush1.msra.mxu0 0.0
      %2950 = vmatprep.subr.mxu0 0.0
      %2951 = vmatpush1.msra.mxu0 0.0
      %2952 = vmatprep.subr.mxu0 0.0
      %2953 = vmatpush1.msra.mxu0 0.0
      %2954 = vmatprep.subr.mxu0 0.0
      %2955 = vmatpush1.msra.mxu0 0.0
      %2956 = vmatprep.mubr.f32.mxu0 0.0
      %2957 = vmatmul.mubr.f32.gmra.mrb[0].mxu0 %v2869
      %v2958 = vpop.f32.mrb[0].mxu0
      %v2959 = vadd.f32 0.0, %v2958
      %v2960 = vpop.f32.mrb[0].mxu0
      %2961 = vmatprep.mubr.f32.mxu0 0.0
      %2962 = vmatmul.mubr.f32.gmra.mrb[0].mxu0 %v2872
      %v2963 = vpop.f32.mrb[0].mxu0
      %v2964 = vadd.f32 0.0, %v2963
      %v2965 = vpop.f32.mrb[0].mxu0
      %2966 = vmatprep.mubr.f32.mxu0 0.0
      %2967 = vmatmul.mubr.f32.gmra.mrb[0].mxu0 %v2875
      %v2968 = vpop.f32.mrb[0].mxu0
      %v2969 = vadd.f32 0.0, %v2968
      %v2970 = vpop.f32.mrb[0].mxu0
      %2971 = vmatprep.mubr.f32.mxu0 0.0
      %2972 = vmatmul.mubr.f32.gmra.mrb[0].mxu0 %v2878
      %v2973 = vpop.f32.mrb[0].mxu0
      %v2974 = vadd.f32 0.0, %v2973
      %v2975 = vpop.f32.mrb[0].mxu0
      %2976 = vmatprep.mubr.f32.mxu0 0.0
      %2977 = vmatmul.mubr.f32.gmra.mrb[0].mxu0 %v2881
      %v2978 = vpop.f32.mrb[0].mxu0
      %v2979 = vadd.f32 0.0, %v2978
      %v2980 = vpop.f32.mrb[0].mxu0
      %2981 = vmatprep.mubr.f32.mxu0 0.0
      %2982 = vmatmul.mubr.f32.gmra.mrb[0].mxu0 %v2884
      %v2983 = vpop.f32.mrb[0].mxu0
      %v2984 = vadd.f32 0.0, %v2983
      %v2985 = vpop.f32.mrb[0].mxu0
      %2986 = vmatprep.mubr.f32.mxu0 0.0
      %2987 = vmatmul.mubr.f32.gmra.mrb[0].mxu0 %v2887
      %v2988 = vpop.f32.mrb[0].mxu0
      %v2989 = vadd.f32 0.0, %v2988
      %v2990 = vpop.f32.mrb[0].mxu0
      %2991 = vmatprep.mubr.f32.mxu0 0.0
      %2992 = vmatmul.mubr.f32.gmra.mrb[0].mxu0 %v2890
      %v2993 = vpop.f32.mrb[0].mxu0
      %v2994 = vadd.f32 0.0, %v2993
      %v2995 = vpop.f32.mrb[0].mxu0
      %2996 = vdwg.mxu0
      %v2997 = vadd.f32 %v2433, %v2959
      %v2998 = vadd.f32 %v2434, %v2964
      %v2999 = vadd.f32 %v2435, %v2969
      %v3000 = vadd.f32 %v2436, %v2974
      %v3001 = vadd.f32 %v2437, %v2979
      %v3002 = vadd.f32 %v2438, %v2984
      %v3003 = vadd.f32 %v2439, %v2989
      %v3004 = vadd.f32 %v2440, %v2994
      %v3005 = vadd.f32 %v468, %v2997
      %v3006 = vadd.f32 %v469, %v2998
      %v3007 = vadd.f32 %v470, %v2999
      %v3008 = vadd.f32 %v471, %v3000
      %v3009 = vadd.f32 %v472, %v3001
      %v3010 = vadd.f32 %v473, %v3002
      %v3011 = vadd.f32 %v474, %v3003
      %v3012 = vadd.f32 %v475, %v3004
      %v3013 = vld [vmem:[%s7] sm:$0x1]
      %v3015 = vlaneseq
      %v3016 = vshrl.u32 %v3015, 7
      %v3017 = vsub.s32 0, %v3016
      %v3018 = vrot.slane %v3013, %v3017
      %v3020 = vadd.f32 %v3005, %v3018
      %v3021 = vadd.f32 %v3006, %v3018
      %v3022 = vadd.f32 %v3007, %v3018
      %v3023 = vadd.f32 %v3008, %v3018
      %v3024 = vadd.f32 %v3009, %v3018
      %v3025 = vadd.f32 %v3010, %v3018
      %v3026 = vadd.f32 %v3011, %v3018
      %v3027 = vadd.f32 %v3012, %v3018
      %v3028 = vld [vmem:[%s8] sm:$0x1]
      %v3029 = vld [vmem:[%s9] sm:$0x1]
      %v3030 = vsel %vm478, %v3020, 0.0
      %3031 = vadd.xlane.f32.xlu0 %v3030
      %v3032 = vpop.xlane.xlu0 %3031
      %v3033 = vsel %vm478, %v3021, 0.0
      %3034 = vadd.xlane.f32.xlu0 %v3033
      %v3035 = vpop.xlane.xlu0 %3034
      %v3036 = vsel %vm478, %v3022, 0.0
      %3037 = vadd.xlane.f32.xlu0 %v3036
      %v3038 = vpop.xlane.xlu0 %3037
      %v3039 = vsel %vm478, %v3023, 0.0
      %3040 = vadd.xlane.f32.xlu0 %v3039
      %v3041 = vpop.xlane.xlu0 %3040
      %v3042 = vsel %vm478, %v3024, 0.0
      %3043 = vadd.xlane.f32.xlu0 %v3042
      %v3044 = vpop.xlane.xlu0 %3043
      %v3045 = vsel %vm478, %v3025, 0.0
      %3046 = vadd.xlane.f32.xlu0 %v3045
      %v3047 = vpop.xlane.xlu0 %3046
      %v3048 = vsel %vm478, %v3026, 0.0
      %3049 = vadd.xlane.f32.xlu0 %v3048
      %v3050 = vpop.xlane.xlu0 %3049
      %v3051 = vsel %vm478, %v3027, 0.0
      %3052 = vadd.xlane.f32.xlu0 %v3051
      %v3053 = vpop.xlane.xlu0 %3052
      %v3054 = vmul.f32 %v3032, %v503
      %v3055 = vmul.f32 %v3035, %v503
      %v3056 = vmul.f32 %v3038, %v503
      %v3057 = vmul.f32 %v3041, %v503
      %v3058 = vmul.f32 %v3044, %v503
      %v3059 = vmul.f32 %v3047, %v503
      %v3060 = vmul.f32 %v3050, %v503
      %v3061 = vmul.f32 %v3053, %v503
      %v3062 = vsub.f32 %v3020, %v3054
      %v3063 = vsub.f32 %v3021, %v3055
      %v3064 = vsub.f32 %v3022, %v3056
      %v3065 = vsub.f32 %v3023, %v3057
      %v3066 = vsub.f32 %v3024, %v3058
      %v3067 = vsub.f32 %v3025, %v3059
      %v3068 = vsub.f32 %v3026, %v3060
      %v3069 = vsub.f32 %v3027, %v3061
      %v3070 = vmul.f32 %v3062, %v3062
      %v3071 = vmul.f32 %v3063, %v3063
      %v3072 = vmul.f32 %v3064, %v3064
      %v3073 = vmul.f32 %v3065, %v3065
      %v3074 = vmul.f32 %v3066, %v3066
      %v3075 = vmul.f32 %v3067, %v3067
      %v3076 = vmul.f32 %v3068, %v3068
      %v3077 = vmul.f32 %v3069, %v3069
      %v3078 = vsel %vm478, %v3070, 0.0
      %3079 = vadd.xlane.f32.xlu0 %v3078
      %v3080 = vpop.xlane.xlu0 %3079
      %v3081 = vsel %vm478, %v3071, 0.0
      %3082 = vadd.xlane.f32.xlu0 %v3081
      %v3083 = vpop.xlane.xlu0 %3082
      %v3084 = vsel %vm478, %v3072, 0.0
      %3085 = vadd.xlane.f32.xlu0 %v3084
      %v3086 = vpop.xlane.xlu0 %3085
      %v3087 = vsel %vm478, %v3073, 0.0
      %3088 = vadd.xlane.f32.xlu0 %v3087
      %v3089 = vpop.xlane.xlu0 %3088
      %v3090 = vsel %vm478, %v3074, 0.0
      %3091 = vadd.xlane.f32.xlu0 %v3090
      %v3092 = vpop.xlane.xlu0 %3091
      %v3093 = vsel %vm478, %v3075, 0.0
      %3094 = vadd.xlane.f32.xlu0 %v3093
      %v3095 = vpop.xlane.xlu0 %3094
      %v3096 = vsel %vm478, %v3076, 0.0
      %3097 = vadd.xlane.f32.xlu0 %v3096
      %v3098 = vpop.xlane.xlu0 %3097
      %v3099 = vsel %vm478, %v3077, 0.0
      %3100 = vadd.xlane.f32.xlu0 %v3099
      %v3101 = vpop.xlane.xlu0 %3100
      %v3102 = vmul.f32 %v3080, %v503
      %v3103 = vmul.f32 %v3083, %v503
      %v3104 = vmul.f32 %v3086, %v503
      %v3105 = vmul.f32 %v3089, %v503
      %v3106 = vmul.f32 %v3092, %v503
      %v3107 = vmul.f32 %v3095, %v503
      %v3108 = vmul.f32 %v3098, %v503
      %v3109 = vmul.f32 %v3101, %v503
      %v3110 = vadd.f32 %v3102, 1e-05
      %v3111 = vadd.f32 %v3103, 1e-05
      %v3112 = vadd.f32 %v3104, 1e-05
      %v3113 = vadd.f32 %v3105, 1e-05
      %v3114 = vadd.f32 %v3106, 1e-05
      %v3115 = vadd.f32 %v3107, 1e-05
      %v3116 = vadd.f32 %v3108, 1e-05
      %v3117 = vadd.f32 %v3109, 1e-05
      %v3118 = vrsqrt.pop %v3110
      %v3119 = vrsqrt.pop %v3111
      %v3120 = vrsqrt.pop %v3112
      %v3121 = vrsqrt.pop %v3113
      %v3122 = vrsqrt.pop %v3114
      %v3123 = vrsqrt.pop %v3115
      %v3124 = vrsqrt.pop %v3116
      %v3125 = vrsqrt.pop %v3117
      %v3126 = vmul.f32 %v3062, %v3118
      %v3127 = vmul.f32 %v3063, %v3119
      %v3128 = vmul.f32 %v3064, %v3120
      %v3129 = vmul.f32 %v3065, %v3121
      %v3130 = vmul.f32 %v3066, %v3122
      %v3131 = vmul.f32 %v3067, %v3123
      %v3132 = vmul.f32 %v3068, %v3124
      %v3133 = vmul.f32 %v3069, %v3125
      %v3135 = vlaneseq
      %v3136 = vshrl.u32 %v3135, 7
      %v3137 = vsub.s32 0, %v3136
      %v3138 = vrot.slane %v3028, %v3137
      %v3140 = vmul.f32 %v3126, %v3138
      %v3141 = vmul.f32 %v3127, %v3138
      %v3142 = vmul.f32 %v3128, %v3138
      %v3143 = vmul.f32 %v3129, %v3138
      %v3144 = vmul.f32 %v3130, %v3138
      %v3145 = vmul.f32 %v3131, %v3138
      %v3146 = vmul.f32 %v3132, %v3138
      %v3147 = vmul.f32 %v3133, %v3138
      %v3149 = vlaneseq
      %v3150 = vshrl.u32 %v3149, 7
      %v3151 = vsub.s32 0, %v3150
      %v3152 = vrot.slane %v3029, %v3151
      %v3154 = vadd.f32 %v3140, %v3152
      %v3155 = vadd.f32 %v3141, %v3152
      %v3156 = vadd.f32 %v3142, %v3152
      %v3157 = vadd.f32 %v3143, %v3152
      %v3158 = vadd.f32 %v3144, %v3152
      %v3159 = vadd.f32 %v3145, %v3152
      %v3160 = vadd.f32 %v3146, %v3152
      %v3161 = vadd.f32 %v3147, %v3152
      %v3162 = vld [vmem:[%s10] sm:$0xff]
      %v3163 = vld [vmem:[%s10 + $0x8] sm:$0xff]
      %v3164 = vld [vmem:[%s10 + $0x10] sm:$0xff]
      %v3165 = vld [vmem:[%s10 + $0x18] sm:$0xff]
      %v3166 = vld [vmem:[%s11] sm:$0x1]
      %v3168 = vlaneseq
      %v3169 = vshrl.u32 %v3168, 7
      %v3170 = vsub.s32 0, %v3169
      %v3171 = vrot.slane %v3166, %v3170
      %v3174 = vsel %vm478, %v3154, 0
      %v3177 = vsel %vm478, %v3155, 0
      %v3180 = vsel %vm478, %v3156, 0
      %v3183 = vsel %vm478, %v3157, 0
      %v3186 = vsel %vm478, %v3158, 0
      %v3189 = vsel %vm478, %v3159, 0
      %v3192 = vsel %vm478, %v3160, 0
      %v3195 = vsel %vm478, %v3161, 0
      %3197 = vmatprep.subr.mxu0 0.0
      %3198 = vmatpush1.msra.mxu0 %v3162
      %3199 = vmatprep.subr.mxu0 0.0
      %3200 = vmatpush1.msra.mxu0 %v3163
      %3201 = vmatprep.subr.mxu0 0.0
      %3202 = vmatpush1.msra.mxu0 %v3164
      %3203 = vmatprep.subr.mxu0 0.0
      %3204 = vmatpush1.msra.mxu0 %v3165
      %3205 = vmatprep.subr.mxu0 0.0
      %3206 = vmatpush1.msra.mxu0 0.0
      %3207 = vmatprep.subr.mxu0 0.0
      %3208 = vmatpush1.msra.mxu0 0.0
      %3209 = vmatprep.subr.mxu0 0.0
      %3210 = vmatpush1.msra.mxu0 0.0
      %3211 = vmatprep.subr.mxu0 0.0
      %3212 = vmatpush1.msra.mxu0 0.0
      %3213 = vmatprep.subr.mxu0 0.0
      %3214 = vmatpush1.msra.mxu0 0.0
      %3215 = vmatprep.subr.mxu0 0.0
      %3216 = vmatpush1.msra.mxu0 0.0
      %3217 = vmatprep.subr.mxu0 0.0
      %3218 = vmatpush1.msra.mxu0 0.0
      %3219 = vmatprep.subr.mxu0 0.0
      %3220 = vmatpush1.msra.mxu0 0.0
      %3221 = vmatprep.subr.mxu0 0.0
      %3222 = vmatpush1.msra.mxu0 0.0
      %3223 = vmatprep.subr.mxu0 0.0
      %3224 = vmatpush1.msra.mxu0 0.0
      %3225 = vmatprep.subr.mxu0 0.0
      %3226 = vmatpush1.msra.mxu0 0.0
      %3227 = vmatprep.subr.mxu0 0.0
      %3228 = vmatpush1.msra.mxu0 0.0
      %3229 = vmatprep.subr.mxu0 0.0
      %3230 = vmatpush1.msra.mxu0 0.0
      %3231 = vmatprep.subr.mxu0 0.0
      %3232 = vmatpush1.msra.mxu0 0.0
      %3233 = vmatprep.subr.mxu0 0.0
      %3234 = vmatpush1.msra.mxu0 0.0
      %3235 = vmatprep.subr.mxu0 0.0
      %3236 = vmatpush1.msra.mxu0 0.0
      %3237 = vmatprep.subr.mxu0 0.0
      %3238 = vmatpush1.msra.mxu0 0.0
      %3239 = vmatprep.subr.mxu0 0.0
      %3240 = vmatpush1.msra.mxu0 0.0
      %3241 = vmatprep.subr.mxu0 0.0
      %3242 = vmatpush1.msra.mxu0 0.0
      %3243 = vmatprep.subr.mxu0 0.0
      %3244 = vmatpush1.msra.mxu0 0.0
      %3245 = vmatprep.subr.mxu0 0.0
      %3246 = vmatpush1.msra.mxu0 0.0
      %3247 = vmatprep.subr.mxu0 0.0
      %3248 = vmatpush1.msra.mxu0 0.0
      %3249 = vmatprep.subr.mxu0 0.0
      %3250 = vmatpush1.msra.mxu0 0.0
      %3251 = vmatprep.subr.mxu0 0.0
      %3252 = vmatpush1.msra.mxu0 0.0
      %3253 = vmatprep.subr.mxu0 0.0
      %3254 = vmatpush1.msra.mxu0 0.0
      %3255 = vmatprep.subr.mxu0 0.0
      %3256 = vmatpush1.msra.mxu0 0.0
      %3257 = vmatprep.subr.mxu0 0.0
      %3258 = vmatpush1.msra.mxu0 0.0
      %3259 = vmatprep.subr.mxu0 0.0
      %3260 = vmatpush1.msra.mxu0 0.0
      %3261 = vmatprep.mubr.f32.mxu0 0.0
      %3262 = vmatmul.mubr.f32.gmra.mrb[0].mxu0 %v3174
      %v3263 = vpop.f32.mrb[0].mxu0
      %v3264 = vadd.f32 %v3171, %v3263
      %v3265 = vpop.f32.mrb[0].mxu0
      %3266 = vmatprep.mubr.f32.mxu0 0.0
      %3267 = vmatmul.mubr.f32.gmra.mrb[0].mxu0 %v3177
      %v3268 = vpop.f32.mrb[0].mxu0
      %v3269 = vadd.f32 %v3171, %v3268
      %v3270 = vpop.f32.mrb[0].mxu0
      %3271 = vmatprep.mubr.f32.mxu0 0.0
      %3272 = vmatmul.mubr.f32.gmra.mrb[0].mxu0 %v3180
      %v3273 = vpop.f32.mrb[0].mxu0
      %v3274 = vadd.f32 %v3171, %v3273
      %v3275 = vpop.f32.mrb[0].mxu0
      %3276 = vmatprep.mubr.f32.mxu0 0.0
      %3277 = vmatmul.mubr.f32.gmra.mrb[0].mxu0 %v3183
      %v3278 = vpop.f32.mrb[0].mxu0
      %v3279 = vadd.f32 %v3171, %v3278
      %v3280 = vpop.f32.mrb[0].mxu0
      %3281 = vmatprep.mubr.f32.mxu0 0.0
      %3282 = vmatmul.mubr.f32.gmra.mrb[0].mxu0 %v3186
      %v3283 = vpop.f32.mrb[0].mxu0
      %v3284 = vadd.f32 %v3171, %v3283
      %v3285 = vpop.f32.mrb[0].mxu0
      %3286 = vmatprep.mubr.f32.mxu0 0.0
      %3287 = vmatmul.mubr.f32.gmra.mrb[0].mxu0 %v3189
      %v3288 = vpop.f32.mrb[0].mxu0
      %v3289 = vadd.f32 %v3171, %v3288
      %v3290 = vpop.f32.mrb[0].mxu0
      %3291 = vmatprep.mubr.f32.mxu0 0.0
      %3292 = vmatmul.mubr.f32.gmra.mrb[0].mxu0 %v3192
      %v3293 = vpop.f32.mrb[0].mxu0
      %v3294 = vadd.f32 %v3171, %v3293
      %v3295 = vpop.f32.mrb[0].mxu0
      %3296 = vmatprep.mubr.f32.mxu0 0.0
      %3297 = vmatmul.mubr.f32.gmra.mrb[0].mxu0 %v3195
      %v3298 = vpop.f32.mrb[0].mxu0
      %v3299 = vadd.f32 %v3171, %v3298
      %v3300 = vpop.f32.mrb[0].mxu0
      %3301 = vdwg.mxu0
      %v3302 = vmul.f32 %v3264, 0.5
      %v3303 = vmul.f32 %v3269, 0.5
      %v3304 = vmul.f32 %v3274, 0.5
      %v3305 = vmul.f32 %v3279, 0.5
      %v3306 = vmul.f32 %v3284, 0.5
      %v3307 = vmul.f32 %v3289, 0.5
      %v3308 = vmul.f32 %v3294, 0.5
      %v3309 = vmul.f32 %v3299, 0.5
      %v3310 = vmul.f32 %v3264, 0.70710677
      %v3311 = vmul.f32 %v3269, 0.70710677
      %v3312 = vmul.f32 %v3274, 0.70710677
      %v3313 = vmul.f32 %v3279, 0.70710677
      %v3314 = vmul.f32 %v3284, 0.70710677
      %v3315 = vmul.f32 %v3289, 0.70710677
      %v3316 = vmul.f32 %v3294, 0.70710677
      %v3317 = vmul.f32 %v3299, 0.70710677
      %vm3318 = vcmp.ge.f32.partialorder %v3310, 0.0
      %vm3319 = vcmp.ge.f32.partialorder %v3311, 0.0
      %vm3320 = vcmp.ge.f32.partialorder %v3312, 0.0
      %vm3321 = vcmp.ge.f32.partialorder %v3313, 0.0
      %vm3322 = vcmp.ge.f32.partialorder %v3314, 0.0
      %vm3323 = vcmp.ge.f32.partialorder %v3315, 0.0
      %vm3324 = vcmp.ge.f32.partialorder %v3316, 0.0
      %vm3325 = vcmp.ge.f32.partialorder %v3317, 0.0
      %v3326 = vsel %vm3318, 1.0, -1.0
      %v3327 = vsel %vm3319, 1.0, -1.0
      %v3328 = vsel %vm3320, 1.0, -1.0
      %v3329 = vsel %vm3321, 1.0, -1.0
      %v3330 = vsel %vm3322, 1.0, -1.0
      %v3331 = vsel %vm3323, 1.0, -1.0
      %v3332 = vsel %vm3324, 1.0, -1.0
      %v3333 = vsel %vm3325, 1.0, -1.0
      %v3334 = vand.u32 2147483647, %v3310
      %v3335 = vand.u32 2147483647, %v3311
      %v3336 = vand.u32 2147483647, %v3312
      %v3337 = vand.u32 2147483647, %v3313
      %v3338 = vand.u32 2147483647, %v3314
      %v3339 = vand.u32 2147483647, %v3315
      %v3340 = vand.u32 2147483647, %v3316
      %v3341 = vand.u32 2147483647, %v3317
      %v3342 = vmul.f32 %v3334, 0.3275911
      %v3343 = vmul.f32 %v3335, 0.3275911
      %v3344 = vmul.f32 %v3336, 0.3275911
      %v3345 = vmul.f32 %v3337, 0.3275911
      %v3346 = vmul.f32 %v3338, 0.3275911
      %v3347 = vmul.f32 %v3339, 0.3275911
      %v3348 = vmul.f32 %v3340, 0.3275911
      %v3349 = vmul.f32 %v3341, 0.3275911
      %v3350 = vadd.f32 %v3342, 1.0
      %v3351 = vadd.f32 %v3343, 1.0
      %v3352 = vadd.f32 %v3344, 1.0
      %v3353 = vadd.f32 %v3345, 1.0
      %v3354 = vadd.f32 %v3346, 1.0
      %v3355 = vadd.f32 %v3347, 1.0
      %v3356 = vadd.f32 %v3348, 1.0
      %v3357 = vadd.f32 %v3349, 1.0
      %v3358 = vrcp.pop %v3350
      %v3359 = vmul.f32 1.0, %v3358
      %v3360 = vrcp.pop %v3351
      %v3361 = vmul.f32 1.0, %v3360
      %v3362 = vrcp.pop %v3352
      %v3363 = vmul.f32 1.0, %v3362
      %v3364 = vrcp.pop %v3353
      %v3365 = vmul.f32 1.0, %v3364
      %v3366 = vrcp.pop %v3354
      %v3367 = vmul.f32 1.0, %v3366
      %v3368 = vrcp.pop %v3355
      %v3369 = vmul.f32 1.0, %v3368
      %v3370 = vrcp.pop %v3356
      %v3371 = vmul.f32 1.0, %v3370
      %v3372 = vrcp.pop %v3357
      %v3373 = vmul.f32 1.0, %v3372
      %v3374 = vmul.f32 %v3359, 1.0614054
      %v3375 = vmul.f32 %v3361, 1.0614054
      %v3376 = vmul.f32 %v3363, 1.0614054
      %v3377 = vmul.f32 %v3365, 1.0614054
      %v3378 = vmul.f32 %v3367, 1.0614054
      %v3379 = vmul.f32 %v3369, 1.0614054
      %v3380 = vmul.f32 %v3371, 1.0614054
      %v3381 = vmul.f32 %v3373, 1.0614054
      %v3382 = vadd.f32 %v3374, -1.4531521
      %v3383 = vadd.f32 %v3375, -1.4531521
      %v3384 = vadd.f32 %v3376, -1.4531521
      %v3385 = vadd.f32 %v3377, -1.4531521
      %v3386 = vadd.f32 %v3378, -1.4531521
      %v3387 = vadd.f32 %v3379, -1.4531521
      %v3388 = vadd.f32 %v3380, -1.4531521
      %v3389 = vadd.f32 %v3381, -1.4531521
      %v3390 = vmul.f32 %v3382, %v3359
      %v3391 = vmul.f32 %v3383, %v3361
      %v3392 = vmul.f32 %v3384, %v3363
      %v3393 = vmul.f32 %v3385, %v3365
      %v3394 = vmul.f32 %v3386, %v3367
      %v3395 = vmul.f32 %v3387, %v3369
      %v3396 = vmul.f32 %v3388, %v3371
      %v3397 = vmul.f32 %v3389, %v3373
      %v3398 = vadd.f32 %v3390, 1.4214138
      %v3399 = vadd.f32 %v3391, 1.4214138
      %v3400 = vadd.f32 %v3392, 1.4214138
      %v3401 = vadd.f32 %v3393, 1.4214138
      %v3402 = vadd.f32 %v3394, 1.4214138
      %v3403 = vadd.f32 %v3395, 1.4214138
      %v3404 = vadd.f32 %v3396, 1.4214138
      %v3405 = vadd.f32 %v3397, 1.4214138
      %v3406 = vmul.f32 %v3398, %v3359
      %v3407 = vmul.f32 %v3399, %v3361
      %v3408 = vmul.f32 %v3400, %v3363
      %v3409 = vmul.f32 %v3401, %v3365
      %v3410 = vmul.f32 %v3402, %v3367
      %v3411 = vmul.f32 %v3403, %v3369
      %v3412 = vmul.f32 %v3404, %v3371
      %v3413 = vmul.f32 %v3405, %v3373
      %v3414 = vadd.f32 %v3406, -0.28449672
      %v3415 = vadd.f32 %v3407, -0.28449672
      %v3416 = vadd.f32 %v3408, -0.28449672
      %v3417 = vadd.f32 %v3409, -0.28449672
      %v3418 = vadd.f32 %v3410, -0.28449672
      %v3419 = vadd.f32 %v3411, -0.28449672
      %v3420 = vadd.f32 %v3412, -0.28449672
      %v3421 = vadd.f32 %v3413, -0.28449672
      %v3422 = vmul.f32 %v3414, %v3359
      %v3423 = vmul.f32 %v3415, %v3361
      %v3424 = vmul.f32 %v3416, %v3363
      %v3425 = vmul.f32 %v3417, %v3365
      %v3426 = vmul.f32 %v3418, %v3367
      %v3427 = vmul.f32 %v3419, %v3369
      %v3428 = vmul.f32 %v3420, %v3371
      %v3429 = vmul.f32 %v3421, %v3373
      %v3430 = vadd.f32 %v3422, 0.2548296
      %v3431 = vadd.f32 %v3423, 0.2548296
      %v3432 = vadd.f32 %v3424, 0.2548296
      %v3433 = vadd.f32 %v3425, 0.2548296
      %v3434 = vadd.f32 %v3426, 0.2548296
      %v3435 = vadd.f32 %v3427, 0.2548296
      %v3436 = vadd.f32 %v3428, 0.2548296
      %v3437 = vadd.f32 %v3429, 0.2548296
      %v3438 = vmul.f32 %v3430, %v3359
      %v3439 = vmul.f32 %v3431, %v3361
      %v3440 = vmul.f32 %v3432, %v3363
      %v3441 = vmul.f32 %v3433, %v3365
      %v3442 = vmul.f32 %v3434, %v3367
      %v3443 = vmul.f32 %v3435, %v3369
      %v3444 = vmul.f32 %v3436, %v3371
      %v3445 = vmul.f32 %v3437, %v3373
      %v3446 = vsub.f32 0.0, %v3334
      %v3447 = vsub.f32 0.0, %v3335
      %v3448 = vsub.f32 0.0, %v3336
      %v3449 = vsub.f32 0.0, %v3337
      %v3450 = vsub.f32 0.0, %v3338
      %v3451 = vsub.f32 0.0, %v3339
      %v3452 = vsub.f32 0.0, %v3340
      %v3453 = vsub.f32 0.0, %v3341
      %v3454 = vmul.f32 %v3446, %v3334
      %v3455 = vmul.f32 %v3447, %v3335
      %v3456 = vmul.f32 %v3448, %v3336
      %v3457 = vmul.f32 %v3449, %v3337
      %v3458 = vmul.f32 %v3450, %v3338
      %v3459 = vmul.f32 %v3451, %v3339
      %v3460 = vmul.f32 %v3452, %v3340
      %v3461 = vmul.f32 %v3453, %v3341
      %v3462 = vmul.f32 %v3454, 1.442695
      %v3463 = vpow.pop %v3462
      %v3464 = vmul.f32 %v3455, 1.442695
      %v3465 = vpow.pop %v3464
      %v3466 = vmul.f32 %v3456, 1.442695
      %v3467 = vpow.pop %v3466
      %v3468 = vmul.f32 %v3457, 1.442695
      %v3469 = vpow.pop %v3468
      %v3470 = vmul.f32 %v3458, 1.442695
      %v3471 = vpow.pop %v3470
      %v3472 = vmul.f32 %v3459, 1.442695
      %v3473 = vpow.pop %v3472
      %v3474 = vmul.f32 %v3460, 1.442695
      %v3475 = vpow.pop %v3474
      %v3476 = vmul.f32 %v3461, 1.442695
      %v3477 = vpow.pop %v3476
      %v3478 = vmul.f32 %v3438, %v3463
      %v3479 = vmul.f32 %v3439, %v3465
      %v3480 = vmul.f32 %v3440, %v3467
      %v3481 = vmul.f32 %v3441, %v3469
      %v3482 = vmul.f32 %v3442, %v3471
      %v3483 = vmul.f32 %v3443, %v3473
      %v3484 = vmul.f32 %v3444, %v3475
      %v3485 = vmul.f32 %v3445, %v3477
      %v3486 = vsub.f32 1.0, %v3478
      %v3487 = vsub.f32 1.0, %v3479
      %v3488 = vsub.f32 1.0, %v3480
      %v3489 = vsub.f32 1.0, %v3481
      %v3490 = vsub.f32 1.0, %v3482
      %v3491 = vsub.f32 1.0, %v3483
      %v3492 = vsub.f32 1.0, %v3484
      %v3493 = vsub.f32 1.0, %v3485
      %v3494 = vmul.f32 %v3326, %v3486
      %v3495 = vmul.f32 %v3327, %v3487
      %v3496 = vmul.f32 %v3328, %v3488
      %v3497 = vmul.f32 %v3329, %v3489
      %v3498 = vmul.f32 %v3330, %v3490
      %v3499 = vmul.f32 %v3331, %v3491
      %v3500 = vmul.f32 %v3332, %v3492
      %v3501 = vmul.f32 %v3333, %v3493
      %v3502 = vadd.f32 %v3494, 1.0
      %v3503 = vadd.f32 %v3495, 1.0
      %v3504 = vadd.f32 %v3496, 1.0
      %v3505 = vadd.f32 %v3497, 1.0
      %v3506 = vadd.f32 %v3498, 1.0
      %v3507 = vadd.f32 %v3499, 1.0
      %v3508 = vadd.f32 %v3500, 1.0
      %v3509 = vadd.f32 %v3501, 1.0
      %v3510 = vmul.f32 %v3302, %v3502
      %v3511 = vmul.f32 %v3303, %v3503
      %v3512 = vmul.f32 %v3304, %v3504
      %v3513 = vmul.f32 %v3305, %v3505
      %v3514 = vmul.f32 %v3306, %v3506
      %v3515 = vmul.f32 %v3307, %v3507
      %v3516 = vmul.f32 %v3308, %v3508
      %v3517 = vmul.f32 %v3309, %v3509
      %v3518 = vld [vmem:[%s12] sm:$0xff]
      %v3519 = vld [vmem:[%s12 + $0x8] sm:$0xff]
      %v3520 = vld [vmem:[%s12 + $0x10] sm:$0xff]
      %v3521 = vld [vmem:[%s12 + $0x18] sm:$0xff]
      %v3522 = vld [vmem:[%s12 + $0x20] sm:$0xff]
      %v3523 = vld [vmem:[%s12 + $0x28] sm:$0xff]
      %v3524 = vld [vmem:[%s12 + $0x30] sm:$0xff]
      %v3525 = vld [vmem:[%s12 + $0x38] sm:$0xff]
      %v3526 = vld [vmem:[%s12 + $0x40] sm:$0xff]
      %v3527 = vld [vmem:[%s12 + $0x48] sm:$0xff]
      %v3528 = vld [vmem:[%s12 + $0x50] sm:$0xff]
      %v3529 = vld [vmem:[%s12 + $0x58] sm:$0xff]
      %v3530 = vld [vmem:[%s12 + $0x60] sm:$0xff]
      %v3531 = vld [vmem:[%s12 + $0x68] sm:$0xff]
      %v3532 = vld [vmem:[%s12 + $0x70] sm:$0xff]
      %v3533 = vld [vmem:[%s12 + $0x78] sm:$0xff]
      %v3534 = vld [vmem:[%s13] sm:$0x1]
      %v3536 = vlaneseq
      %v3537 = vshrl.u32 %v3536, 7
      %v3538 = vsub.s32 0, %v3537
      %v3539 = vrot.slane %v3534, %v3538
      %3541 = vmatprep.subr.mxu0 0.0
      %3542 = vmatpush1.msra.mxu0 %v3518
      %3543 = vmatprep.subr.mxu0 0.0
      %3544 = vmatpush1.msra.mxu0 %v3519
      %3545 = vmatprep.subr.mxu0 0.0
      %3546 = vmatpush1.msra.mxu0 %v3520
      %3547 = vmatprep.subr.mxu0 0.0
      %3548 = vmatpush1.msra.mxu0 %v3521
      %3549 = vmatprep.subr.mxu0 0.0
      %3550 = vmatpush1.msra.mxu0 %v3522
      %3551 = vmatprep.subr.mxu0 0.0
      %3552 = vmatpush1.msra.mxu0 %v3523
      %3553 = vmatprep.subr.mxu0 0.0
      %3554 = vmatpush1.msra.mxu0 %v3524
      %3555 = vmatprep.subr.mxu0 0.0
      %3556 = vmatpush1.msra.mxu0 %v3525
      %3557 = vmatprep.subr.mxu0 0.0
      %3558 = vmatpush1.msra.mxu0 %v3526
      %3559 = vmatprep.subr.mxu0 0.0
      %3560 = vmatpush1.msra.mxu0 %v3527
      %3561 = vmatprep.subr.mxu0 0.0
      %3562 = vmatpush1.msra.mxu0 %v3528
      %3563 = vmatprep.subr.mxu0 0.0
      %3564 = vmatpush1.msra.mxu0 %v3529
      %3565 = vmatprep.subr.mxu0 0.0
      %3566 = vmatpush1.msra.mxu0 %v3530
      %3567 = vmatprep.subr.mxu0 0.0
      %3568 = vmatpush1.msra.mxu0 %v3531
      %3569 = vmatprep.subr.mxu0 0.0
      %3570 = vmatpush1.msra.mxu0 %v3532
      %3571 = vmatprep.subr.mxu0 0.0
      %3572 = vmatpush1.msra.mxu0 %v3533
      %3573 = vmatprep.subr.mxu0 0.0
      %3574 = vmatpush1.msra.mxu0 0.0
      %3575 = vmatprep.subr.mxu0 0.0
      %3576 = vmatpush1.msra.mxu0 0.0
      %3577 = vmatprep.subr.mxu0 0.0
      %3578 = vmatpush1.msra.mxu0 0.0
      %3579 = vmatprep.subr.mxu0 0.0
      %3580 = vmatpush1.msra.mxu0 0.0
      %3581 = vmatprep.subr.mxu0 0.0
      %3582 = vmatpush1.msra.mxu0 0.0
      %3583 = vmatprep.subr.mxu0 0.0
      %3584 = vmatpush1.msra.mxu0 0.0
      %3585 = vmatprep.subr.mxu0 0.0
      %3586 = vmatpush1.msra.mxu0 0.0
      %3587 = vmatprep.subr.mxu0 0.0
      %3588 = vmatpush1.msra.mxu0 0.0
      %3589 = vmatprep.subr.mxu0 0.0
      %3590 = vmatpush1.msra.mxu0 0.0
      %3591 = vmatprep.subr.mxu0 0.0
      %3592 = vmatpush1.msra.mxu0 0.0
      %3593 = vmatprep.subr.mxu0 0.0
      %3594 = vmatpush1.msra.mxu0 0.0
      %3595 = vmatprep.subr.mxu0 0.0
      %3596 = vmatpush1.msra.mxu0 0.0
      %3597 = vmatprep.subr.mxu0 0.0
      %3598 = vmatpush1.msra.mxu0 0.0
      %3599 = vmatprep.subr.mxu0 0.0
      %3600 = vmatpush1.msra.mxu0 0.0
      %3601 = vmatprep.subr.mxu0 0.0
      %3602 = vmatpush1.msra.mxu0 0.0
      %3603 = vmatprep.subr.mxu0 0.0
      %3604 = vmatpush1.msra.mxu0 0.0
      %3605 = vmatprep.mubr.f32.mxu0 0.0
      %3606 = vmatmul.mubr.f32.gmra.mrb[0].mxu0 %v3510
      %v3607 = vpop.f32.mrb[0].mxu0
      %v3608 = vadd.f32 %v3539, %v3607
      %v3609 = vpop.f32.mrb[0].mxu0
      %3610 = vmatprep.mubr.f32.mxu0 0.0
      %3611 = vmatmul.mubr.f32.gmra.mrb[0].mxu0 %v3511
      %v3612 = vpop.f32.mrb[0].mxu0
      %v3613 = vadd.f32 %v3539, %v3612
      %v3614 = vpop.f32.mrb[0].mxu0
      %3615 = vmatprep.mubr.f32.mxu0 0.0
      %3616 = vmatmul.mubr.f32.gmra.mrb[0].mxu0 %v3512
      %v3617 = vpop.f32.mrb[0].mxu0
      %v3618 = vadd.f32 %v3539, %v3617
      %v3619 = vpop.f32.mrb[0].mxu0
      %3620 = vmatprep.mubr.f32.mxu0 0.0
      %3621 = vmatmul.mubr.f32.gmra.mrb[0].mxu0 %v3513
      %v3622 = vpop.f32.mrb[0].mxu0
      %v3623 = vadd.f32 %v3539, %v3622
      %v3624 = vpop.f32.mrb[0].mxu0
      %3625 = vmatprep.mubr.f32.mxu0 0.0
      %3626 = vmatmul.mubr.f32.gmra.mrb[0].mxu0 %v3514
      %v3627 = vpop.f32.mrb[0].mxu0
      %v3628 = vadd.f32 %v3539, %v3627
      %v3629 = vpop.f32.mrb[0].mxu0
      %3630 = vmatprep.mubr.f32.mxu0 0.0
      %3631 = vmatmul.mubr.f32.gmra.mrb[0].mxu0 %v3515
      %v3632 = vpop.f32.mrb[0].mxu0
      %v3633 = vadd.f32 %v3539, %v3632
      %v3634 = vpop.f32.mrb[0].mxu0
      %3635 = vmatprep.mubr.f32.mxu0 0.0
      %3636 = vmatmul.mubr.f32.gmra.mrb[0].mxu0 %v3516
      %v3637 = vpop.f32.mrb[0].mxu0
      %v3638 = vadd.f32 %v3539, %v3637
      %v3639 = vpop.f32.mrb[0].mxu0
      %3640 = vmatprep.mubr.f32.mxu0 0.0
      %3641 = vmatmul.mubr.f32.gmra.mrb[0].mxu0 %v3517
      %v3642 = vpop.f32.mrb[0].mxu0
      %v3643 = vadd.f32 %v3539, %v3642
      %v3644 = vpop.f32.mrb[0].mxu0
      %3645 = vdwg.mxu0
      %v3646 = vadd.f32 %v3020, %v3608
      %v3647 = vadd.f32 %v3021, %v3613
      %v3648 = vadd.f32 %v3022, %v3618
      %v3649 = vadd.f32 %v3023, %v3623
      %v3650 = vadd.f32 %v3024, %v3628
      %v3651 = vadd.f32 %v3025, %v3633
      %v3652 = vadd.f32 %v3026, %v3638
      %v3653 = vadd.f32 %v3027, %v3643
      %3654 = vst.msk [vmem:[%s467] sm:$0xff] %vm478, %v3646
      %3655 = vst.msk [vmem:[%s467 + $0x8] sm:$0xff] %vm478, %v3647
      %3656 = vst.msk [vmem:[%s467 + $0x10] sm:$0xff] %vm478, %v3648
      %3657 = vst.msk [vmem:[%s467 + $0x18] sm:$0xff] %vm478, %v3649
      %3658 = vst.msk [vmem:[%s467 + $0x20] sm:$0xff] %vm478, %v3650
      %3659 = vst.msk [vmem:[%s467 + $0x28] sm:$0xff] %vm478, %v3651
      %3660 = vst.msk [vmem:[%s467 + $0x30] sm:$0xff] %vm478, %v3652
      %3661 = vst.msk [vmem:[%s467 + $0x38] sm:$0xff] %vm478, %v3653
      %p3662 = scmp.lt.s32.totalorder %s25, 1
      %s3663 = scalar_select %p3662, %s25, 1
      %s3664 = smul.addr %s3663, 8
      %s3665 = smul.addr %s3664, 8
      %s3666 = scalar_lea.vmem %s14, %s3665
      // Predicated region
      $region77: #{_forward_impl.2} parent=75 // pred_check
        %p3667 = pneg %p342
      $region78: #{_forward_impl.2} parent=75 // pred_check_branch
        %3669 = sbr.rel (%p3667) target = $region80
      $region79: #{_forward_impl.2} parent=75 // pred_region
        _
      $region80: #{_forward_impl.2} parent=75 // pred_fallthru
        _
    $region76: #{_forward_impl.2} parent=5 // pred_fallthru
      _
    %p3670 = scmp.le.s32.totalorder 2, %s20
    // Predicated region
    $region81: #{_forward_impl.2} parent=5 // pred_check
      %p3671 = pneg %p3670
    $region82: #{_forward_impl.2} parent=5 // pred_check_branch
      %3673 = sbr.rel (%p3671) target = $region84
    $region83: #{_forward_impl.2} parent=5 // pred_region
      %s3674 = ssub.s32 %s20, 2
      // Predicated region
      $region85: #{_forward_impl.2} parent=83 // pred_check
        %p3675 = pneg %p348
      $region86: #{_forward_impl.2} parent=83 // pred_check_branch
        %3677 = sbr.rel (%p3675) target = $region88
      $region87: #{_forward_impl.2} parent=83 // pred_region
        %p3678 = scmp.lt.s32.totalorder %s26, 1
        %s3679 = scalar_select %p3678, %s26, 1
        %s3680 = smul.addr %s3679, 8
        %s3681 = smul.addr %s3680, 8
        %s3682 = scalar_lea.vmem %s14, %s3681
      $region88: #{_forward_impl.2} parent=83 // pred_fallthru
        _
    $region84: #{_forward_impl.2} parent=5 // pred_fallthru
      _
  $region6: #{_forward_impl.2} parent=0 // loop_footer
    %s24 = sadd.s32 1, %s20
  $region7: #{_forward_impl.2} parent=0 // loop_footer_branch
    %19 = sbr.rel target = $region3
  $region8: #{_forward_impl.2} parent=0 // loop_exit
    _

</llo_original>
